<compile_context>
chip_gen: v5e
topology: v5e:2x2
jax: 0.10.0
libtpu: 0.0.40
codegen_flags: <defaults>
</compile_context>

<pallas_src>
import functools

import jax
import jax.numpy as jnp
from jax.experimental import pallas as pl
from jax.experimental.pallas import tpu as pltpu

NEG_SLOPE = 0.2
_VMEM_LIMIT = 48 * 1024 * 1024       # below v7x physical (64 MiB), fine on v5e/v6e
_BLOCK_BUDGET = 6 * 1024 * 1024      # per dominant operand (double-buffered)

_PP = pltpu.CompilerParams(dimension_semantics=("parallel", "parallel"),
                           vmem_limit_bytes=_VMEM_LIMIT)
_PA = pltpu.CompilerParams(dimension_semantics=("parallel", "arbitrary"),
                           vmem_limit_bytes=_VMEM_LIMIT)


def _leaky(x):
    return jnp.where(x > 0, x, NEG_SLOPE * x)


def _row_tile(n, row_bytes, cap=1024):
    """Largest row tile (multiple of 8, <= cap) whose dominant block stays in
    the double-buffered VMEM budget; small problems get one full block."""
    t = _BLOCK_BUDGET // (2 * max(row_bytes, 1))
    t = min(t, cap, n)
    t = (t // 8) * 8
    if t < 8 or t >= n:
        return n
    return t


# --------------------------- pairwise distance -----------------------------

def _pdist_kernel(q_ref, kt_ref, qs_ref, ks_ref, o_ref):
    inner = jnp.dot(q_ref[0], kt_ref[0], preferred_element_type=jnp.float32)
    o_ref[0] = 2.0 * inner - qs_ref[0] - ks_ref[0]


def neg_pairwise_sqdist(f):
    """f: (B, N, C) -> (B, N, N) of -||f_i - f_j||^2 (row-tiled over queries)."""
    B, N, C = f.shape
    f = f.astype(jnp.float32)
    ft = jnp.transpose(f, (0, 2, 1))                    # (B, C, N) key side
    sq = jnp.sum(f * f, axis=-1)                        # (B, N)
    tn = _row_tile(N, N * 4)
    return pl.pallas_call(
        _pdist_kernel,
        out_shape=jax.ShapeDtypeStruct((B, N, N), jnp.float32),
        grid=(B, pl.cdiv(N, tn)),
        in_specs=[
            pl.BlockSpec((1, tn, C), lambda b, i: (b, i, 0)),
            pl.BlockSpec((1, C, N), lambda b, i: (b, 0, 0)),
            pl.BlockSpec((1, tn, 1), lambda b, i: (b, i, 0)),
            pl.BlockSpec((1, 1, N), lambda b, i: (b, 0, 0)),
        ],
        out_specs=pl.BlockSpec((1, tn, N), lambda b, i: (b, i, 0)),
        compiler_params=_PP,
    )(f, ft, sq[:, :, None], sq[:, None, :])


def knn_idx(f, k):
    # TODO(synk): top_k stays in XLA; a fused in-kernel iterative arg-max
    # would avoid materializing the (B, N, N) distance matrix at large N.
    d = neg_pairwise_sqdist(f)
    return jax.lax.top_k(d, k)[1]                       # (B, N, k)


def gather_neighbors(xt, idx_t):
    """xt: (B, N, C), idx_t: (B, k, N) -> (B, k, N, C)."""
    return jax.vmap(lambda t, i: t[i])(xt, idx_t)


# ------------------------- fused EdgeConv block -----------------------------

def _edgeconv_kernel(*refs, k, two):
    if two:
        f_ref, c_ref, wf_ref, wc_ref, b1_ref, w2_ref, b2_ref, o_ref = refs
    else:
        f_ref, c_ref, wf_ref, wc_ref, b1_ref, o_ref = refs
    # center contribution (shared by all k neighbours)
    base = jnp.dot(c_ref[0], wc_ref[...],
                   preferred_element_type=jnp.float32) + b1_ref[...]
    acc = None
    for j in range(k):                                  # static unroll over k
        h = jnp.dot(f_ref[0, j], wf_ref[...],
                    preferred_element_type=jnp.float32) + base
        h = _leaky(h)
        if two:
            h = jnp.dot(h, w2_ref[...],
                        preferred_element_type=jnp.float32) + b2_ref[...]
            h = _leaky(h)
        acc = h if acc is None else jnp.maximum(acc, h)
    o_ref[0] = acc.astype(o_ref.dtype)


def edgeconv(feat, center, layer):
    """feat: (B, k, N, Cin) gathered neighbours, center: (B, N, Cin).
    Fused: conv(+BN+LReLU)[+conv(+BN+LReLU)] on [f - c, c] then max over k."""
    B, k, N, Cin = feat.shape
    wf, wc, b1 = layer['wf'], layer['wc'], layer['b1']
    C1 = wf.shape[1]
    two = 'w2' in layer
    Cout = layer['w2'].shape[1] if two else C1
    tn = _row_tile(N, (k * Cin + Cin + Cout) * 4)
    in_specs = [
        pl.BlockSpec((1, k, tn, Cin), lambda b, i: (b, 0, i, 0)),
        pl.BlockSpec((1, tn, Cin), lambda b, i: (b, i, 0)),
        pl.BlockSpec((Cin, C1), lambda b, i: (0, 0)),
        pl.BlockSpec((Cin, C1), lambda b, i: (0, 0)),
        pl.BlockSpec((1, C1), lambda b, i: (0, 0)),
    ]
    args = [feat.astype(jnp.float32), center.astype(jnp.float32), wf, wc, b1]
    if two:
        in_specs += [pl.BlockSpec((C1, Cout), lambda b, i: (0, 0)),
                     pl.BlockSpec((1, Cout), lambda b, i: (0, 0))]
        args += [layer['w2'], layer['b2']]
    return pl.pallas_call(
        functools.partial(_edgeconv_kernel, k=k, two=two),
        out_shape=jax.ShapeDtypeStruct((B, N, Cout), jnp.float32),
        grid=(B, pl.cdiv(N, tn)),
        in_specs=in_specs,
        out_specs=pl.BlockSpec((1, tn, Cout), lambda b, i: (b, i, 0)),
        compiler_params=_PP,
    )(*args)


# -------------------- conv6 + global max (grid reduction) -------------------

def _conv6_max_kernel(x1_ref, x2_ref, x3_ref, wa_ref, wb_ref, wc_ref, b_ref,
                      o_ref, *, n_rows, tn):
    i = pl.program_id(1)

    @pl.when(i == 0)
    def _():
        o_ref[...] = jnp.full(o_ref.shape, -jnp.inf, dtype=o_ref.dtype)

    y = (jnp.dot(x1_ref[0], wa_ref[...], preferred_element_type=jnp.float32)
         + jnp.dot(x2_ref[0], wb_ref[...], preferred_element_type=jnp.float32)
         + jnp.dot(x3_ref[0], wc_ref[...], preferred_element_type=jnp.float32)
         + b_ref[...])
    y = _leaky(y)
    rows = i * tn + jax.lax.broadcasted_iota(jnp.int32, y.shape, 0)
    y = jnp.where(rows < n_rows, y, -jnp.inf)           # mask ragged tail rows
    o_ref[0] = jnp.maximum(o_ref[0], jnp.max(y, axis=0, keepdims=True))


def conv6_global_max(x1, x2, x3, p):
    """(B, N, 64) x3 -> (B, emb): leaky(BN(conv6([x1|x2|x3]))) max over points.
    The 192-channel concat is folded into three split weight matrices."""
    B, N, Cl = x1.shape
    emb = p['w6a'].shape[1]
    tn = _row_tile(N, (3 * Cl + emb) * 4)
    out = pl.pallas_call(
        functools.partial(_conv6_max_kernel, n_rows=N, tn=tn),
        out_shape=jax.ShapeDtypeStruct((B, 1, emb), jnp.float32),
        grid=(B, pl.cdiv(N, tn)),
        in_specs=[
            pl.BlockSpec((1, tn, Cl), lambda b, i: (b, i, 0)),
            pl.BlockSpec((1, tn, Cl), lambda b, i: (b, i, 0)),
            pl.BlockSpec((1, tn, Cl), lambda b, i: (b, i, 0)),
            pl.BlockSpec((Cl, emb), lambda b, i: (0, 0)),
            pl.BlockSpec((Cl, emb), lambda b, i: (0, 0)),
            pl.BlockSpec((Cl, emb), lambda b, i: (0, 0)),
            pl.BlockSpec((1, emb), lambda b, i: (0, 0)),
        ],
        out_specs=pl.BlockSpec((1, 1, emb), lambda b, i: (b, 0, 0)),
        compiler_params=_PA,
    )(x1, x2, x3, p['w6a'], p['w6b'], p['w6c'], p['b6'])
    return out[:, 0, :]


# ---------------------- fused head: conv7 -> conv8 -> conv9 -----------------

def _head_kernel(x1_ref, x2_ref, x3_ref, g_ref, wa_ref, wb_ref, wc_ref,
                 w8_ref, b8_ref, w9_ref, o_ref):
    h = (jnp.dot(x1_ref[0], wa_ref[...], preferred_element_type=jnp.float32)
         + jnp.dot(x2_ref[0], wb_ref[...], preferred_element_type=jnp.float32)
         + jnp.dot(x3_ref[0], wc_ref[...], preferred_element_type=jnp.float32)
         + g_ref[0])
    h = _leaky(h)
    h = _leaky(jnp.dot(h, w8_ref[...],
                       preferred_element_type=jnp.float32) + b8_ref[...])
    # dropout is identity in eval mode; conv9 has bias=False and no activation
    o_ref[0] = jnp.dot(h, w9_ref[...],
                       preferred_element_type=jnp.float32).astype(o_ref.dtype)


def seg_head(x1, x2, x3, g7, p):
    """x1/x2/x3: (B, N, 64) local features, g7: (B, 512) = global @ W7_g + b7."""
    B, N, Cl = x1.shape
    w7a, w7b, w7c = p['w7a'], p['w7b'], p['w7c']
    w8, b8, w9 = p['w8'], p['b8'], p['w9']
    C7, C8, Co = w7a.shape[1], w8.shape[1], w9.shape[1]
    tn = _row_tile(N, (3 * Cl + C7 + C8 + Co) * 4)
    return pl.pallas_call(
        _head_kernel,
        out_shape=jax.ShapeDtypeStruct((B, N, Co), jnp.float32),
        grid=(B, pl.cdiv(N, tn)),
        in_specs=[
            pl.BlockSpec((1, tn, Cl), lambda b, i: (b, i, 0)),
            pl.BlockSpec((1, tn, Cl), lambda b, i: (b, i, 0)),
            pl.BlockSpec((1, tn, Cl), lambda b, i: (b, i, 0)),
            pl.BlockSpec((1, 1, C7), lambda b, i: (b, 0, 0)),
            pl.BlockSpec((Cl, C7), lambda b, i: (0, 0)),
            pl.BlockSpec((Cl, C7), lambda b, i: (0, 0)),
            pl.BlockSpec((Cl, C7), lambda b, i: (0, 0)),
            pl.BlockSpec((C7, C8), lambda b, i: (0, 0)),
            pl.BlockSpec((1, C8), lambda b, i: (0, 0)),
            pl.BlockSpec((C8, Co), lambda b, i: (0, 0)),
        ],
        out_specs=pl.BlockSpec((1, tn, Co), lambda b, i: (b, i, 0)),
        compiler_params=_PP,
    )(x1, x2, x3, g7[:, None, :], w7a, w7b, w7c, w8, b8, w9)


# ------------------------------- parameters ---------------------------------

def make_params(key, emb_dims, num_classes=13):
    keys = iter(jax.random.split(key, 32))

    def w(cin, cout):
        return jax.random.normal(next(keys), (cin, cout), jnp.float32) \
            * (1.0 / jnp.sqrt(cin))

    def bn(c):
        gamma = 1.0 + 0.1 * jax.random.normal(next(keys), (c,), jnp.float32)
        beta = 0.1 * jax.random.normal(next(keys), (c,), jnp.float32)
        # eval-mode BatchNorm with running_mean=0, running_var=1
        return gamma / jnp.sqrt(1.0 + 1e-5), beta

    def folded(cin, cout):
        W = w(cin, cout)
        s, b = bn(cout)
        return W * s[None, :], b.reshape(1, cout)

    def edge_first(cin, cout):
        # conv acting on concat([f - c, c]); fold concat + BN into two weights
        Ws, b = folded(2 * cin, cout)
        return dict(wf=Ws[:cin], wc=Ws[cin:] - Ws[:cin], b1=b)

    p = {}
    ec1 = edge_first(9, 64)                      # conv1: 18 -> 64
    ec1['w2'], ec1['b2'] = folded(64, 64)        # conv2
    p['ec1'] = ec1
    ec2 = edge_first(64, 64)                     # conv3: 128 -> 64
    ec2['w2'], ec2['b2'] = folded(64, 64)        # conv4
    p['ec2'] = ec2
    p['ec3'] = edge_first(64, 64)                # conv5: 128 -> 64

    W6, p['b6'] = folded(192, emb_dims)          # conv6 on [x1|x2|x3]
    p['w6a'], p['w6b'], p['w6c'] = W6[:64], W6[64:128], W6[128:]

    W7, p['b7'] = folded(emb_dims + 192, 512)    # conv7 on [global|x1|x2|x3]
    p['w7g'] = W7[:emb_dims]
    p['w7a'] = W7[emb_dims:emb_dims + 64]
    p['w7b'] = W7[emb_dims + 64:emb_dims + 128]
    p['w7c'] = W7[emb_dims + 128:]

    p['w8'], p['b8'] = folded(512, 256)          # conv8
    p['w9'] = w(256, num_classes)                # conv9: bias=False, no BN/act
    # deterministic stand-in for open3d FPFH (33-dim descriptor of xyz)
    p['fpfh_proj'] = w(3, 33)
    return p


# --------------------------------- forward ----------------------------------

def dgcnn_semseg_forward(x, p, k):
    """x: (B, 9, N) point cloud (norm-xyz + rgb + xyz) -> (B, 13, N) logits."""
    B, _, N = x.shape
    xt = jnp.transpose(x, (0, 2, 1)).astype(jnp.float32)      # (B, N, 9)

    # TODO(synk): open3d normal estimation + FPFH histogram has no JAX/Pallas
    # equivalent; replaced by a fixed deterministic 3->33 projection of the
    # xyz channels (x[:, 6:, :]) used only to build the kNN neighbour index.
    fpfh = xt[:, :, 6:9] @ p['fpfh_proj']                     # (B, N, 33)
    idx = knn_idx(fpfh, k)                                    # (B, N, k)
    idx_t = jnp.transpose(idx, (0, 2, 1))                     # (B, k, N)

    # EdgeConv blocks (gather in XLA, conv/conv/edge-max fused in Pallas)
    x1 = edgeconv(gather_neighbors(xt, idx_t), xt, p['ec1'])  # (B, N, 64)
    x2 = edgeconv(gather_neighbors(x1, idx_t), x1, p['ec2'])  # (B, N, 64)
    x3 = edgeconv(gather_neighbors(x2, idx_t), x2, p['ec3'])  # (B, N, 64)

    g = conv6_global_max(x1, x2, x3, p)                       # (B, emb)
    g7 = g @ p['w7g'] + p['b7']                               # (B, 512) tiny

    out = seg_head(x1, x2, x3, g7, p)                         # (B, N, 13)
    return jnp.transpose(out, (0, 2, 1))                      # (B, 13, N)


# ----------------------------------- main ------------------------------------

if __name__ == "__main__":
    B, N, K, EMB, NUM_CLASSES = 2, 16, 4, 64, 13
    key = jax.random.PRNGKey(0)
    kx, kp = jax.random.split(key)
    x = jax.random.normal(kx, (B, 9, N), jnp.float32)
    params = make_params(kp, EMB, NUM_CLASSES)

    fwd = jax.jit(functools.partial(dgcnn_semseg_forward, k=K))
    out = jax.block_until_ready(fwd(x, params))
    assert out.shape == (B, NUM_CLASSES, N), out.shape
    assert bool(jnp.all(jnp.isfinite(out)))
    print("KERNEL_OK")
</pallas_src>

<mosaic_0001>
module attributes {stable_mosaic.version = 11 : i64} {
  func.func @_edgeconv_kernel(%arg0: i32, %arg1: i32, %arg2: memref<1x4x16x9xf32, #tpu.memory_space<vmem>>, %arg3: memref<1x16x9xf32, #tpu.memory_space<vmem>>, %arg4: memref<9x64xf32, #tpu.memory_space<vmem>>, %arg5: memref<9x64xf32, #tpu.memory_space<vmem>>, %arg6: memref<1x64xf32, #tpu.memory_space<vmem>>, %arg7: memref<64x64xf32, #tpu.memory_space<vmem>>, %arg8: memref<1x64xf32, #tpu.memory_space<vmem>>, %arg9: memref<1x16x64xf32, #tpu.memory_space<vmem>>) attributes {dimension_semantics = [#tpu.dimension_semantics<parallel>, #tpu.dimension_semantics<parallel>], iteration_bounds = array<i64: 2, 1>, scalar_prefetch = 0 : i64, scratch_operands = 0 : i64, tpu.core_type = #tpu.core_type<tc>, window_params = [{transform_indices = @transform_0, window_bounds = array<i64: 1, 4, 16, 9>}, {transform_indices = @transform_1, window_bounds = array<i64: 1, 16, 9>}, {pipeline_mode = #tpu.pipeline_mode<synchronous>, transform_indices = @transform_2, window_bounds = array<i64: 9, 64>}, {pipeline_mode = #tpu.pipeline_mode<synchronous>, transform_indices = @transform_3, window_bounds = array<i64: 9, 64>}, {pipeline_mode = #tpu.pipeline_mode<synchronous>, transform_indices = @transform_4, window_bounds = array<i64: 1, 64>}, {pipeline_mode = #tpu.pipeline_mode<synchronous>, transform_indices = @transform_5, window_bounds = array<i64: 64, 64>}, {pipeline_mode = #tpu.pipeline_mode<synchronous>, transform_indices = @transform_6, window_bounds = array<i64: 1, 64>}, {transform_indices = @transform_7, window_bounds = array<i64: 1, 16, 64>}]} {
    %c0 = arith.constant 0 : index
    %c0_0 = arith.constant 0 : index
    %c0_1 = arith.constant 0 : index
    %0 = vector.load %arg3[%c0, %c0_0, %c0_1] : memref<1x16x9xf32, #tpu.memory_space<vmem>>, vector<1x16x9xf32>
    %1 = vector.shape_cast %0 : vector<1x16x9xf32> to vector<16x9xf32>
    %c0_2 = arith.constant 0 : index
    %c0_3 = arith.constant 0 : index
    %2 = vector.load %arg5[%c0_2, %c0_3] : memref<9x64xf32, #tpu.memory_space<vmem>>, vector<9x64xf32>
    %cst = arith.constant dense<0.000000e+00> : vector<16x64xf32>
    %3 = tpu.matmul %1, %2, %cst {dimension_numbers = #tpu.dot_dimension_numbers<[1], [0], [0], [1], [0, 0, 1, 1], [], []>} : vector<16x9xf32>, vector<9x64xf32>, vector<16x64xf32> -> vector<16x64xf32>
    %c0_4 = arith.constant 0 : index
    %c0_5 = arith.constant 0 : index
    %4 = vector.load %arg6[%c0_4, %c0_5] : memref<1x64xf32, #tpu.memory_space<vmem>>, vector<1x64xf32>
    %5 = vector.broadcast %4 : vector<1x64xf32> to vector<16x64xf32>
    %6 = arith.addf %3, %5 : vector<16x64xf32>
    %c0_6 = arith.constant 0 : index
    %c0_7 = arith.constant 0 : index
    %c0_8 = arith.constant 0 : index
    %c0_9 = arith.constant 0 : index
    %7 = vector.load %arg2[%c0_6, %c0_7, %c0_8, %c0_9] : memref<1x4x16x9xf32, #tpu.memory_space<vmem>>, vector<1x1x16x9xf32>
    %8 = vector.shape_cast %7 : vector<1x1x16x9xf32> to vector<16x9xf32>
    %c0_10 = arith.constant 0 : index
    %c0_11 = arith.constant 0 : index
    %9 = vector.load %arg4[%c0_10, %c0_11] : memref<9x64xf32, #tpu.memory_space<vmem>>, vector<9x64xf32>
    %cst_12 = arith.constant dense<0.000000e+00> : vector<16x64xf32>
    %10 = tpu.matmul %8, %9, %cst_12 {dimension_numbers = #tpu.dot_dimension_numbers<[1], [0], [0], [1], [0, 0, 1, 1], [], []>} : vector<16x9xf32>, vector<9x64xf32>, vector<16x64xf32> -> vector<16x64xf32>
    %11 = arith.addf %10, %6 : vector<16x64xf32>
    %cst_13 = arith.constant 0.000000e+00 : f32
    %12 = vector.broadcast %cst_13 : f32 to vector<16x64xf32>
    %13 = arith.cmpf ogt, %11, %12 : vector<16x64xf32>
    %cst_14 = arith.constant 2.000000e-01 : f32
    %14 = vector.broadcast %cst_14 : f32 to vector<16x64xf32>
    %15 = arith.mulf %14, %11 : vector<16x64xf32>
    %16 = arith.select %13, %11, %15 : vector<16x64xi1>, vector<16x64xf32>
    %c0_15 = arith.constant 0 : index
    %c0_16 = arith.constant 0 : index
    %17 = vector.load %arg7[%c0_15, %c0_16] : memref<64x64xf32, #tpu.memory_space<vmem>>, vector<64x64xf32>
    %cst_17 = arith.constant dense<0.000000e+00> : vector<16x64xf32>
    %18 = tpu.matmul %16, %17, %cst_17 {dimension_numbers = #tpu.dot_dimension_numbers<[1], [0], [0], [1], [0, 0, 1, 1], [], []>} : vector<16x64xf32>, vector<64x64xf32>, vector<16x64xf32> -> vector<16x64xf32>
    %c0_18 = arith.constant 0 : index
    %c0_19 = arith.constant 0 : index
    %19 = vector.load %arg8[%c0_18, %c0_19] : memref<1x64xf32, #tpu.memory_space<vmem>>, vector<1x64xf32>
    %20 = vector.broadcast %19 : vector<1x64xf32> to vector<16x64xf32>
    %21 = arith.addf %18, %20 : vector<16x64xf32>
    %cst_20 = arith.constant 0.000000e+00 : f32
    %22 = vector.broadcast %cst_20 : f32 to vector<16x64xf32>
    %23 = arith.cmpf ogt, %21, %22 : vector<16x64xf32>
    %cst_21 = arith.constant 2.000000e-01 : f32
    %24 = vector.broadcast %cst_21 : f32 to vector<16x64xf32>
    %25 = arith.mulf %24, %21 : vector<16x64xf32>
    %26 = arith.select %23, %21, %25 : vector<16x64xi1>, vector<16x64xf32>
    %c0_22 = arith.constant 0 : index
    %c1 = arith.constant 1 : index
    %c0_23 = arith.constant 0 : index
    %c0_24 = arith.constant 0 : index
    %27 = vector.load %arg2[%c0_22, %c1, %c0_23, %c0_24] : memref<1x4x16x9xf32, #tpu.memory_space<vmem>>, vector<1x1x16x9xf32>
    %28 = vector.shape_cast %27 : vector<1x1x16x9xf32> to vector<16x9xf32>
    %c0_25 = arith.constant 0 : index
    %c0_26 = arith.constant 0 : index
    %29 = vector.load %arg4[%c0_25, %c0_26] : memref<9x64xf32, #tpu.memory_space<vmem>>, vector<9x64xf32>
    %cst_27 = arith.constant dense<0.000000e+00> : vector<16x64xf32>
    %30 = tpu.matmul %28, %29, %cst_27 {dimension_numbers = #tpu.dot_dimension_numbers<[1], [0], [0], [1], [0, 0, 1, 1], [], []>} : vector<16x9xf32>, vector<9x64xf32>, vector<16x64xf32> -> vector<16x64xf32>
    %31 = arith.addf %30, %6 : vector<16x64xf32>
    %cst_28 = arith.constant 0.000000e+00 : f32
    %32 = vector.broadcast %cst_28 : f32 to vector<16x64xf32>
    %33 = arith.cmpf ogt, %31, %32 : vector<16x64xf32>
    %cst_29 = arith.constant 2.000000e-01 : f32
    %34 = vector.broadcast %cst_29 : f32 to vector<16x64xf32>
    %35 = arith.mulf %34, %31 : vector<16x64xf32>
    %36 = arith.select %33, %31, %35 : vector<16x64xi1>, vector<16x64xf32>
    %c0_30 = arith.constant 0 : index
    %c0_31 = arith.constant 0 : index
    %37 = vector.load %arg7[%c0_30, %c0_31] : memref<64x64xf32, #tpu.memory_space<vmem>>, vector<64x64xf32>
    %cst_32 = arith.constant dense<0.000000e+00> : vector<16x64xf32>
    %38 = tpu.matmul %36, %37, %cst_32 {dimension_numbers = #tpu.dot_dimension_numbers<[1], [0], [0], [1], [0, 0, 1, 1], [], []>} : vector<16x64xf32>, vector<64x64xf32>, vector<16x64xf32> -> vector<16x64xf32>
    %c0_33 = arith.constant 0 : index
    %c0_34 = arith.constant 0 : index
    %39 = vector.load %arg8[%c0_33, %c0_34] : memref<1x64xf32, #tpu.memory_space<vmem>>, vector<1x64xf32>
    %40 = vector.broadcast %39 : vector<1x64xf32> to vector<16x64xf32>
    %41 = arith.addf %38, %40 : vector<16x64xf32>
    %cst_35 = arith.constant 0.000000e+00 : f32
    %42 = vector.broadcast %cst_35 : f32 to vector<16x64xf32>
    %43 = arith.cmpf ogt, %41, %42 : vector<16x64xf32>
    %cst_36 = arith.constant 2.000000e-01 : f32
    %44 = vector.broadcast %cst_36 : f32 to vector<16x64xf32>
    %45 = arith.mulf %44, %41 : vector<16x64xf32>
    %46 = arith.select %43, %41, %45 : vector<16x64xi1>, vector<16x64xf32>
    %47 = arith.maximumf %26, %46 : vector<16x64xf32>
    %c0_37 = arith.constant 0 : index
    %c2 = arith.constant 2 : index
    %c0_38 = arith.constant 0 : index
    %c0_39 = arith.constant 0 : index
    %48 = vector.load %arg2[%c0_37, %c2, %c0_38, %c0_39] : memref<1x4x16x9xf32, #tpu.memory_space<vmem>>, vector<1x1x16x9xf32>
    %49 = vector.shape_cast %48 : vector<1x1x16x9xf32> to vector<16x9xf32>
    %c0_40 = arith.constant 0 : index
    %c0_41 = arith.constant 0 : index
    %50 = vector.load %arg4[%c0_40, %c0_41] : memref<9x64xf32, #tpu.memory_space<vmem>>, vector<9x64xf32>
    %cst_42 = arith.constant dense<0.000000e+00> : vector<16x64xf32>
    %51 = tpu.matmul %49, %50, %cst_42 {dimension_numbers = #tpu.dot_dimension_numbers<[1], [0], [0], [1], [0, 0, 1, 1], [], []>} : vector<16x9xf32>, vector<9x64xf32>, vector<16x64xf32> -> vector<16x64xf32>
    %52 = arith.addf %51, %6 : vector<16x64xf32>
    %cst_43 = arith.constant 0.000000e+00 : f32
    %53 = vector.broadcast %cst_43 : f32 to vector<16x64xf32>
    %54 = arith.cmpf ogt, %52, %53 : vector<16x64xf32>
    %cst_44 = arith.constant 2.000000e-01 : f32
    %55 = vector.broadcast %cst_44 : f32 to vector<16x64xf32>
    %56 = arith.mulf %55, %52 : vector<16x64xf32>
    %57 = arith.select %54, %52, %56 : vector<16x64xi1>, vector<16x64xf32>
    %c0_45 = arith.constant 0 : index
    %c0_46 = arith.constant 0 : index
    %58 = vector.load %arg7[%c0_45, %c0_46] : memref<64x64xf32, #tpu.memory_space<vmem>>, vector<64x64xf32>
    %cst_47 = arith.constant dense<0.000000e+00> : vector<16x64xf32>
    %59 = tpu.matmul %57, %58, %cst_47 {dimension_numbers = #tpu.dot_dimension_numbers<[1], [0], [0], [1], [0, 0, 1, 1], [], []>} : vector<16x64xf32>, vector<64x64xf32>, vector<16x64xf32> -> vector<16x64xf32>
    %c0_48 = arith.constant 0 : index
    %c0_49 = arith.constant 0 : index
    %60 = vector.load %arg8[%c0_48, %c0_49] : memref<1x64xf32, #tpu.memory_space<vmem>>, vector<1x64xf32>
    %61 = vector.broadcast %60 : vector<1x64xf32> to vector<16x64xf32>
    %62 = arith.addf %59, %61 : vector<16x64xf32>
    %cst_50 = arith.constant 0.000000e+00 : f32
    %63 = vector.broadcast %cst_50 : f32 to vector<16x64xf32>
    %64 = arith.cmpf ogt, %62, %63 : vector<16x64xf32>
    %cst_51 = arith.constant 2.000000e-01 : f32
    %65 = vector.broadcast %cst_51 : f32 to vector<16x64xf32>
    %66 = arith.mulf %65, %62 : vector<16x64xf32>
    %67 = arith.select %64, %62, %66 : vector<16x64xi1>, vector<16x64xf32>
    %68 = arith.maximumf %47, %67 : vector<16x64xf32>
    %c0_52 = arith.constant 0 : index
    %c3 = arith.constant 3 : index
    %c0_53 = arith.constant 0 : index
    %c0_54 = arith.constant 0 : index
    %69 = vector.load %arg2[%c0_52, %c3, %c0_53, %c0_54] : memref<1x4x16x9xf32, #tpu.memory_space<vmem>>, vector<1x1x16x9xf32>
    %70 = vector.shape_cast %69 : vector<1x1x16x9xf32> to vector<16x9xf32>
    %c0_55 = arith.constant 0 : index
    %c0_56 = arith.constant 0 : index
    %71 = vector.load %arg4[%c0_55, %c0_56] : memref<9x64xf32, #tpu.memory_space<vmem>>, vector<9x64xf32>
    %cst_57 = arith.constant dense<0.000000e+00> : vector<16x64xf32>
    %72 = tpu.matmul %70, %71, %cst_57 {dimension_numbers = #tpu.dot_dimension_numbers<[1], [0], [0], [1], [0, 0, 1, 1], [], []>} : vector<16x9xf32>, vector<9x64xf32>, vector<16x64xf32> -> vector<16x64xf32>
    %73 = arith.addf %72, %6 : vector<16x64xf32>
    %cst_58 = arith.constant 0.000000e+00 : f32
    %74 = vector.broadcast %cst_58 : f32 to vector<16x64xf32>
    %75 = arith.cmpf ogt, %73, %74 : vector<16x64xf32>
    %cst_59 = arith.constant 2.000000e-01 : f32
    %76 = vector.broadcast %cst_59 : f32 to vector<16x64xf32>
    %77 = arith.mulf %76, %73 : vector<16x64xf32>
    %78 = arith.select %75, %73, %77 : vector<16x64xi1>, vector<16x64xf32>
    %c0_60 = arith.constant 0 : index
    %c0_61 = arith.constant 0 : index
    %79 = vector.load %arg7[%c0_60, %c0_61] : memref<64x64xf32, #tpu.memory_space<vmem>>, vector<64x64xf32>
    %cst_62 = arith.constant dense<0.000000e+00> : vector<16x64xf32>
    %80 = tpu.matmul %78, %79, %cst_62 {dimension_numbers = #tpu.dot_dimension_numbers<[1], [0], [0], [1], [0, 0, 1, 1], [], []>} : vector<16x64xf32>, vector<64x64xf32>, vector<16x64xf32> -> vector<16x64xf32>
    %c0_63 = arith.constant 0 : index
    %c0_64 = arith.constant 0 : index
    %81 = vector.load %arg8[%c0_63, %c0_64] : memref<1x64xf32, #tpu.memory_space<vmem>>, vector<1x64xf32>
    %82 = vector.broadcast %81 : vector<1x64xf32> to vector<16x64xf32>
    %83 = arith.addf %80, %82 : vector<16x64xf32>
    %cst_65 = arith.constant 0.000000e+00 : f32
    %84 = vector.broadcast %cst_65 : f32 to vector<16x64xf32>
    %85 = arith.cmpf ogt, %83, %84 : vector<16x64xf32>
    %cst_66 = arith.constant 2.000000e-01 : f32
    %86 = vector.broadcast %cst_66 : f32 to vector<16x64xf32>
    %87 = arith.mulf %86, %83 : vector<16x64xf32>
    %88 = arith.select %85, %83, %87 : vector<16x64xi1>, vector<16x64xf32>
    %89 = arith.maximumf %68, %88 : vector<16x64xf32>
    %c0_67 = arith.constant 0 : index
    %c0_68 = arith.constant 0 : index
    %c0_69 = arith.constant 0 : index
    %90 = vector.load %arg9[%c0_67, %c0_68, %c0_69] : memref<1x16x64xf32, #tpu.memory_space<vmem>>, vector<1x16x64xf32>
    %91 = vector.shape_cast %90 : vector<1x16x64xf32> to vector<16x64xf32>
    %92 = vector.shape_cast %89 : vector<16x64xf32> to vector<1x16x64xf32>
    tpu.vector_store %arg9[%c0_67, %c0_68, %c0_69], %92 {strides = array<i32>} : memref<1x16x64xf32, #tpu.memory_space<vmem>>, vector<1x16x64xf32>,
    return
  }
  func.func @transform_0(%arg0: i32, %arg1: i32) -> (i32, i32, i32, i32) {
    %c0_i32 = arith.constant 0 : i32
    %c0_i32_0 = arith.constant 0 : i32
    %c0_i32_1 = arith.constant 0 : i32
    return %arg0, %c0_i32, %arg1, %c0_i32_0 : i32, i32, i32, i32
  }
  func.func @transform_1(%arg0: i32, %arg1: i32) -> (i32, i32, i32) {
    %c0_i32 = arith.constant 0 : i32
    %c0_i32_0 = arith.constant 0 : i32
    return %arg0, %arg1, %c0_i32 : i32, i32, i32
  }
  func.func @transform_2(%arg0: i32, %arg1: i32) -> (i32, i32) {
    %c0_i32 = arith.constant 0 : i32
    %c0_i32_0 = arith.constant 0 : i32
    %c0_i32_1 = arith.constant 0 : i32
    return %c0_i32, %c0_i32_0 : i32, i32
  }
  func.func @transform_3(%arg0: i32, %arg1: i32) -> (i32, i32) {
    %c0_i32 = arith.constant 0 : i32
    %c0_i32_0 = arith.constant 0 : i32
    %c0_i32_1 = arith.constant 0 : i32
    return %c0_i32, %c0_i32_0 : i32, i32
  }
  func.func @transform_4(%arg0: i32, %arg1: i32) -> (i32, i32) {
    %c0_i32 = arith.constant 0 : i32
    %c0_i32_0 = arith.constant 0 : i32
    %c0_i32_1 = arith.constant 0 : i32
    return %c0_i32, %c0_i32_0 : i32, i32
  }
  func.func @transform_5(%arg0: i32, %arg1: i32) -> (i32, i32) {
    %c0_i32 = arith.constant 0 : i32
    %c0_i32_0 = arith.constant 0 : i32
    %c0_i32_1 = arith.constant 0 : i32
    return %c0_i32, %c0_i32_0 : i32, i32
  }
  func.func @transform_6(%arg0: i32, %arg1: i32) -> (i32, i32) {
    %c0_i32 = arith.constant 0 : i32
    %c0_i32_0 = arith.constant 0 : i32
    %c0_i32_1 = arith.constant 0 : i32
    return %c0_i32, %c0_i32_0 : i32, i32
  }
  func.func @transform_7(%arg0: i32, %arg1: i32) -> (i32, i32, i32) {
    %c0_i32 = arith.constant 0 : i32
    %c0_i32_0 = arith.constant 0 : i32
    return %arg0, %arg1, %c0_i32 : i32, i32, i32
  }
}

module attributes {stable_mosaic.version = 11 : i64} {
  func.func @_pdist_kernel(%arg0: i32, %arg1: i32, %arg2: memref<1x16x33xf32, #tpu.memory_space<vmem>>, %arg3: memref<1x33x16xf32, #tpu.memory_space<vmem>>, %arg4: memref<1x16x1xf32, #tpu.memory_space<vmem>>, %arg5: memref<1x1x16xf32, #tpu.memory_space<vmem>>, %arg6: memref<1x16x16xf32, #tpu.memory_space<vmem>>) attributes {dimension_semantics = [#tpu.dimension_semantics<parallel>, #tpu.dimension_semantics<parallel>], iteration_bounds = array<i64: 2, 1>, scalar_prefetch = 0 : i64, scratch_operands = 0 : i64, tpu.core_type = #tpu.core_type<tc>, window_params = [{transform_indices = @transform_0, window_bounds = array<i64: 1, 16, 33>}, {transform_indices = @transform_1, window_bounds = array<i64: 1, 33, 16>}, {transform_indices = @transform_2, window_bounds = array<i64: 1, 16, 1>}, {transform_indices = @transform_3, window_bounds = array<i64: 1, 1, 16>}, {transform_indices = @transform_4, window_bounds = array<i64: 1, 16, 16>}]} {
    %c0 = arith.constant 0 : index
    %c0_0 = arith.constant 0 : index
    %c0_1 = arith.constant 0 : index
    %0 = vector.load %arg2[%c0, %c0_0, %c0_1] : memref<1x16x33xf32, #tpu.memory_space<vmem>>, vector<1x16x33xf32>
    %1 = vector.shape_cast %0 : vector<1x16x33xf32> to vector<16x33xf32>
    %c0_2 = arith.constant 0 : index
    %c0_3 = arith.constant 0 : index
    %c0_4 = arith.constant 0 : index
    %2 = vector.load %arg3[%c0_2, %c0_3, %c0_4] : memref<1x33x16xf32, #tpu.memory_space<vmem>>, vector<1x33x16xf32>
    %3 = vector.shape_cast %2 : vector<1x33x16xf32> to vector<33x16xf32>
    %cst = arith.constant dense<0.000000e+00> : vector<16x16xf32>
    %4 = tpu.matmul %1, %3, %cst {dimension_numbers = #tpu.dot_dimension_numbers<[1], [0], [0], [1], [0, 0, 1, 1], [], []>} : vector<16x33xf32>, vector<33x16xf32>, vector<16x16xf32> -> vector<16x16xf32>
    %cst_5 = arith.constant 2.000000e+00 : f32
    %5 = vector.broadcast %cst_5 : f32 to vector<16x16xf32>
    %6 = arith.mulf %5, %4 : vector<16x16xf32>
    %c0_6 = arith.constant 0 : index
    %c0_7 = arith.constant 0 : index
    %c0_8 = arith.constant 0 : index
    %7 = vector.load %arg4[%c0_6, %c0_7, %c0_8] : memref<1x16x1xf32, #tpu.memory_space<vmem>>, vector<1x16x1xf32>
    %8 = vector.shape_cast %7 : vector<1x16x1xf32> to vector<16x1xf32>
    %9 = vector.broadcast %8 : vector<16x1xf32> to vector<16x16xf32>
    %10 = arith.subf %6, %9 : vector<16x16xf32>
    %c0_9 = arith.constant 0 : index
    %c0_10 = arith.constant 0 : index
    %c0_11 = arith.constant 0 : index
    %11 = vector.load %arg5[%c0_9, %c0_10, %c0_11] : memref<1x1x16xf32, #tpu.memory_space<vmem>>, vector<1x1x16xf32>
    %12 = vector.shape_cast %11 : vector<1x1x16xf32> to vector<1x16xf32>
    %13 = vector.broadcast %12 : vector<1x16xf32> to vector<16x16xf32>
    %14 = arith.subf %10, %13 : vector<16x16xf32>
    %c0_12 = arith.constant 0 : index
    %c0_13 = arith.constant 0 : index
    %c0_14 = arith.constant 0 : index
    %15 = vector.load %arg6[%c0_12, %c0_13, %c0_14] : memref<1x16x16xf32, #tpu.memory_space<vmem>>, vector<1x16x16xf32>
    %16 = vector.shape_cast %15 : vector<1x16x16xf32> to vector<16x16xf32>
    %17 = vector.shape_cast %14 : vector<16x16xf32> to vector<1x16x16xf32>
    tpu.vector_store %arg6[%c0_12, %c0_13, %c0_14], %17 {strides = array<i32>} : memref<1x16x16xf32, #tpu.memory_space<vmem>>, vector<1x16x16xf32>,
    return
  }
  func.func @transform_0(%arg0: i32, %arg1: i32) -> (i32, i32, i32) {
    %c0_i32 = arith.constant 0 : i32
    %c0_i32_0 = arith.constant 0 : i32
    return %arg0, %arg1, %c0_i32 : i32, i32, i32
  }
  func.func @transform_1(%arg0: i32, %arg1: i32) -> (i32, i32, i32) {
    %c0_i32 = arith.constant 0 : i32
    %c0_i32_0 = arith.constant 0 : i32
    %c0_i32_1 = arith.constant 0 : i32
    return %arg0, %c0_i32, %c0_i32_0 : i32, i32, i32
  }
  func.func @transform_2(%arg0: i32, %arg1: i32) -> (i32, i32, i32) {
    %c0_i32 = arith.constant 0 : i32
    %c0_i32_0 = arith.constant 0 : i32
    return %arg0, %arg1, %c0_i32 : i32, i32, i32
  }
  func.func @transform_3(%arg0: i32, %arg1: i32) -> (i32, i32, i32) {
    %c0_i32 = arith.constant 0 : i32
    %c0_i32_0 = arith.constant 0 : i32
    %c0_i32_1 = arith.constant 0 : i32
    return %arg0, %c0_i32, %c0_i32_0 : i32, i32, i32
  }
  func.func @transform_4(%arg0: i32, %arg1: i32) -> (i32, i32, i32) {
    %c0_i32 = arith.constant 0 : i32
    %c0_i32_0 = arith.constant 0 : i32
    return %arg0, %arg1, %c0_i32 : i32, i32, i32
  }
}

module attributes {stable_mosaic.version = 11 : i64} {
  func.func @_edgeconv_kernel(%arg0: i32, %arg1: i32, %arg2: memref<1x4x16x64xf32, #tpu.memory_space<vmem>>, %arg3: memref<1x16x64xf32, #tpu.memory_space<vmem>>, %arg4: memref<64x64xf32, #tpu.memory_space<vmem>>, %arg5: memref<64x64xf32, #tpu.memory_space<vmem>>, %arg6: memref<1x64xf32, #tpu.memory_space<vmem>>, %arg7: memref<1x16x64xf32, #tpu.memory_space<vmem>>) attributes {dimension_semantics = [#tpu.dimension_semantics<parallel>, #tpu.dimension_semantics<parallel>], iteration_bounds = array<i64: 2, 1>, scalar_prefetch = 0 : i64, scratch_operands = 0 : i64, tpu.core_type = #tpu.core_type<tc>, window_params = [{transform_indices = @transform_0, window_bounds = array<i64: 1, 4, 16, 64>}, {transform_indices = @transform_1, window_bounds = array<i64: 1, 16, 64>}, {pipeline_mode = #tpu.pipeline_mode<synchronous>, transform_indices = @transform_2, window_bounds = array<i64: 64, 64>}, {pipeline_mode = #tpu.pipeline_mode<synchronous>, transform_indices = @transform_3, window_bounds = array<i64: 64, 64>}, {pipeline_mode = #tpu.pipeline_mode<synchronous>, transform_indices = @transform_4, window_bounds = array<i64: 1, 64>}, {transform_indices = @transform_5, window_bounds = array<i64: 1, 16, 64>}]} {
    %c0 = arith.constant 0 : index
    %c0_0 = arith.constant 0 : index
    %c0_1 = arith.constant 0 : index
    %0 = vector.load %arg3[%c0, %c0_0, %c0_1] : memref<1x16x64xf32, #tpu.memory_space<vmem>>, vector<1x16x64xf32>
    %1 = vector.shape_cast %0 : vector<1x16x64xf32> to vector<16x64xf32>
    %c0_2 = arith.constant 0 : index
    %c0_3 = arith.constant 0 : index
    %2 = vector.load %arg5[%c0_2, %c0_3] : memref<64x64xf32, #tpu.memory_space<vmem>>, vector<64x64xf32>
    %cst = arith.constant dense<0.000000e+00> : vector<16x64xf32>
    %3 = tpu.matmul %1, %2, %cst {dimension_numbers = #tpu.dot_dimension_numbers<[1], [0], [0], [1], [0, 0, 1, 1], [], []>} : vector<16x64xf32>, vector<64x64xf32>, vector<16x64xf32> -> vector<16x64xf32>
    %c0_4 = arith.constant 0 : index
    %c0_5 = arith.constant 0 : index
    %4 = vector.load %arg6[%c0_4, %c0_5] : memref<1x64xf32, #tpu.memory_space<vmem>>, vector<1x64xf32>
    %5 = vector.broadcast %4 : vector<1x64xf32> to vector<16x64xf32>
    %6 = arith.addf %3, %5 : vector<16x64xf32>
    %c0_6 = arith.constant 0 : index
    %c0_7 = arith.constant 0 : index
    %c0_8 = arith.constant 0 : index
    %c0_9 = arith.constant 0 : index
    %7 = vector.load %arg2[%c0_6, %c0_7, %c0_8, %c0_9] : memref<1x4x16x64xf32, #tpu.memory_space<vmem>>, vector<1x1x16x64xf32>
    %8 = vector.shape_cast %7 : vector<1x1x16x64xf32> to vector<16x64xf32>
    %c0_10 = arith.constant 0 : index
    %c0_11 = arith.constant 0 : index
    %9 = vector.load %arg4[%c0_10, %c0_11] : memref<64x64xf32, #tpu.memory_space<vmem>>, vector<64x64xf32>
    %cst_12 = arith.constant dense<0.000000e+00> : vector<16x64xf32>
    %10 = tpu.matmul %8, %9, %cst_12 {dimension_numbers = #tpu.dot_dimension_numbers<[1], [0], [0], [1], [0, 0, 1, 1], [], []>} : vector<16x64xf32>, vector<64x64xf32>, vector<16x64xf32> -> vector<16x64xf32>
    %11 = arith.addf %10, %6 : vector<16x64xf32>
    %cst_13 = arith.constant 0.000000e+00 : f32
    %12 = vector.broadcast %cst_13 : f32 to vector<16x64xf32>
    %13 = arith.cmpf ogt, %11, %12 : vector<16x64xf32>
    %cst_14 = arith.constant 2.000000e-01 : f32
    %14 = vector.broadcast %cst_14 : f32 to vector<16x64xf32>
    %15 = arith.mulf %14, %11 : vector<16x64xf32>
    %16 = arith.select %13, %11, %15 : vector<16x64xi1>, vector<16x64xf32>
    %c0_15 = arith.constant 0 : index
    %c1 = arith.constant 1 : index
    %c0_16 = arith.constant 0 : index
    %c0_17 = arith.constant 0 : index
    %17 = vector.load %arg2[%c0_15, %c1, %c0_16, %c0_17] : memref<1x4x16x64xf32, #tpu.memory_space<vmem>>, vector<1x1x16x64xf32>
    %18 = vector.shape_cast %17 : vector<1x1x16x64xf32> to vector<16x64xf32>
    %c0_18 = arith.constant 0 : index
    %c0_19 = arith.constant 0 : index
    %19 = vector.load %arg4[%c0_18, %c0_19] : memref<64x64xf32, #tpu.memory_space<vmem>>, vector<64x64xf32>
    %cst_20 = arith.constant dense<0.000000e+00> : vector<16x64xf32>
    %20 = tpu.matmul %18, %19, %cst_20 {dimension_numbers = #tpu.dot_dimension_numbers<[1], [0], [0], [1], [0, 0, 1, 1], [], []>} : vector<16x64xf32>, vector<64x64xf32>, vector<16x64xf32> -> vector<16x64xf32>
    %21 = arith.addf %20, %6 : vector<16x64xf32>
    %cst_21 = arith.constant 0.000000e+00 : f32
    %22 = vector.broadcast %cst_21 : f32 to vector<16x64xf32>
    %23 = arith.cmpf ogt, %21, %22 : vector<16x64xf32>
    %cst_22 = arith.constant 2.000000e-01 : f32
    %24 = vector.broadcast %cst_22 : f32 to vector<16x64xf32>
    %25 = arith.mulf %24, %21 : vector<16x64xf32>
    %26 = arith.select %23, %21, %25 : vector<16x64xi1>, vector<16x64xf32>
    %27 = arith.maximumf %16, %26 : vector<16x64xf32>
    %c0_23 = arith.constant 0 : index
    %c2 = arith.constant 2 : index
    %c0_24 = arith.constant 0 : index
    %c0_25 = arith.constant 0 : index
    %28 = vector.load %arg2[%c0_23, %c2, %c0_24, %c0_25] : memref<1x4x16x64xf32, #tpu.memory_space<vmem>>, vector<1x1x16x64xf32>
    %29 = vector.shape_cast %28 : vector<1x1x16x64xf32> to vector<16x64xf32>
    %c0_26 = arith.constant 0 : index
    %c0_27 = arith.constant 0 : index
    %30 = vector.load %arg4[%c0_26, %c0_27] : memref<64x64xf32, #tpu.memory_space<vmem>>, vector<64x64xf32>
    %cst_28 = arith.constant dense<0.000000e+00> : vector<16x64xf32>
    %31 = tpu.matmul %29, %30, %cst_28 {dimension_numbers = #tpu.dot_dimension_numbers<[1], [0], [0], [1], [0, 0, 1, 1], [], []>} : vector<16x64xf32>, vector<64x64xf32>, vector<16x64xf32> -> vector<16x64xf32>
    %32 = arith.addf %31, %6 : vector<16x64xf32>
    %cst_29 = arith.constant 0.000000e+00 : f32
    %33 = vector.broadcast %cst_29 : f32 to vector<16x64xf32>
    %34 = arith.cmpf ogt, %32, %33 : vector<16x64xf32>
    %cst_30 = arith.constant 2.000000e-01 : f32
    %35 = vector.broadcast %cst_30 : f32 to vector<16x64xf32>
    %36 = arith.mulf %35, %32 : vector<16x64xf32>
    %37 = arith.select %34, %32, %36 : vector<16x64xi1>, vector<16x64xf32>
    %38 = arith.maximumf %27, %37 : vector<16x64xf32>
    %c0_31 = arith.constant 0 : index
    %c3 = arith.constant 3 : index
    %c0_32 = arith.constant 0 : index
    %c0_33 = arith.constant 0 : index
    %39 = vector.load %arg2[%c0_31, %c3, %c0_32, %c0_33] : memref<1x4x16x64xf32, #tpu.memory_space<vmem>>, vector<1x1x16x64xf32>
    %40 = vector.shape_cast %39 : vector<1x1x16x64xf32> to vector<16x64xf32>
    %c0_34 = arith.constant 0 : index
    %c0_35 = arith.constant 0 : index
    %41 = vector.load %arg4[%c0_34, %c0_35] : memref<64x64xf32, #tpu.memory_space<vmem>>, vector<64x64xf32>
    %cst_36 = arith.constant dense<0.000000e+00> : vector<16x64xf32>
    %42 = tpu.matmul %40, %41, %cst_36 {dimension_numbers = #tpu.dot_dimension_numbers<[1], [0], [0], [1], [0, 0, 1, 1], [], []>} : vector<16x64xf32>, vector<64x64xf32>, vector<16x64xf32> -> vector<16x64xf32>
    %43 = arith.addf %42, %6 : vector<16x64xf32>
    %cst_37 = arith.constant 0.000000e+00 : f32
    %44 = vector.broadcast %cst_37 : f32 to vector<16x64xf32>
    %45 = arith.cmpf ogt, %43, %44 : vector<16x64xf32>
    %cst_38 = arith.constant 2.000000e-01 : f32
    %46 = vector.broadcast %cst_38 : f32 to vector<16x64xf32>
    %47 = arith.mulf %46, %43 : vector<16x64xf32>
    %48 = arith.select %45, %43, %47 : vector<16x64xi1>, vector<16x64xf32>
    %49 = arith.maximumf %38, %48 : vector<16x64xf32>
    %c0_39 = arith.constant 0 : index
    %c0_40 = arith.constant 0 : index
    %c0_41 = arith.constant 0 : index
    %50 = vector.load %arg7[%c0_39, %c0_40, %c0_41] : memref<1x16x64xf32, #tpu.memory_space<vmem>>, vector<1x16x64xf32>
    %51 = vector.shape_cast %50 : vector<1x16x64xf32> to vector<16x64xf32>
    %52 = vector.shape_cast %49 : vector<16x64xf32> to vector<1x16x64xf32>
    tpu.vector_store %arg7[%c0_39, %c0_40, %c0_41], %52 {strides = array<i32>} : memref<1x16x64xf32, #tpu.memory_space<vmem>>, vector<1x16x64xf32>,
    return
  }
  func.func @transform_0(%arg0: i32, %arg1: i32) -> (i32, i32, i32, i32) {
    %c0_i32 = arith.constant 0 : i32
    %c0_i32_0 = arith.constant 0 : i32
    %c0_i32_1 = arith.constant 0 : i32
    return %arg0, %c0_i32, %arg1, %c0_i32_0 : i32, i32, i32, i32
  }
  func.func @transform_1(%arg0: i32, %arg1: i32) -> (i32, i32, i32) {
    %c0_i32 = arith.constant 0 : i32
    %c0_i32_0 = arith.constant 0 : i32
    return %arg0, %arg1, %c0_i32 : i32, i32, i32
  }
  func.func @transform_2(%arg0: i32, %arg1: i32) -> (i32, i32) {
    %c0_i32 = arith.constant 0 : i32
    %c0_i32_0 = arith.constant 0 : i32
    %c0_i32_1 = arith.constant 0 : i32
    return %c0_i32, %c0_i32_0 : i32, i32
  }
  func.func @transform_3(%arg0: i32, %arg1: i32) -> (i32, i32) {
    %c0_i32 = arith.constant 0 : i32
    %c0_i32_0 = arith.constant 0 : i32
    %c0_i32_1 = arith.constant 0 : i32
    return %c0_i32, %c0_i32_0 : i32, i32
  }
  func.func @transform_4(%arg0: i32, %arg1: i32) -> (i32, i32) {
    %c0_i32 = arith.constant 0 : i32
    %c0_i32_0 = arith.constant 0 : i32
    %c0_i32_1 = arith.constant 0 : i32
    return %c0_i32, %c0_i32_0 : i32, i32
  }
  func.func @transform_5(%arg0: i32, %arg1: i32) -> (i32, i32, i32) {
    %c0_i32 = arith.constant 0 : i32
    %c0_i32_0 = arith.constant 0 : i32
    return %arg0, %arg1, %c0_i32 : i32, i32, i32
  }
}

module attributes {stable_mosaic.version = 11 : i64} {
  func.func @_edgeconv_kernel(%arg0: i32, %arg1: i32, %arg2: memref<1x4x16x64xf32, #tpu.memory_space<vmem>>, %arg3: memref<1x16x64xf32, #tpu.memory_space<vmem>>, %arg4: memref<64x64xf32, #tpu.memory_space<vmem>>, %arg5: memref<64x64xf32, #tpu.memory_space<vmem>>, %arg6: memref<1x64xf32, #tpu.memory_space<vmem>>, %arg7: memref<64x64xf32, #tpu.memory_space<vmem>>, %arg8: memref<1x64xf32, #tpu.memory_space<vmem>>, %arg9: memref<1x16x64xf32, #tpu.memory_space<vmem>>) attributes {dimension_semantics = [#tpu.dimension_semantics<parallel>, #tpu.dimension_semantics<parallel>], iteration_bounds = array<i64: 2, 1>, scalar_prefetch = 0 : i64, scratch_operands = 0 : i64, tpu.core_type = #tpu.core_type<tc>, window_params = [{transform_indices = @transform_0, window_bounds = array<i64: 1, 4, 16, 64>}, {transform_indices = @transform_1, window_bounds = array<i64: 1, 16, 64>}, {pipeline_mode = #tpu.pipeline_mode<synchronous>, transform_indices = @transform_2, window_bounds = array<i64: 64, 64>}, {pipeline_mode = #tpu.pipeline_mode<synchronous>, transform_indices = @transform_3, window_bounds = array<i64: 64, 64>}, {pipeline_mode = #tpu.pipeline_mode<synchronous>, transform_indices = @transform_4, window_bounds = array<i64: 1, 64>}, {pipeline_mode = #tpu.pipeline_mode<synchronous>, transform_indices = @transform_5, window_bounds = array<i64: 64, 64>}, {pipeline_mode = #tpu.pipeline_mode<synchronous>, transform_indices = @transform_6, window_bounds = array<i64: 1, 64>}, {transform_indices = @transform_7, window_bounds = array<i64: 1, 16, 64>}]} {
    %c0 = arith.constant 0 : index
    %c0_0 = arith.constant 0 : index
    %c0_1 = arith.constant 0 : index
    %0 = vector.load %arg3[%c0, %c0_0, %c0_1] : memref<1x16x64xf32, #tpu.memory_space<vmem>>, vector<1x16x64xf32>
    %1 = vector.shape_cast %0 : vector<1x16x64xf32> to vector<16x64xf32>
    %c0_2 = arith.constant 0 : index
    %c0_3 = arith.constant 0 : index
    %2 = vector.load %arg5[%c0_2, %c0_3] : memref<64x64xf32, #tpu.memory_space<vmem>>, vector<64x64xf32>
    %cst = arith.constant dense<0.000000e+00> : vector<16x64xf32>
    %3 = tpu.matmul %1, %2, %cst {dimension_numbers = #tpu.dot_dimension_numbers<[1], [0], [0], [1], [0, 0, 1, 1], [], []>} : vector<16x64xf32>, vector<64x64xf32>, vector<16x64xf32> -> vector<16x64xf32>
    %c0_4 = arith.constant 0 : index
    %c0_5 = arith.constant 0 : index
    %4 = vector.load %arg6[%c0_4, %c0_5] : memref<1x64xf32, #tpu.memory_space<vmem>>, vector<1x64xf32>
    %5 = vector.broadcast %4 : vector<1x64xf32> to vector<16x64xf32>
    %6 = arith.addf %3, %5 : vector<16x64xf32>
    %c0_6 = arith.constant 0 : index
    %c0_7 = arith.constant 0 : index
    %c0_8 = arith.constant 0 : index
    %c0_9 = arith.constant 0 : index
    %7 = vector.load %arg2[%c0_6, %c0_7, %c0_8, %c0_9] : memref<1x4x16x64xf32, #tpu.memory_space<vmem>>, vector<1x1x16x64xf32>
    %8 = vector.shape_cast %7 : vector<1x1x16x64xf32> to vector<16x64xf32>
    %c0_10 = arith.constant 0 : index
    %c0_11 = arith.constant 0 : index
    %9 = vector.load %arg4[%c0_10, %c0_11] : memref<64x64xf32, #tpu.memory_space<vmem>>, vector<64x64xf32>
    %cst_12 = arith.constant dense<0.000000e+00> : vector<16x64xf32>
    %10 = tpu.matmul %8, %9, %cst_12 {dimension_numbers = #tpu.dot_dimension_numbers<[1], [0], [0], [1], [0, 0, 1, 1], [], []>} : vector<16x64xf32>, vector<64x64xf32>, vector<16x64xf32> -> vector<16x64xf32>
    %11 = arith.addf %10, %6 : vector<16x64xf32>
    %cst_13 = arith.constant 0.000000e+00 : f32
    %12 = vector.broadcast %cst_13 : f32 to vector<16x64xf32>
    %13 = arith.cmpf ogt, %11, %12 : vector<16x64xf32>
    %cst_14 = arith.constant 2.000000e-01 : f32
    %14 = vector.broadcast %cst_14 : f32 to vector<16x64xf32>
    %15 = arith.mulf %14, %11 : vector<16x64xf32>
    %16 = arith.select %13, %11, %15 : vector<16x64xi1>, vector<16x64xf32>
    %c0_15 = arith.constant 0 : index
    %c0_16 = arith.constant 0 : index
    %17 = vector.load %arg7[%c0_15, %c0_16] : memref<64x64xf32, #tpu.memory_space<vmem>>, vector<64x64xf32>
    %cst_17 = arith.constant dense<0.000000e+00> : vector<16x64xf32>
    %18 = tpu.matmul %16, %17, %cst_17 {dimension_numbers = #tpu.dot_dimension_numbers<[1], [0], [0], [1], [0, 0, 1, 1], [], []>} : vector<16x64xf32>, vector<64x64xf32>, vector<16x64xf32> -> vector<16x64xf32>
    %c0_18 = arith.constant 0 : index
    %c0_19 = arith.constant 0 : index
    %19 = vector.load %arg8[%c0_18, %c0_19] : memref<1x64xf32, #tpu.memory_space<vmem>>, vector<1x64xf32>
    %20 = vector.broadcast %19 : vector<1x64xf32> to vector<16x64xf32>
    %21 = arith.addf %18, %20 : vector<16x64xf32>
    %cst_20 = arith.constant 0.000000e+00 : f32
    %22 = vector.broadcast %cst_20 : f32 to vector<16x64xf32>
    %23 = arith.cmpf ogt, %21, %22 : vector<16x64xf32>
    %cst_21 = arith.constant 2.000000e-01 : f32
    %24 = vector.broadcast %cst_21 : f32 to vector<16x64xf32>
    %25 = arith.mulf %24, %21 : vector<16x64xf32>
    %26 = arith.select %23, %21, %25 : vector<16x64xi1>, vector<16x64xf32>
    %c0_22 = arith.constant 0 : index
    %c1 = arith.constant 1 : index
    %c0_23 = arith.constant 0 : index
    %c0_24 = arith.constant 0 : index
    %27 = vector.load %arg2[%c0_22, %c1, %c0_23, %c0_24] : memref<1x4x16x64xf32, #tpu.memory_space<vmem>>, vector<1x1x16x64xf32>
    %28 = vector.shape_cast %27 : vector<1x1x16x64xf32> to vector<16x64xf32>
    %c0_25 = arith.constant 0 : index
    %c0_26 = arith.constant 0 : index
    %29 = vector.load %arg4[%c0_25, %c0_26] : memref<64x64xf32, #tpu.memory_space<vmem>>, vector<64x64xf32>
    %cst_27 = arith.constant dense<0.000000e+00> : vector<16x64xf32>
    %30 = tpu.matmul %28, %29, %cst_27 {dimension_numbers = #tpu.dot_dimension_numbers<[1], [0], [0], [1], [0, 0, 1, 1], [], []>} : vector<16x64xf32>, vector<64x64xf32>, vector<16x64xf32> -> vector<16x64xf32>
    %31 = arith.addf %30, %6 : vector<16x64xf32>
    %cst_28 = arith.constant 0.000000e+00 : f32
    %32 = vector.broadcast %cst_28 : f32 to vector<16x64xf32>
    %33 = arith.cmpf ogt, %31, %32 : vector<16x64xf32>
    %cst_29 = arith.constant 2.000000e-01 : f32
    %34 = vector.broadcast %cst_29 : f32 to vector<16x64xf32>
    %35 = arith.mulf %34, %31 : vector<16x64xf32>
    %36 = arith.select %33, %31, %35 : vector<16x64xi1>, vector<16x64xf32>
    %c0_30 = arith.constant 0 : index
    %c0_31 = arith.constant 0 : index
    %37 = vector.load %arg7[%c0_30, %c0_31] : memref<64x64xf32, #tpu.memory_space<vmem>>, vector<64x64xf32>
    %cst_32 = arith.constant dense<0.000000e+00> : vector<16x64xf32>
    %38 = tpu.matmul %36, %37, %cst_32 {dimension_numbers = #tpu.dot_dimension_numbers<[1], [0], [0], [1], [0, 0, 1, 1], [], []>} : vector<16x64xf32>, vector<64x64xf32>, vector<16x64xf32> -> vector<16x64xf32>
    %c0_33 = arith.constant 0 : index
    %c0_34 = arith.constant 0 : index
    %39 = vector.load %arg8[%c0_33, %c0_34] : memref<1x64xf32, #tpu.memory_space<vmem>>, vector<1x64xf32>
    %40 = vector.broadcast %39 : vector<1x64xf32> to vector<16x64xf32>
    %41 = arith.addf %38, %40 : vector<16x64xf32>
    %cst_35 = arith.constant 0.000000e+00 : f32
    %42 = vector.broadcast %cst_35 : f32 to vector<16x64xf32>
    %43 = arith.cmpf ogt, %41, %42 : vector<16x64xf32>
    %cst_36 = arith.constant 2.000000e-01 : f32
    %44 = vector.broadcast %cst_36 : f32 to vector<16x64xf32>
    %45 = arith.mulf %44, %41 : vector<16x64xf32>
    %46 = arith.select %43, %41, %45 : vector<16x64xi1>, vector<16x64xf32>
    %47 = arith.maximumf %26, %46 : vector<16x64xf32>
    %c0_37 = arith.constant 0 : index
    %c2 = arith.constant 2 : index
    %c0_38 = arith.constant 0 : index
    %c0_39 = arith.constant 0 : index
    %48 = vector.load %arg2[%c0_37, %c2, %c0_38, %c0_39] : memref<1x4x16x64xf32, #tpu.memory_space<vmem>>, vector<1x1x16x64xf32>
    %49 = vector.shape_cast %48 : vector<1x1x16x64xf32> to vector<16x64xf32>
    %c0_40 = arith.constant 0 : index
    %c0_41 = arith.constant 0 : index
    %50 = vector.load %arg4[%c0_40, %c0_41] : memref<64x64xf32, #tpu.memory_space<vmem>>, vector<64x64xf32>
    %cst_42 = arith.constant dense<0.000000e+00> : vector<16x64xf32>
    %51 = tpu.matmul %49, %50, %cst_42 {dimension_numbers = #tpu.dot_dimension_numbers<[1], [0], [0], [1], [0, 0, 1, 1], [], []>} : vector<16x64xf32>, vector<64x64xf32>, vector<16x64xf32> -> vector<16x64xf32>
    %52 = arith.addf %51, %6 : vector<16x64xf32>
    %cst_43 = arith.constant 0.000000e+00 : f32
    %53 = vector.broadcast %cst_43 : f32 to vector<16x64xf32>
    %54 = arith.cmpf ogt, %52, %53 : vector<16x64xf32>
    %cst_44 = arith.constant 2.000000e-01 : f32
    %55 = vector.broadcast %cst_44 : f32 to vector<16x64xf32>
    %56 = arith.mulf %55, %52 : vector<16x64xf32>
    %57 = arith.select %54, %52, %56 : vector<16x64xi1>, vector<16x64xf32>
    %c0_45 = arith.constant 0 : index
    %c0_46 = arith.constant 0 : index
    %58 = vector.load %arg7[%c0_45, %c0_46] : memref<64x64xf32, #tpu.memory_space<vmem>>, vector<64x64xf32>
    %cst_47 = arith.constant dense<0.000000e+00> : vector<16x64xf32>
    %59 = tpu.matmul %57, %58, %cst_47 {dimension_numbers = #tpu.dot_dimension_numbers<[1], [0], [0], [1], [0, 0, 1, 1], [], []>} : vector<16x64xf32>, vector<64x64xf32>, vector<16x64xf32> -> vector<16x64xf32>
    %c0_48 = arith.constant 0 : index
    %c0_49 = arith.constant 0 : index
    %60 = vector.load %arg8[%c0_48, %c0_49] : memref<1x64xf32, #tpu.memory_space<vmem>>, vector<1x64xf32>
    %61 = vector.broadcast %60 : vector<1x64xf32> to vector<16x64xf32>
    %62 = arith.addf %59, %61 : vector<16x64xf32>
    %cst_50 = arith.constant 0.000000e+00 : f32
    %63 = vector.broadcast %cst_50 : f32 to vector<16x64xf32>
    %64 = arith.cmpf ogt, %62, %63 : vector<16x64xf32>
    %cst_51 = arith.constant 2.000000e-01 : f32
    %65 = vector.broadcast %cst_51 : f32 to vector<16x64xf32>
    %66 = arith.mulf %65, %62 : vector<16x64xf32>
    %67 = arith.select %64, %62, %66 : vector<16x64xi1>, vector<16x64xf32>
    %68 = arith.maximumf %47, %67 : vector<16x64xf32>
    %c0_52 = arith.constant 0 : index
    %c3 = arith.constant 3 : index
    %c0_53 = arith.constant 0 : index
    %c0_54 = arith.constant 0 : index
    %69 = vector.load %arg2[%c0_52, %c3, %c0_53, %c0_54] : memref<1x4x16x64xf32, #tpu.memory_space<vmem>>, vector<1x1x16x64xf32>
    %70 = vector.shape_cast %69 : vector<1x1x16x64xf32> to vector<16x64xf32>
    %c0_55 = arith.constant 0 : index
    %c0_56 = arith.constant 0 : index
    %71 = vector.load %arg4[%c0_55, %c0_56] : memref<64x64xf32, #tpu.memory_space<vmem>>, vector<64x64xf32>
    %cst_57 = arith.constant dense<0.000000e+00> : vector<16x64xf32>
    %72 = tpu.matmul %70, %71, %cst_57 {dimension_numbers = #tpu.dot_dimension_numbers<[1], [0], [0], [1], [0, 0, 1, 1], [], []>} : vector<16x64xf32>, vector<64x64xf32>, vector<16x64xf32> -> vector<16x64xf32>
    %73 = arith.addf %72, %6 : vector<16x64xf32>
    %cst_58 = arith.constant 0.000000e+00 : f32
    %74 = vector.broadcast %cst_58 : f32 to vector<16x64xf32>
    %75 = arith.cmpf ogt, %73, %74 : vector<16x64xf32>
    %cst_59 = arith.constant 2.000000e-01 : f32
    %76 = vector.broadcast %cst_59 : f32 to vector<16x64xf32>
    %77 = arith.mulf %76, %73 : vector<16x64xf32>
    %78 = arith.select %75, %73, %77 : vector<16x64xi1>, vector<16x64xf32>
    %c0_60 = arith.constant 0 : index
    %c0_61 = arith.constant 0 : index
    %79 = vector.load %arg7[%c0_60, %c0_61] : memref<64x64xf32, #tpu.memory_space<vmem>>, vector<64x64xf32>
    %cst_62 = arith.constant dense<0.000000e+00> : vector<16x64xf32>
    %80 = tpu.matmul %78, %79, %cst_62 {dimension_numbers = #tpu.dot_dimension_numbers<[1], [0], [0], [1], [0, 0, 1, 1], [], []>} : vector<16x64xf32>, vector<64x64xf32>, vector<16x64xf32> -> vector<16x64xf32>
    %c0_63 = arith.constant 0 : index
    %c0_64 = arith.constant 0 : index
    %81 = vector.load %arg8[%c0_63, %c0_64] : memref<1x64xf32, #tpu.memory_space<vmem>>, vector<1x64xf32>
    %82 = vector.broadcast %81 : vector<1x64xf32> to vector<16x64xf32>
    %83 = arith.addf %80, %82 : vector<16x64xf32>
    %cst_65 = arith.constant 0.000000e+00 : f32
    %84 = vector.broadcast %cst_65 : f32 to vector<16x64xf32>
    %85 = arith.cmpf ogt, %83, %84 : vector<16x64xf32>
    %cst_66 = arith.constant 2.000000e-01 : f32
    %86 = vector.broadcast %cst_66 : f32 to vector<16x64xf32>
    %87 = arith.mulf %86, %83 : vector<16x64xf32>
    %88 = arith.select %85, %83, %87 : vector<16x64xi1>, vector<16x64xf32>
    %89 = arith.maximumf %68, %88 : vector<16x64xf32>
    %c0_67 = arith.constant 0 : index
    %c0_68 = arith.constant 0 : index
    %c0_69 = arith.constant 0 : index
    %90 = vector.load %arg9[%c0_67, %c0_68, %c0_69] : memref<1x16x64xf32, #tpu.memory_space<vmem>>, vector<1x16x64xf32>
    %91 = vector.shape_cast %90 : vector<1x16x64xf32> to vector<16x64xf32>
    %92 = vector.shape_cast %89 : vector<16x64xf32> to vector<1x16x64xf32>
    tpu.vector_store %arg9[%c0_67, %c0_68, %c0_69], %92 {strides = array<i32>} : memref<1x16x64xf32, #tpu.memory_space<vmem>>, vector<1x16x64xf32>,
    return
  }
  func.func @transform_0(%arg0: i32, %arg1: i32) -> (i32, i32, i32, i32) {
    %c0_i32 = arith.constant 0 : i32
    %c0_i32_0 = arith.constant 0 : i32
    %c0_i32_1 = arith.constant 0 : i32
    return %arg0, %c0_i32, %arg1, %c0_i32_0 : i32, i32, i32, i32
  }
  func.func @transform_1(%arg0: i32, %arg1: i32) -> (i32, i32, i32) {
    %c0_i32 = arith.constant 0 : i32
    %c0_i32_0 = arith.constant 0 : i32
    return %arg0, %arg1, %c0_i32 : i32, i32, i32
  }
  func.func @transform_2(%arg0: i32, %arg1: i32) -> (i32, i32) {
    %c0_i32 = arith.constant 0 : i32
    %c0_i32_0 = arith.constant 0 : i32
    %c0_i32_1 = arith.constant 0 : i32
    return %c0_i32, %c0_i32_0 : i32, i32
  }
  func.func @transform_3(%arg0: i32, %arg1: i32) -> (i32, i32) {
    %c0_i32 = arith.constant 0 : i32
    %c0_i32_0 = arith.constant 0 : i32
    %c0_i32_1 = arith.constant 0 : i32
    return %c0_i32, %c0_i32_0 : i32, i32
  }
  func.func @transform_4(%arg0: i32, %arg1: i32) -> (i32, i32) {
    %c0_i32 = arith.constant 0 : i32
    %c0_i32_0 = arith.constant 0 : i32
    %c0_i32_1 = arith.constant 0 : i32
    return %c0_i32, %c0_i32_0 : i32, i32
  }
  func.func @transform_5(%arg0: i32, %arg1: i32) -> (i32, i32) {
    %c0_i32 = arith.constant 0 : i32
    %c0_i32_0 = arith.constant 0 : i32
    %c0_i32_1 = arith.constant 0 : i32
    return %c0_i32, %c0_i32_0 : i32, i32
  }
  func.func @transform_6(%arg0: i32, %arg1: i32) -> (i32, i32) {
    %c0_i32 = arith.constant 0 : i32
    %c0_i32_0 = arith.constant 0 : i32
    %c0_i32_1 = arith.constant 0 : i32
    return %c0_i32, %c0_i32_0 : i32, i32
  }
  func.func @transform_7(%arg0: i32, %arg1: i32) -> (i32, i32, i32) {
    %c0_i32 = arith.constant 0 : i32
    %c0_i32_0 = arith.constant 0 : i32
    return %arg0, %arg1, %c0_i32 : i32, i32, i32
  }
}

module attributes {stable_mosaic.version = 11 : i64} {
  func.func @_conv6_max_kernel(%arg0: i32, %arg1: i32, %arg2: memref<1x16x64xf32, #tpu.memory_space<vmem>>, %arg3: memref<1x16x64xf32, #tpu.memory_space<vmem>>, %arg4: memref<1x16x64xf32, #tpu.memory_space<vmem>>, %arg5: memref<64x64xf32, #tpu.memory_space<vmem>>, %arg6: memref<64x64xf32, #tpu.memory_space<vmem>>, %arg7: memref<64x64xf32, #tpu.memory_space<vmem>>, %arg8: memref<1x64xf32, #tpu.memory_space<vmem>>, %arg9: memref<1x1x64xf32, #tpu.memory_space<vmem>>) attributes {dimension_semantics = [#tpu.dimension_semantics<parallel>, #tpu.dimension_semantics<arbitrary>], iteration_bounds = array<i64: 2, 1>, scalar_prefetch = 0 : i64, scratch_operands = 0 : i64, tpu.core_type = #tpu.core_type<tc>, window_params = [{transform_indices = @transform_0, window_bounds = array<i64: 1, 16, 64>}, {transform_indices = @transform_1, window_bounds = array<i64: 1, 16, 64>}, {transform_indices = @transform_2, window_bounds = array<i64: 1, 16, 64>}, {pipeline_mode = #tpu.pipeline_mode<synchronous>, transform_indices = @transform_3, window_bounds = array<i64: 64, 64>}, {pipeline_mode = #tpu.pipeline_mode<synchronous>, transform_indices = @transform_4, window_bounds = array<i64: 64, 64>}, {pipeline_mode = #tpu.pipeline_mode<synchronous>, transform_indices = @transform_5, window_bounds = array<i64: 64, 64>}, {pipeline_mode = #tpu.pipeline_mode<synchronous>, transform_indices = @transform_6, window_bounds = array<i64: 1, 64>}, {transform_indices = @transform_7, window_bounds = array<i64: 1, 1, 64>}]} {
    %c0_i32 = arith.constant 0 : i32
    %0 = arith.cmpi eq, %arg1, %c0_i32 : i32
    %1 = arith.extui %0 : i1 to i32
    %c0_i32_0 = arith.constant 0 : i32
    %2 = arith.cmpi ne, %1, %c0_i32_0 : i32
    scf.if %2 {
      %cst_30 = arith.constant 0xFF800000 : f32
      %41 = vector.broadcast %cst_30 : f32 to vector<1x1x64xf32>
      %c0_31 = arith.constant 0 : index
      %c0_32 = arith.constant 0 : index
      %c0_33 = arith.constant 0 : index
      %42 = vector.load %arg9[%c0_31, %c0_32, %c0_33] : memref<1x1x64xf32, #tpu.memory_space<vmem>>, vector<1x1x64xf32>
      tpu.vector_store %arg9[%c0_31, %c0_32, %c0_33], %41 {strides = array<i32>} : memref<1x1x64xf32, #tpu.memory_space<vmem>>, vector<1x1x64xf32>,
    } else {
    }
    %c0 = arith.constant 0 : index
    %c0_1 = arith.constant 0 : index
    %c0_2 = arith.constant 0 : index
    %3 = vector.load %arg2[%c0, %c0_1, %c0_2] : memref<1x16x64xf32, #tpu.memory_space<vmem>>, vector<1x16x64xf32>
    %4 = vector.shape_cast %3 : vector<1x16x64xf32> to vector<16x64xf32>
    %c0_3 = arith.constant 0 : index
    %c0_4 = arith.constant 0 : index
    %5 = vector.load %arg5[%c0_3, %c0_4] : memref<64x64xf32, #tpu.memory_space<vmem>>, vector<64x64xf32>
    %cst = arith.constant dense<0.000000e+00> : vector<16x64xf32>
    %6 = tpu.matmul %4, %5, %cst {dimension_numbers = #tpu.dot_dimension_numbers<[1], [0], [0], [1], [0, 0, 1, 1], [], []>} : vector<16x64xf32>, vector<64x64xf32>, vector<16x64xf32> -> vector<16x64xf32>
    %c0_5 = arith.constant 0 : index
    %c0_6 = arith.constant 0 : index
    %c0_7 = arith.constant 0 : index
    %7 = vector.load %arg3[%c0_5, %c0_6, %c0_7] : memref<1x16x64xf32, #tpu.memory_space<vmem>>, vector<1x16x64xf32>
    %8 = vector.shape_cast %7 : vector<1x16x64xf32> to vector<16x64xf32>
    %c0_8 = arith.constant 0 : index
    %c0_9 = arith.constant 0 : index
    %9 = vector.load %arg6[%c0_8, %c0_9] : memref<64x64xf32, #tpu.memory_space<vmem>>, vector<64x64xf32>
    %cst_10 = arith.constant dense<0.000000e+00> : vector<16x64xf32>
    %10 = tpu.matmul %8, %9, %cst_10 {dimension_numbers = #tpu.dot_dimension_numbers<[1], [0], [0], [1], [0, 0, 1, 1], [], []>} : vector<16x64xf32>, vector<64x64xf32>, vector<16x64xf32> -> vector<16x64xf32>
    %11 = arith.addf %6, %10 : vector<16x64xf32>
    %c0_11 = arith.constant 0 : index
    %c0_12 = arith.constant 0 : index
    %c0_13 = arith.constant 0 : index
    %12 = vector.load %arg4[%c0_11, %c0_12, %c0_13] : memref<1x16x64xf32, #tpu.memory_space<vmem>>, vector<1x16x64xf32>
    %13 = vector.shape_cast %12 : vector<1x16x64xf32> to vector<16x64xf32>
    %c0_14 = arith.constant 0 : index
    %c0_15 = arith.constant 0 : index
    %14 = vector.load %arg7[%c0_14, %c0_15] : memref<64x64xf32, #tpu.memory_space<vmem>>, vector<64x64xf32>
    %cst_16 = arith.constant dense<0.000000e+00> : vector<16x64xf32>
    %15 = tpu.matmul %13, %14, %cst_16 {dimension_numbers = #tpu.dot_dimension_numbers<[1], [0], [0], [1], [0, 0, 1, 1], [], []>} : vector<16x64xf32>, vector<64x64xf32>, vector<16x64xf32> -> vector<16x64xf32>
    %16 = arith.addf %11, %15 : vector<16x64xf32>
    %c0_17 = arith.constant 0 : index
    %c0_18 = arith.constant 0 : index
    %17 = vector.load %arg8[%c0_17, %c0_18] : memref<1x64xf32, #tpu.memory_space<vmem>>, vector<1x64xf32>
    %18 = vector.broadcast %17 : vector<1x64xf32> to vector<16x64xf32>
    %19 = arith.addf %16, %18 : vector<16x64xf32>
    %cst_19 = arith.constant 0.000000e+00 : f32
    %20 = vector.broadcast %cst_19 : f32 to vector<16x64xf32>
    %21 = arith.cmpf ogt, %19, %20 : vector<16x64xf32>
    %cst_20 = arith.constant 2.000000e-01 : f32
    %22 = vector.broadcast %cst_20 : f32 to vector<16x64xf32>
    %23 = arith.mulf %22, %19 : vector<16x64xf32>
    %24 = arith.select %21, %19, %23 : vector<16x64xi1>, vector<16x64xf32>
    %c16_i32 = arith.constant 16 : i32
    %25 = arith.muli %arg1, %c16_i32 : i32
    %26 = tpu.iota {dimensions = array<i32: 0>} : vector<16x64xi32>
    %27 = vector.broadcast %25 : i32 to vector<16x64xi32>
    %28 = arith.addi %27, %26 : vector<16x64xi32>
    %c16_i32_21 = arith.constant 16 : i32
    %29 = vector.broadcast %c16_i32_21 : i32 to vector<16x64xi32>
    %30 = arith.cmpi slt, %28, %29 : vector<16x64xi32>
    %cst_22 = arith.constant 0xFF800000 : f32
    %31 = vector.broadcast %cst_22 : f32 to vector<16x64xf32>
    %32 = arith.select %30, %24, %31 : vector<16x64xi1>, vector<16x64xf32>
    %c0_23 = arith.constant 0 : index
    %c0_24 = arith.constant 0 : index
    %c0_25 = arith.constant 0 : index
    %33 = vector.load %arg9[%c0_23, %c0_24, %c0_25] : memref<1x1x64xf32, #tpu.memory_space<vmem>>, vector<1x1x64xf32>
    %34 = vector.shape_cast %33 : vector<1x1x64xf32> to vector<1x64xf32>
    %cst_26 = arith.constant dense<0xFF800000> : vector<64xf32>
    %35 = vector.multi_reduction <maximumf>, %32, %cst_26 [0] : vector<16x64xf32> to vector<64xf32>
    %36 = vector.shape_cast %35 : vector<64xf32> to vector<1x64xf32>
    %37 = arith.maximumf %34, %36 : vector<1x64xf32>
    %c0_27 = arith.constant 0 : index
    %c0_28 = arith.constant 0 : index
    %c0_29 = arith.constant 0 : index
    %38 = vector.load %arg9[%c0_27, %c0_28, %c0_29] : memref<1x1x64xf32, #tpu.memory_space<vmem>>, vector<1x1x64xf32>
    %39 = vector.shape_cast %38 : vector<1x1x64xf32> to vector<1x64xf32>
    %40 = vector.shape_cast %37 : vector<1x64xf32> to vector<1x1x64xf32>
    tpu.vector_store %arg9[%c0_27, %c0_28, %c0_29], %40 {strides = array<i32>} : memref<1x1x64xf32, #tpu.memory_space<vmem>>, vector<1x1x64xf32>,
    return
  }
  func.func @transform_0(%arg0: i32, %arg1: i32) -> (i32, i32, i32) {
    %c0_i32 = arith.constant 0 : i32
    %c0_i32_0 = arith.constant 0 : i32
    return %arg0, %arg1, %c0_i32 : i32, i32, i32
  }
  func.func @transform_1(%arg0: i32, %arg1: i32) -> (i32, i32, i32) {
    %c0_i32 = arith.constant 0 : i32
    %c0_i32_0 = arith.constant 0 : i32
    return %arg0, %arg1, %c0_i32 : i32, i32, i32
  }
  func.func @transform_2(%arg0: i32, %arg1: i32) -> (i32, i32, i32) {
    %c0_i32 = arith.constant 0 : i32
    %c0_i32_0 = arith.constant 0 : i32
    return %arg0, %arg1, %c0_i32 : i32, i32, i32
  }
  func.func @transform_3(%arg0: i32, %arg1: i32) -> (i32, i32) {
    %c0_i32 = arith.constant 0 : i32
    %c0_i32_0 = arith.constant 0 : i32
    %c0_i32_1 = arith.constant 0 : i32
    return %c0_i32, %c0_i32_0 : i32, i32
  }
  func.func @transform_4(%arg0: i32, %arg1: i32) -> (i32, i32) {
    %c0_i32 = arith.constant 0 : i32
    %c0_i32_0 = arith.constant 0 : i32
    %c0_i32_1 = arith.constant 0 : i32
    return %c0_i32, %c0_i32_0 : i32, i32
  }
  func.func @transform_5(%arg0: i32, %arg1: i32) -> (i32, i32) {
    %c0_i32 = arith.constant 0 : i32
    %c0_i32_0 = arith.constant 0 : i32
    %c0_i32_1 = arith.constant 0 : i32
    return %c0_i32, %c0_i32_0 : i32, i32
  }
  func.func @transform_6(%arg0: i32, %arg1: i32) -> (i32, i32) {
    %c0_i32 = arith.constant 0 : i32
    %c0_i32_0 = arith.constant 0 : i32
    %c0_i32_1 = arith.constant 0 : i32
    return %c0_i32, %c0_i32_0 : i32, i32
  }
  func.func @transform_7(%arg0: i32, %arg1: i32) -> (i32, i32, i32) {
    %c0_i32 = arith.constant 0 : i32
    %c0_i32_0 = arith.constant 0 : i32
    %c0_i32_1 = arith.constant 0 : i32
    return %arg0, %c0_i32, %c0_i32_0 : i32, i32, i32
  }
}

module attributes {stable_mosaic.version = 11 : i64} {
  func.func @_head_kernel(%arg0: i32, %arg1: i32, %arg2: memref<1x16x64xf32, #tpu.memory_space<vmem>>, %arg3: memref<1x16x64xf32, #tpu.memory_space<vmem>>, %arg4: memref<1x16x64xf32, #tpu.memory_space<vmem>>, %arg5: memref<1x1x512xf32, #tpu.memory_space<vmem>>, %arg6: memref<64x512xf32, #tpu.memory_space<vmem>>, %arg7: memref<64x512xf32, #tpu.memory_space<vmem>>, %arg8: memref<64x512xf32, #tpu.memory_space<vmem>>, %arg9: memref<512x256xf32, #tpu.memory_space<vmem>>, %arg10: memref<1x256xf32, #tpu.memory_space<vmem>>, %arg11: memref<256x13xf32, #tpu.memory_space<vmem>>, %arg12: memref<1x16x13xf32, #tpu.memory_space<vmem>>) attributes {dimension_semantics = [#tpu.dimension_semantics<parallel>, #tpu.dimension_semantics<parallel>], iteration_bounds = array<i64: 2, 1>, scalar_prefetch = 0 : i64, scratch_operands = 0 : i64, tpu.core_type = #tpu.core_type<tc>, window_params = [{transform_indices = @transform_0, window_bounds = array<i64: 1, 16, 64>}, {transform_indices = @transform_1, window_bounds = array<i64: 1, 16, 64>}, {transform_indices = @transform_2, window_bounds = array<i64: 1, 16, 64>}, {transform_indices = @transform_3, window_bounds = array<i64: 1, 1, 512>}, {pipeline_mode = #tpu.pipeline_mode<synchronous>, transform_indices = @transform_4, window_bounds = array<i64: 64, 512>}, {pipeline_mode = #tpu.pipeline_mode<synchronous>, transform_indices = @transform_5, window_bounds = array<i64: 64, 512>}, {pipeline_mode = #tpu.pipeline_mode<synchronous>, transform_indices = @transform_6, window_bounds = array<i64: 64, 512>}, {pipeline_mode = #tpu.pipeline_mode<synchronous>, transform_indices = @transform_7, window_bounds = array<i64: 512, 256>}, {pipeline_mode = #tpu.pipeline_mode<synchronous>, transform_indices = @transform_8, window_bounds = array<i64: 1, 256>}, {pipeline_mode = #tpu.pipeline_mode<synchronous>, transform_indices = @transform_9, window_bounds = array<i64: 256, 13>}, {transform_indices = @transform_10, window_bounds = array<i64: 1, 16, 13>}]} {
    %c0 = arith.constant 0 : index
    %c0_0 = arith.constant 0 : index
    %c0_1 = arith.constant 0 : index
    %0 = vector.load %arg2[%c0, %c0_0, %c0_1] : memref<1x16x64xf32, #tpu.memory_space<vmem>>, vector<1x16x64xf32>
    %1 = vector.shape_cast %0 : vector<1x16x64xf32> to vector<16x64xf32>
    %c0_2 = arith.constant 0 : index
    %c0_3 = arith.constant 0 : index
    %2 = vector.load %arg6[%c0_2, %c0_3] : memref<64x512xf32, #tpu.memory_space<vmem>>, vector<64x512xf32>
    %cst = arith.constant dense<0.000000e+00> : vector<16x512xf32>
    %3 = tpu.matmul %1, %2, %cst {dimension_numbers = #tpu.dot_dimension_numbers<[1], [0], [0], [1], [0, 0, 1, 1], [], []>} : vector<16x64xf32>, vector<64x512xf32>, vector<16x512xf32> -> vector<16x512xf32>
    %c0_4 = arith.constant 0 : index
    %c0_5 = arith.constant 0 : index
    %c0_6 = arith.constant 0 : index
    %4 = vector.load %arg3[%c0_4, %c0_5, %c0_6] : memref<1x16x64xf32, #tpu.memory_space<vmem>>, vector<1x16x64xf32>
    %5 = vector.shape_cast %4 : vector<1x16x64xf32> to vector<16x64xf32>
    %c0_7 = arith.constant 0 : index
    %c0_8 = arith.constant 0 : index
    %6 = vector.load %arg7[%c0_7, %c0_8] : memref<64x512xf32, #tpu.memory_space<vmem>>, vector<64x512xf32>
    %cst_9 = arith.constant dense<0.000000e+00> : vector<16x512xf32>
    %7 = tpu.matmul %5, %6, %cst_9 {dimension_numbers = #tpu.dot_dimension_numbers<[1], [0], [0], [1], [0, 0, 1, 1], [], []>} : vector<16x64xf32>, vector<64x512xf32>, vector<16x512xf32> -> vector<16x512xf32>
    %8 = arith.addf %3, %7 : vector<16x512xf32>
    %c0_10 = arith.constant 0 : index
    %c0_11 = arith.constant 0 : index
    %c0_12 = arith.constant 0 : index
    %9 = vector.load %arg4[%c0_10, %c0_11, %c0_12] : memref<1x16x64xf32, #tpu.memory_space<vmem>>, vector<1x16x64xf32>
    %10 = vector.shape_cast %9 : vector<1x16x64xf32> to vector<16x64xf32>
    %c0_13 = arith.constant 0 : index
    %c0_14 = arith.constant 0 : index
    %11 = vector.load %arg8[%c0_13, %c0_14] : memref<64x512xf32, #tpu.memory_space<vmem>>, vector<64x512xf32>
    %cst_15 = arith.constant dense<0.000000e+00> : vector<16x512xf32>
    %12 = tpu.matmul %10, %11, %cst_15 {dimension_numbers = #tpu.dot_dimension_numbers<[1], [0], [0], [1], [0, 0, 1, 1], [], []>} : vector<16x64xf32>, vector<64x512xf32>, vector<16x512xf32> -> vector<16x512xf32>
    %13 = arith.addf %8, %12 : vector<16x512xf32>
    %c0_16 = arith.constant 0 : index
    %c0_17 = arith.constant 0 : index
    %c0_18 = arith.constant 0 : index
    %14 = vector.load %arg5[%c0_16, %c0_17, %c0_18] : memref<1x1x512xf32, #tpu.memory_space<vmem>>, vector<1x1x512xf32>
    %15 = vector.shape_cast %14 : vector<1x1x512xf32> to vector<1x512xf32>
    %16 = vector.broadcast %15 : vector<1x512xf32> to vector<16x512xf32>
    %17 = arith.addf %13, %16 : vector<16x512xf32>
    %cst_19 = arith.constant 0.000000e+00 : f32
    %18 = vector.broadcast %cst_19 : f32 to vector<16x512xf32>
    %19 = arith.cmpf ogt, %17, %18 : vector<16x512xf32>
    %cst_20 = arith.constant 2.000000e-01 : f32
    %20 = vector.broadcast %cst_20 : f32 to vector<16x512xf32>
    %21 = arith.mulf %20, %17 : vector<16x512xf32>
    %22 = arith.select %19, %17, %21 : vector<16x512xi1>, vector<16x512xf32>
    %c0_21 = arith.constant 0 : index
    %c0_22 = arith.constant 0 : index
    %23 = vector.load %arg9[%c0_21, %c0_22] : memref<512x256xf32, #tpu.memory_space<vmem>>, vector<512x256xf32>
    %cst_23 = arith.constant dense<0.000000e+00> : vector<16x256xf32>
    %24 = tpu.matmul %22, %23, %cst_23 {dimension_numbers = #tpu.dot_dimension_numbers<[1], [0], [0], [1], [0, 0, 1, 1], [], []>} : vector<16x512xf32>, vector<512x256xf32>, vector<16x256xf32> -> vector<16x256xf32>
    %c0_24 = arith.constant 0 : index
    %c0_25 = arith.constant 0 : index
    %25 = vector.load %arg10[%c0_24, %c0_25] : memref<1x256xf32, #tpu.memory_space<vmem>>, vector<1x256xf32>
    %26 = vector.broadcast %25 : vector<1x256xf32> to vector<16x256xf32>
    %27 = arith.addf %24, %26 : vector<16x256xf32>
    %cst_26 = arith.constant 0.000000e+00 : f32
    %28 = vector.broadcast %cst_26 : f32 to vector<16x256xf32>
    %29 = arith.cmpf ogt, %27, %28 : vector<16x256xf32>
    %cst_27 = arith.constant 2.000000e-01 : f32
    %30 = vector.broadcast %cst_27 : f32 to vector<16x256xf32>
    %31 = arith.mulf %30, %27 : vector<16x256xf32>
    %32 = arith.select %29, %27, %31 : vector<16x256xi1>, vector<16x256xf32>
    %c0_28 = arith.constant 0 : index
    %c0_29 = arith.constant 0 : index
    %33 = vector.load %arg11[%c0_28, %c0_29] : memref<256x13xf32, #tpu.memory_space<vmem>>, vector<256x13xf32>
    %cst_30 = arith.constant dense<0.000000e+00> : vector<16x13xf32>
    %34 = tpu.matmul %32, %33, %cst_30 {dimension_numbers = #tpu.dot_dimension_numbers<[1], [0], [0], [1], [0, 0, 1, 1], [], []>} : vector<16x256xf32>, vector<256x13xf32>, vector<16x13xf32> -> vector<16x13xf32>
    %c0_31 = arith.constant 0 : index
    %c0_32 = arith.constant 0 : index
    %c0_33 = arith.constant 0 : index
    %35 = vector.load %arg12[%c0_31, %c0_32, %c0_33] : memref<1x16x13xf32, #tpu.memory_space<vmem>>, vector<1x16x13xf32>
    %36 = vector.shape_cast %35 : vector<1x16x13xf32> to vector<16x13xf32>
    %37 = vector.shape_cast %34 : vector<16x13xf32> to vector<1x16x13xf32>
    tpu.vector_store %arg12[%c0_31, %c0_32, %c0_33], %37 {strides = array<i32>} : memref<1x16x13xf32, #tpu.memory_space<vmem>>, vector<1x16x13xf32>,
    return
  }
  func.func @transform_0(%arg0: i32, %arg1: i32) -> (i32, i32, i32) {
    %c0_i32 = arith.constant 0 : i32
    %c0_i32_0 = arith.constant 0 : i32
    return %arg0, %arg1, %c0_i32 : i32, i32, i32
  }
  func.func @transform_1(%arg0: i32, %arg1: i32) -> (i32, i32, i32) {
    %c0_i32 = arith.constant 0 : i32
    %c0_i32_0 = arith.constant 0 : i32
    return %arg0, %arg1, %c0_i32 : i32, i32, i32
  }
  func.func @transform_2(%arg0: i32, %arg1: i32) -> (i32, i32, i32) {
    %c0_i32 = arith.constant 0 : i32
    %c0_i32_0 = arith.constant 0 : i32
    return %arg0, %arg1, %c0_i32 : i32, i32, i32
  }
  func.func @transform_3(%arg0: i32, %arg1: i32) -> (i32, i32, i32) {
    %c0_i32 = arith.constant 0 : i32
    %c0_i32_0 = arith.constant 0 : i32
    %c0_i32_1 = arith.constant 0 : i32
    return %arg0, %c0_i32, %c0_i32_0 : i32, i32, i32
  }
  func.func @transform_4(%arg0: i32, %arg1: i32) -> (i32, i32) {
    %c0_i32 = arith.constant 0 : i32
    %c0_i32_0 = arith.constant 0 : i32
    %c0_i32_1 = arith.constant 0 : i32
    return %c0_i32, %c0_i32_0 : i32, i32
  }
  func.func @transform_5(%arg0: i32, %arg1: i32) -> (i32, i32) {
    %c0_i32 = arith.constant 0 : i32
    %c0_i32_0 = arith.constant 0 : i32
    %c0_i32_1 = arith.constant 0 : i32
    return %c0_i32, %c0_i32_0 : i32, i32
  }
  func.func @transform_6(%arg0: i32, %arg1: i32) -> (i32, i32) {
    %c0_i32 = arith.constant 0 : i32
    %c0_i32_0 = arith.constant 0 : i32
    %c0_i32_1 = arith.constant 0 : i32
    return %c0_i32, %c0_i32_0 : i32, i32
  }
  func.func @transform_7(%arg0: i32, %arg1: i32) -> (i32, i32) {
    %c0_i32 = arith.constant 0 : i32
    %c0_i32_0 = arith.constant 0 : i32
    %c0_i32_1 = arith.constant 0 : i32
    return %c0_i32, %c0_i32_0 : i32, i32
  }
  func.func @transform_8(%arg0: i32, %arg1: i32) -> (i32, i32) {
    %c0_i32 = arith.constant 0 : i32
    %c0_i32_0 = arith.constant 0 : i32
    %c0_i32_1 = arith.constant 0 : i32
    return %c0_i32, %c0_i32_0 : i32, i32
  }
  func.func @transform_9(%arg0: i32, %arg1: i32) -> (i32, i32) {
    %c0_i32 = arith.constant 0 : i32
    %c0_i32_0 = arith.constant 0 : i32
    %c0_i32_1 = arith.constant 0 : i32
    return %c0_i32, %c0_i32_0 : i32, i32
  }
  func.func @transform_10(%arg0: i32, %arg1: i32) -> (i32, i32, i32) {
    %c0_i32 = arith.constant 0 : i32
    %c0_i32_0 = arith.constant 0 : i32
    return %arg0, %arg1, %c0_i32 : i32, i32, i32
  }
}

</mosaic_0001>

<llo_original>
// kernel: dgcnn_semseg_forward.7
$region0: #{dgcnn_semseg_forward.7}
  #allocation0 [shape = 'u32[]', space=smem, size = 0x4, offset = 0x4, fixed_abs, tag = 'smem constant byte address 0x4 - core index']
  #allocation1 [shape = 'u32[72,128]{1,0:T(1,128)}', space=vmem, size = 0x9000, scoped, tag = 'internal scratch']
  %s0 = inlined_call_operand.vmem [shape: f32[2,4,16,9], index: 0, kind: input, shape index: {}]
  %s1 = inlined_call_operand.vmem [shape: f32[2,16,9], index: 1, kind: input, shape index: {}]
  %s2 = inlined_call_operand.vmem [shape: f32[9,64], index: 2, kind: input, shape index: {}]
  %s3 = inlined_call_operand.vmem [shape: f32[9,64], index: 3, kind: input, shape index: {}]
  %s4 = inlined_call_operand.vmem [shape: f32[1,64], index: 4, kind: input, shape index: {}]
  %s5 = inlined_call_operand.vmem [shape: f32[64,64], index: 5, kind: input, shape index: {}]
  %s6 = inlined_call_operand.vmem [shape: f32[1,64], index: 6, kind: input, shape index: {}]
  %s7 = inlined_call_operand.vmem [shape: f32[2,16,64], index: 7, kind: output, shape index: {}]
  %s8 = sld [smem:[#allocation0]]
  $region61: #{dgcnn_semseg_forward.7} parent=0
    _
  %s10 = ssub.s32 1, %s8
  %s11 = scalar_select 0, %s10, %s8
  loop: start=0, step=1, limit=4
  $region2: #{dgcnn_semseg_forward.7} parent=0 // loop_pre_header
    _
  $region3: #{dgcnn_semseg_forward.7} parent=0 // loop_header
    %s13 = sphi 0, %s17
    %p14 = scmp.ge.s32.totalorder %s13, 4
    %s20 = sphi 0, %s32
    %s21 = sphi 0, %s28
    %s22 = sphi 0, %s20
    %s23 = sphi 0, %s21
    %s24 = sphi 0, %s22
    %s25 = sphi 0, %s23
    %s37 = sphi 0, %s39
    %s40 = sphi 0, %s37
    %s41 = sphi 0, %s40
    %s57 = sphi 0, %s41
    %s65 = sphi 0, %s67
    %s68 = sphi 0, %s65
    %s69 = sphi 0, %s68
    %s85 = sphi 0, %s69
    %s89 = sphi 0, %s89
    %s91 = sphi 0, %s89
    %s92 = sphi 0, %s91
    %s106 = sphi 0, %s92
    %s110 = sphi 0, %s110
    %s112 = sphi 0, %s110
    %s113 = sphi 0, %s112
    %s127 = sphi 0, %s113
    %s131 = sphi 0, %s131
    %s133 = sphi 0, %s131
    %s134 = sphi 0, %s133
    %s148 = sphi 0, %s134
    %s152 = sphi 0, %s152
    %s154 = sphi 0, %s152
    %s155 = sphi 0, %s154
    %s169 = sphi 0, %s155
    %s173 = sphi 0, %s173
    %s175 = sphi 0, %s173
    %s176 = sphi 0, %s175
    %s190 = sphi 0, %s176
    %s198 = sphi 0, %s200
    %s201 = sphi 0, %s198
    %s202 = sphi 0, %s201
    %s218 = sphi 0, %s202
  $region4: #{dgcnn_semseg_forward.7} parent=0 // loop_header_branch
    %16 = sbr.rel (%p14) target = $region8
  $region5: #{dgcnn_semseg_forward.7} parent=0 // loop_body
    %s18 = ssub.s32 %s13, 1
    %s19 = ssub.s32 %s13, 2
    %s26 = sadd.s32 1, %s21
    %p27 = scmp.ge.s32.totalorder %s26, 1
    %s28 = scalar_select %p27, 0, %s26
    %s29 = sadd.s32 1, %s20
    %s30 = scalar_select %p27, %s29, %s20
    %p31 = scmp.ge.s32.totalorder %s30, 2
    %s32 = scalar_select %p31, 0, %s30
    %s33 = ssub.s32 %s20, %s32
    %s34 = ssub.s32 %s21, %s28
    %s35 = sor.u32 %s33, %s34
    %p36 = scmp.eq.s32.totalorder %s35, 0
    %s38 = sadd.s32 %s37, 1
    %s39 = scalar_select %p36, %s37, %s38
    %p42 = pneg %p36
    %p43 = scmp.eq.s32.totalorder %s13, 1
    %p44 = por %p42, %p43
    %p45 = scmp.ne.s32.totalorder %s37, %s40
    %p46 = scmp.eq.s32.totalorder %s13, 0
    %p47 = por %p45, %p46
    %p48 = scmp.ne.s32.totalorder %s37, %s40
    %p49 = scmp.eq.s32.totalorder %s18, 1
    %p50 = por %p48, %p49
    %p51 = scmp.ne.s32.totalorder %s40, %s41
    %p52 = scmp.eq.s32.totalorder %s18, 0
    %p53 = por %p51, %p52
    %p54 = scmp.ne.s32.totalorder %s40, %s41
    %p55 = scmp.eq.s32.totalorder %s19, 1
    %p56 = por %p54, %p55
    %p58 = scmp.ne.s32.totalorder %s41, %s57
    %p59 = scmp.eq.s32.totalorder %s19, 0
    %p60 = por %p58, %p59
    %s61 = ssub.s32 %s20, %s32
    %s62 = ssub.s32 %s21, %s28
    %s63 = sor.u32 %s61, %s62
    %p64 = scmp.eq.s32.totalorder %s63, 0
    %s66 = sadd.s32 %s65, 1
    %s67 = scalar_select %p64, %s65, %s66
    %p70 = pneg %p64
    %p71 = scmp.eq.s32.totalorder %s13, 1
    %p72 = por %p70, %p71
    %p73 = scmp.ne.s32.totalorder %s65, %s68
    %p74 = scmp.eq.s32.totalorder %s13, 0
    %p75 = por %p73, %p74
    %p76 = scmp.ne.s32.totalorder %s65, %s68
    %p77 = scmp.eq.s32.totalorder %s18, 1
    %p78 = por %p76, %p77
    %p79 = scmp.ne.s32.totalorder %s68, %s69
    %p80 = scmp.eq.s32.totalorder %s18, 0
    %p81 = por %p79, %p80
    %p82 = scmp.ne.s32.totalorder %s68, %s69
    %p83 = scmp.eq.s32.totalorder %s19, 1
    %p84 = por %p82, %p83
    %p86 = scmp.ne.s32.totalorder %s69, %s85
    %p87 = scmp.eq.s32.totalorder %s19, 0
    %p88 = por %p86, %p87
    %s90 = sadd.s32 %s89, 1
    %p93 = scmp.eq.s32.totalorder %s13, 1
    %p94 = scmp.ne.s32.totalorder %s89, %s91
    %p95 = scmp.eq.s32.totalorder %s13, 0
    %p96 = por %p94, %p95
    %p97 = scmp.ne.s32.totalorder %s89, %s91
    %p98 = scmp.eq.s32.totalorder %s18, 1
    %p99 = por %p97, %p98
    %p100 = scmp.ne.s32.totalorder %s91, %s92
    %p101 = scmp.eq.s32.totalorder %s18, 0
    %p102 = por %p100, %p101
    %p103 = scmp.ne.s32.totalorder %s91, %s92
    %p104 = scmp.eq.s32.totalorder %s19, 1
    %p105 = por %p103, %p104
    %p107 = scmp.ne.s32.totalorder %s92, %s106
    %p108 = scmp.eq.s32.totalorder %s19, 0
    %p109 = por %p107, %p108
    %s111 = sadd.s32 %s110, 1
    %p114 = scmp.eq.s32.totalorder %s13, 1
    %p115 = scmp.ne.s32.totalorder %s110, %s112
    %p116 = scmp.eq.s32.totalorder %s13, 0
    %p117 = por %p115, %p116
    %p118 = scmp.ne.s32.totalorder %s110, %s112
    %p119 = scmp.eq.s32.totalorder %s18, 1
    %p120 = por %p118, %p119
    %p121 = scmp.ne.s32.totalorder %s112, %s113
    %p122 = scmp.eq.s32.totalorder %s18, 0
    %p123 = por %p121, %p122
    %p124 = scmp.ne.s32.totalorder %s112, %s113
    %p125 = scmp.eq.s32.totalorder %s19, 1
    %p126 = por %p124, %p125
    %p128 = scmp.ne.s32.totalorder %s113, %s127
    %p129 = scmp.eq.s32.totalorder %s19, 0
    %p130 = por %p128, %p129
    %s132 = sadd.s32 %s131, 1
    %p135 = scmp.eq.s32.totalorder %s13, 1
    %p136 = scmp.ne.s32.totalorder %s131, %s133
    %p137 = scmp.eq.s32.totalorder %s13, 0
    %p138 = por %p136, %p137
    %p139 = scmp.ne.s32.totalorder %s131, %s133
    %p140 = scmp.eq.s32.totalorder %s18, 1
    %p141 = por %p139, %p140
    %p142 = scmp.ne.s32.totalorder %s133, %s134
    %p143 = scmp.eq.s32.totalorder %s18, 0
    %p144 = por %p142, %p143
    %p145 = scmp.ne.s32.totalorder %s133, %s134
    %p146 = scmp.eq.s32.totalorder %s19, 1
    %p147 = por %p145, %p146
    %p149 = scmp.ne.s32.totalorder %s134, %s148
    %p150 = scmp.eq.s32.totalorder %s19, 0
    %p151 = por %p149, %p150
    %s153 = sadd.s32 %s152, 1
    %p156 = scmp.eq.s32.totalorder %s13, 1
    %p157 = scmp.ne.s32.totalorder %s152, %s154
    %p158 = scmp.eq.s32.totalorder %s13, 0
    %p159 = por %p157, %p158
    %p160 = scmp.ne.s32.totalorder %s152, %s154
    %p161 = scmp.eq.s32.totalorder %s18, 1
    %p162 = por %p160, %p161
    %p163 = scmp.ne.s32.totalorder %s154, %s155
    %p164 = scmp.eq.s32.totalorder %s18, 0
    %p165 = por %p163, %p164
    %p166 = scmp.ne.s32.totalorder %s154, %s155
    %p167 = scmp.eq.s32.totalorder %s19, 1
    %p168 = por %p166, %p167
    %p170 = scmp.ne.s32.totalorder %s155, %s169
    %p171 = scmp.eq.s32.totalorder %s19, 0
    %p172 = por %p170, %p171
    %s174 = sadd.s32 %s173, 1
    %p177 = scmp.eq.s32.totalorder %s13, 1
    %p178 = scmp.ne.s32.totalorder %s173, %s175
    %p179 = scmp.eq.s32.totalorder %s13, 0
    %p180 = por %p178, %p179
    %p181 = scmp.ne.s32.totalorder %s173, %s175
    %p182 = scmp.eq.s32.totalorder %s18, 1
    %p183 = por %p181, %p182
    %p184 = scmp.ne.s32.totalorder %s175, %s176
    %p185 = scmp.eq.s32.totalorder %s18, 0
    %p186 = por %p184, %p185
    %p187 = scmp.ne.s32.totalorder %s175, %s176
    %p188 = scmp.eq.s32.totalorder %s19, 1
    %p189 = por %p187, %p188
    %p191 = scmp.ne.s32.totalorder %s176, %s190
    %p192 = scmp.eq.s32.totalorder %s19, 0
    %p193 = por %p191, %p192
    %s194 = ssub.s32 %s20, %s32
    %s195 = ssub.s32 %s21, %s28
    %s196 = sor.u32 %s194, %s195
    %p197 = scmp.eq.s32.totalorder %s196, 0
    %s199 = sadd.s32 %s198, 1
    %s200 = scalar_select %p197, %s198, %s199
    %p203 = pneg %p197
    %p204 = scmp.eq.s32.totalorder %s13, 1
    %p205 = por %p203, %p204
    %p206 = scmp.ne.s32.totalorder %s198, %s201
    %p207 = scmp.eq.s32.totalorder %s13, 0
    %p208 = por %p206, %p207
    %p209 = scmp.ne.s32.totalorder %s198, %s201
    %p210 = scmp.eq.s32.totalorder %s18, 1
    %p211 = por %p209, %p210
    %p212 = scmp.ne.s32.totalorder %s201, %s202
    %p213 = scmp.eq.s32.totalorder %s18, 0
    %p214 = por %p212, %p213
    %p215 = scmp.ne.s32.totalorder %s201, %s202
    %p216 = scmp.eq.s32.totalorder %s19, 1
    %p217 = por %p215, %p216
    %p219 = scmp.ne.s32.totalorder %s202, %s218
    %p220 = scmp.eq.s32.totalorder %s19, 0
    %p221 = por %p219, %p220
    %p222 = scmp.le.s32.totalorder 1, %s13
    %p223 = scmp.lt.s32.totalorder %s13, 3
    %p224 = pnand %p222, %p223
    %p225 = pneg %p224
    // Predicated region
    $region9: #{dgcnn_semseg_forward.7} parent=5 // pred_check
      _
    $region10: #{dgcnn_semseg_forward.7} parent=5 // pred_check_branch
      %227 = sbr.rel (%p224) target = $region12
    $region11: #{dgcnn_semseg_forward.7} parent=5 // pred_region
      %s228 = ssub.s32 %s13, 1
      // Predicated region
      $region13: #{dgcnn_semseg_forward.7} parent=11 // pred_check
        %p229 = pneg %p102
      $region14: #{dgcnn_semseg_forward.7} parent=11 // pred_check_branch
        %231 = sbr.rel (%p229) target = $region16
      $region15: #{dgcnn_semseg_forward.7} parent=11 // pred_region
        _
      $region16: #{dgcnn_semseg_forward.7} parent=11 // pred_fallthru
        _
      // Predicated region
      $region17: #{dgcnn_semseg_forward.7} parent=11 // pred_check
        %p232 = pneg %p123
      $region18: #{dgcnn_semseg_forward.7} parent=11 // pred_check_branch
        %234 = sbr.rel (%p232) target = $region20
      $region19: #{dgcnn_semseg_forward.7} parent=11 // pred_region
        _
      $region20: #{dgcnn_semseg_forward.7} parent=11 // pred_fallthru
        _
      // Predicated region
      $region21: #{dgcnn_semseg_forward.7} parent=11 // pred_check
        %p235 = pneg %p144
      $region22: #{dgcnn_semseg_forward.7} parent=11 // pred_check_branch
        %237 = sbr.rel (%p235) target = $region24
      $region23: #{dgcnn_semseg_forward.7} parent=11 // pred_region
        _
      $region24: #{dgcnn_semseg_forward.7} parent=11 // pred_fallthru
        _
      // Predicated region
      $region25: #{dgcnn_semseg_forward.7} parent=11 // pred_check
        %p238 = pneg %p165
      $region26: #{dgcnn_semseg_forward.7} parent=11 // pred_check_branch
        %240 = sbr.rel (%p238) target = $region28
      $region27: #{dgcnn_semseg_forward.7} parent=11 // pred_region
        _
      $region28: #{dgcnn_semseg_forward.7} parent=11 // pred_fallthru
        _
      // Predicated region
      $region29: #{dgcnn_semseg_forward.7} parent=11 // pred_check
        %p241 = pneg %p186
      $region30: #{dgcnn_semseg_forward.7} parent=11 // pred_check_branch
        %243 = sbr.rel (%p241) target = $region32
      $region31: #{dgcnn_semseg_forward.7} parent=11 // pred_region
        _
      $region32: #{dgcnn_semseg_forward.7} parent=11 // pred_fallthru
        _
    $region12: #{dgcnn_semseg_forward.7} parent=5 // pred_fallthru
      _
    %p244 = scmp.lt.s32.totalorder %s13, 2
    // Predicated region
    $region33: #{dgcnn_semseg_forward.7} parent=5 // pred_check
      %p245 = pneg %p244
    $region34: #{dgcnn_semseg_forward.7} parent=5 // pred_check_branch
      %247 = sbr.rel (%p245) target = $region36
    $region35: #{dgcnn_semseg_forward.7} parent=5 // pred_region
      // Predicated region
      $region37: #{dgcnn_semseg_forward.7} parent=35 // pred_check
        %p248 = pneg %p47
      $region38: #{dgcnn_semseg_forward.7} parent=35 // pred_check_branch
        %250 = sbr.rel (%p248) target = $region40
      $region39: #{dgcnn_semseg_forward.7} parent=35 // pred_region
        %s251 = smul.u32 2, %s21
        %p252 = scmp.lt.s32.totalorder %s20, 1
        %s253 = scalar_select %p252, %s20, 1
        %p254 = scmp.lt.s32.totalorder %s251, 1
        %s255 = scalar_select %p254, %s251, 1
        %s256 = smul.addr %s253, 8
        %s257 = sadd.s32 %s255, %s256
        %s258 = smul.addr %s257, 8
        %s259 = scalar_lea.vmem %s0, %s258
        %s260 = smul.u32 2, %s21
      $region40: #{dgcnn_semseg_forward.7} parent=35 // pred_fallthru
        _
      // Predicated region
      $region41: #{dgcnn_semseg_forward.7} parent=35 // pred_check
        %p261 = pneg %p75
      $region42: #{dgcnn_semseg_forward.7} parent=35 // pred_check_branch
        %263 = sbr.rel (%p261) target = $region44
      $region43: #{dgcnn_semseg_forward.7} parent=35 // pred_region
        %s264 = smul.u32 2, %s21
        %p265 = scmp.lt.s32.totalorder %s20, 1
        %s266 = scalar_select %p265, %s20, 1
        %p267 = scmp.lt.s32.totalorder %s264, 1
        %s268 = scalar_select %p267, %s264, 1
        %s269 = smul.addr %s266, 2
        %s270 = sadd.s32 %s268, %s269
        %s271 = smul.addr %s270, 8
        %s272 = scalar_lea.vmem %s1, %s271
        %s273 = smul.u32 2, %s21
      $region44: #{dgcnn_semseg_forward.7} parent=35 // pred_fallthru
        _
    $region36: #{dgcnn_semseg_forward.7} parent=5 // pred_fallthru
      _
    %p274 = scmp.le.s32.totalorder 1, %s13
    %p275 = scmp.lt.s32.totalorder %s13, 3
    %p276 = pnand %p274, %p275
    %p277 = pneg %p276
    // Predicated region
    $region45: #{dgcnn_semseg_forward.7} parent=5 // pred_check
      _
    $region46: #{dgcnn_semseg_forward.7} parent=5 // pred_check_branch
      %279 = sbr.rel (%p276) target = $region48
    $region47: #{dgcnn_semseg_forward.7} parent=5 // pred_region
      %s280 = ssub.s32 %s13, 1
      %s281 = smul.u32 2, %s23
      %p282 = scmp.lt.s32.totalorder %s22, 1
      %s283 = scalar_select %p282, %s22, 1
      %p284 = scmp.lt.s32.totalorder %s281, 1
      %s285 = scalar_select %p284, %s281, 1
      %s286 = smul.addr %s283, 8
      %s287 = sadd.s32 %s285, %s286
      %s288 = smul.addr %s287, 8
      %s289 = scalar_lea.vmem %s0, %s288
      %p290 = pneg %p53
      %p291 = pneg %p50
      %s292 = smul.u32 2, %s23
      %p293 = scmp.lt.s32.totalorder %s22, 1
      %s294 = scalar_select %p293, %s22, 1
      %p295 = scmp.lt.s32.totalorder %s292, 1
      %s296 = scalar_select %p295, %s292, 1
      %s297 = smul.addr %s294, 2
      %s298 = sadd.s32 %s296, %s297
      %s299 = smul.addr %s298, 8
      %s300 = scalar_lea.vmem %s1, %s299
      %p301 = pneg %p81
      %p302 = pneg %p78
      %p303 = pneg %p102
      %p304 = pneg %p99
      %p305 = pneg %p123
      %p306 = pneg %p120
      %p307 = pneg %p144
      %p308 = pneg %p141
      %p309 = pneg %p165
      %p310 = pneg %p162
      %p311 = pneg %p186
      %p312 = pneg %p183
      %p313 = pneg %p214
      %p314 = pneg %p211
      %s315 = smul.u32 2, %s23
      %p316 = scmp.lt.s32.totalorder %s22, 1
      %s317 = scalar_select %p316, %s22, 1
      %p318 = scmp.lt.s32.totalorder %s315, 1
      %s319 = scalar_select %p318, %s315, 1
      %s320 = smul.addr %s317, 2
      %s321 = sadd.s32 %s319, %s320
      %s322 = smul.addr %s321, 8
      %s323 = scalar_lea.vmem %s7, %s322
      %s324 = smul.u32 2, %s23
      %p325 = scmp.lt.s32.totalorder %s22, 1
      %s326 = scalar_select %p325, %s22, 1
      %p327 = scmp.lt.s32.totalorder %s324, 1
      %s328 = scalar_select %p327, %s324, 1
      %s329 = smul.addr %s326, 8
      %s330 = sadd.s32 %s328, %s329
      %s331 = smul.addr %s330, 8
      %s332 = scalar_lea.vmem %s0, %s331
      %s333 = smul.u32 2, %s23
      %s334 = smul.u32 2, %s23
      %p335 = scmp.lt.s32.totalorder %s22, 1
      %s336 = scalar_select %p335, %s22, 1
      %p337 = scmp.lt.s32.totalorder %s334, 1
      %s338 = scalar_select %p337, %s334, 1
      %s339 = smul.addr %s336, 2
      %s340 = sadd.s32 %s338, %s339
      %s341 = smul.addr %s340, 8
      %s342 = scalar_lea.vmem %s1, %s341
      %s343 = smul.u32 2, %s23
      %s344 = smul.u32 2, %s23
      %p345 = scmp.lt.s32.totalorder %s22, 1
      %s346 = scalar_select %p345, %s22, 1
      %p347 = scmp.lt.s32.totalorder %s344, 1
      %s348 = scalar_select %p347, %s344, 1
      %s349 = smul.addr %s346, 2
      %s350 = sadd.s32 %s348, %s349
      %s351 = smul.addr %s350, 8
      %s352 = scalar_lea.vmem %s7, %s351
      %s353 = smul.u32 2, %s23
      %v354 = vld [vmem:[%s342] sm:$0xff]
      %v355 = vld [vmem:[%s342 + $0x8] sm:$0xff]
      %v356 = vld [vmem:[%s3] sm:$0xff]
      %v357 = vld [vmem:[%s3 + $0x8] sm:$0x1]
      %v358 = vld [vmem:[%s4] sm:$0x1]
      %v360 = vperm.slane %v358, 0
      %vm362 = vcmask 72704
      %v364 = vsel %vm362, %v354, 0
      %v367 = vsel %vm362, %v355, 0
      %vm369 = vcmask 1040384
      %v371 = vsel %vm369, %v357, 0
      %373 = vmatpush.msra.mxu0 0.0
      %374 = vmatpush.msra.mxu0 0.0
      %375 = vmatpush.msra.mxu0 0.0
      %376 = vmatpush.msra.mxu0 0.0
      %377 = vmatpush.msra.mxu0 0.0
      %378 = vmatpush.msra.mxu0 0.0
      %379 = vmatpush.msra.mxu0 0.0
      %380 = vmatpush.msra.mxu0 0.0
      %381 = vmatpush.msra.mxu0 0.0
      %382 = vmatpush.msra.mxu0 0.0
      %383 = vmatpush.msra.mxu0 0.0
      %384 = vmatpush.msra.mxu0 0.0
      %385 = vmatpush.msra.mxu0 0.0
      %386 = vmatpush.msra.mxu0 0.0
      %387 = vmatpush.msra.mxu0 %v371
      %388 = vmatpush.msra.mxu0 %v356
      %389 = vmatmul.f32.gmra.mxu0 %v364
      %v390 = vpop.f32.mrf.mxu0
      %v391 = vadd.f32 %v360, %v390
      %392 = vmatmul.f32.gmra.mxu0 %v367
      %v393 = vpop.f32.mrf.mxu0
      %v394 = vadd.f32 %v360, %v393
      %395 = vdwg.mxu0
      %v396 = vld [vmem:[%s332] sm:$0xff]
      %v397 = vld [vmem:[%s332 + $0x8] sm:$0xff]
      %v398 = vld [vmem:[%s2] sm:$0xff]
      %v399 = vld [vmem:[%s2 + $0x8] sm:$0x1]
      %v401 = vsel %vm362, %v396, 0
      %v404 = vsel %vm362, %v397, 0
      %v407 = vsel %vm369, %v399, 0
      %409 = vmatpush.msra.mxu0 0.0
      %410 = vmatpush.msra.mxu0 0.0
      %411 = vmatpush.msra.mxu0 0.0
      %412 = vmatpush.msra.mxu0 0.0
      %413 = vmatpush.msra.mxu0 0.0
      %414 = vmatpush.msra.mxu0 0.0
      %415 = vmatpush.msra.mxu0 0.0
      %416 = vmatpush.msra.mxu0 0.0
      %417 = vmatpush.msra.mxu0 0.0
      %418 = vmatpush.msra.mxu0 0.0
      %419 = vmatpush.msra.mxu0 0.0
      %420 = vmatpush.msra.mxu0 0.0
      %421 = vmatpush.msra.mxu0 0.0
      %422 = vmatpush.msra.mxu0 0.0
      %423 = vmatpush.msra.mxu0 %v407
      %424 = vmatpush.msra.mxu0 %v398
      %425 = vmatmul.f32.gmra.mxu0 %v401
      %v426 = vpop.f32.mrf.mxu0
      %v427 = vadd.f32 %v391, %v426
      %428 = vmatmul.f32.gmra.mxu0 %v404
      %v429 = vpop.f32.mrf.mxu0
      %v430 = vadd.f32 %v394, %v429
      %431 = vdwg.mxu0
      %vm432 = vcmp.gt.f32.partialorder %v427, 0.0
      %vm433 = vcmp.gt.f32.partialorder %v430, 0.0
      %v434 = vmul.f32 %v427, 0.2
      %v435 = vmul.f32 %v430, 0.2
      %v436 = vsel %vm432, %v427, %v434
      %v437 = vsel %vm433, %v430, %v435
      %v438 = vld [vmem:[%s5] sm:$0xff]
      %v439 = vld [vmem:[%s5 + $0x8] sm:$0xff]
      %v440 = vld [vmem:[%s5 + $0x10] sm:$0xff]
      %v441 = vld [vmem:[%s5 + $0x18] sm:$0xff]
      %v442 = vld [vmem:[%s5 + $0x20] sm:$0xff]
      %v443 = vld [vmem:[%s5 + $0x28] sm:$0xff]
      %v444 = vld [vmem:[%s5 + $0x30] sm:$0xff]
      %v445 = vld [vmem:[%s5 + $0x38] sm:$0xff]
      %v446 = vld [vmem:[%s6] sm:$0x1]
      %v448 = vperm.slane %v446, 0
      %vm450 = vcmask 523264
      %v452 = vsel %vm450, %v436, 0
      %v455 = vsel %vm450, %v437, 0
      %457 = vmatpush.msra.mxu0 0.0
      %458 = vmatpush.msra.mxu0 0.0
      %459 = vmatpush.msra.mxu0 0.0
      %460 = vmatpush.msra.mxu0 0.0
      %461 = vmatpush.msra.mxu0 0.0
      %462 = vmatpush.msra.mxu0 0.0
      %463 = vmatpush.msra.mxu0 0.0
      %464 = vmatpush.msra.mxu0 0.0
      %465 = vmatpush.msra.mxu0 %v445
      %466 = vmatpush.msra.mxu0 %v444
      %467 = vmatpush.msra.mxu0 %v443
      %468 = vmatpush.msra.mxu0 %v442
      %469 = vmatpush.msra.mxu0 %v441
      %470 = vmatpush.msra.mxu0 %v440
      %471 = vmatpush.msra.mxu0 %v439
      %472 = vmatpush.msra.mxu0 %v438
      %473 = vmatmul.f32.gmra.mxu0 %v452
      %v474 = vpop.f32.mrf.mxu0
      %v475 = vadd.f32 %v448, %v474
      %476 = vmatmul.f32.gmra.mxu0 %v455
      %v477 = vpop.f32.mrf.mxu0
      %v478 = vadd.f32 %v448, %v477
      %479 = vdwg.mxu0
      %vm480 = vcmp.gt.f32.partialorder %v475, 0.0
      %vm481 = vcmp.gt.f32.partialorder %v478, 0.0
      %v482 = vmul.f32 %v475, 0.2
      %v483 = vmul.f32 %v478, 0.2
      %v484 = vsel %vm480, %v475, %v482
      %v485 = vsel %vm481, %v478, %v483
      %s486 = scalar_lea.vmem %s332, 16
      %v487 = vld [vmem:[%s486] sm:$0xff]
      %v488 = vld [vmem:[%s486 + $0x8] sm:$0xff]
      %v490 = vsel %vm362, %v487, 0
      %v493 = vsel %vm362, %v488, 0
      %495 = vmatpush.msra.mxu0 0.0
      %496 = vmatpush.msra.mxu0 0.0
      %497 = vmatpush.msra.mxu0 0.0
      %498 = vmatpush.msra.mxu0 0.0
      %499 = vmatpush.msra.mxu0 0.0
      %500 = vmatpush.msra.mxu0 0.0
      %501 = vmatpush.msra.mxu0 0.0
      %502 = vmatpush.msra.mxu0 0.0
      %503 = vmatpush.msra.mxu0 0.0
      %504 = vmatpush.msra.mxu0 0.0
      %505 = vmatpush.msra.mxu0 0.0
      %506 = vmatpush.msra.mxu0 0.0
      %507 = vmatpush.msra.mxu0 0.0
      %508 = vmatpush.msra.mxu0 0.0
      %509 = vmatpush.msra.mxu0 %v407
      %510 = vmatpush.msra.mxu0 %v398
      %511 = vmatmul.f32.gmra.mxu0 %v490
      %v512 = vpop.f32.mrf.mxu0
      %v513 = vadd.f32 %v391, %v512
      %514 = vmatmul.f32.gmra.mxu0 %v493
      %v515 = vpop.f32.mrf.mxu0
      %v516 = vadd.f32 %v394, %v515
      %517 = vdwg.mxu0
      %vm518 = vcmp.gt.f32.partialorder %v513, 0.0
      %vm519 = vcmp.gt.f32.partialorder %v516, 0.0
      %v520 = vmul.f32 %v513, 0.2
      %v521 = vmul.f32 %v516, 0.2
      %v522 = vsel %vm518, %v513, %v520
      %v523 = vsel %vm519, %v516, %v521
      %v525 = vsel %vm450, %v522, 0
      %v528 = vsel %vm450, %v523, 0
      %530 = vmatpush.msra.mxu0 0.0
      %531 = vmatpush.msra.mxu0 0.0
      %532 = vmatpush.msra.mxu0 0.0
      %533 = vmatpush.msra.mxu0 0.0
      %534 = vmatpush.msra.mxu0 0.0
      %535 = vmatpush.msra.mxu0 0.0
      %536 = vmatpush.msra.mxu0 0.0
      %537 = vmatpush.msra.mxu0 0.0
      %538 = vmatpush.msra.mxu0 %v445
      %539 = vmatpush.msra.mxu0 %v444
      %540 = vmatpush.msra.mxu0 %v443
      %541 = vmatpush.msra.mxu0 %v442
      %542 = vmatpush.msra.mxu0 %v441
      %543 = vmatpush.msra.mxu0 %v440
      %544 = vmatpush.msra.mxu0 %v439
      %545 = vmatpush.msra.mxu0 %v438
      %546 = vmatmul.f32.gmra.mxu0 %v525
      %v547 = vpop.f32.mrf.mxu0
      %v548 = vadd.f32 %v448, %v547
      %549 = vmatmul.f32.gmra.mxu0 %v528
      %v550 = vpop.f32.mrf.mxu0
      %v551 = vadd.f32 %v448, %v550
      %552 = vdwg.mxu0
      %vm553 = vcmp.gt.f32.partialorder %v548, 0.0
      %vm554 = vcmp.gt.f32.partialorder %v551, 0.0
      %v555 = vmul.f32 %v548, 0.2
      %v556 = vmul.f32 %v551, 0.2
      %v557 = vsel %vm553, %v548, %v555
      %v558 = vsel %vm554, %v551, %v556
      %v559 = vmax.f32 %v484, %v557
      %v560 = vmax.f32 %v485, %v558
      %s561 = scalar_lea.vmem %s332, 32
      %v562 = vld [vmem:[%s561] sm:$0xff]
      %v563 = vld [vmem:[%s561 + $0x8] sm:$0xff]
      %v565 = vsel %vm362, %v562, 0
      %v568 = vsel %vm362, %v563, 0
      %570 = vmatpush.msra.mxu0 0.0
      %571 = vmatpush.msra.mxu0 0.0
      %572 = vmatpush.msra.mxu0 0.0
      %573 = vmatpush.msra.mxu0 0.0
      %574 = vmatpush.msra.mxu0 0.0
      %575 = vmatpush.msra.mxu0 0.0
      %576 = vmatpush.msra.mxu0 0.0
      %577 = vmatpush.msra.mxu0 0.0
      %578 = vmatpush.msra.mxu0 0.0
      %579 = vmatpush.msra.mxu0 0.0
      %580 = vmatpush.msra.mxu0 0.0
      %581 = vmatpush.msra.mxu0 0.0
      %582 = vmatpush.msra.mxu0 0.0
      %583 = vmatpush.msra.mxu0 0.0
      %584 = vmatpush.msra.mxu0 %v407
      %585 = vmatpush.msra.mxu0 %v398
      %586 = vmatmul.f32.gmra.mxu0 %v565
      %v587 = vpop.f32.mrf.mxu0
      %v588 = vadd.f32 %v391, %v587
      %589 = vmatmul.f32.gmra.mxu0 %v568
      %v590 = vpop.f32.mrf.mxu0
      %v591 = vadd.f32 %v394, %v590
      %592 = vdwg.mxu0
      %vm593 = vcmp.gt.f32.partialorder %v588, 0.0
      %vm594 = vcmp.gt.f32.partialorder %v591, 0.0
      %v595 = vmul.f32 %v588, 0.2
      %v596 = vmul.f32 %v591, 0.2
      %v597 = vsel %vm593, %v588, %v595
      %v598 = vsel %vm594, %v591, %v596
      %v600 = vsel %vm450, %v597, 0
      %v603 = vsel %vm450, %v598, 0
      %605 = vmatpush.msra.mxu0 0.0
      %606 = vmatpush.msra.mxu0 0.0
      %607 = vmatpush.msra.mxu0 0.0
      %608 = vmatpush.msra.mxu0 0.0
      %609 = vmatpush.msra.mxu0 0.0
      %610 = vmatpush.msra.mxu0 0.0
      %611 = vmatpush.msra.mxu0 0.0
      %612 = vmatpush.msra.mxu0 0.0
      %613 = vmatpush.msra.mxu0 %v445
      %614 = vmatpush.msra.mxu0 %v444
      %615 = vmatpush.msra.mxu0 %v443
      %616 = vmatpush.msra.mxu0 %v442
      %617 = vmatpush.msra.mxu0 %v441
      %618 = vmatpush.msra.mxu0 %v440
      %619 = vmatpush.msra.mxu0 %v439
      %620 = vmatpush.msra.mxu0 %v438
      %621 = vmatmul.f32.gmra.mxu0 %v600
      %v622 = vpop.f32.mrf.mxu0
      %v623 = vadd.f32 %v448, %v622
      %624 = vmatmul.f32.gmra.mxu0 %v603
      %v625 = vpop.f32.mrf.mxu0
      %v626 = vadd.f32 %v448, %v625
      %627 = vdwg.mxu0
      %vm628 = vcmp.gt.f32.partialorder %v623, 0.0
      %vm629 = vcmp.gt.f32.partialorder %v626, 0.0
      %v630 = vmul.f32 %v623, 0.2
      %v631 = vmul.f32 %v626, 0.2
      %v632 = vsel %vm628, %v623, %v630
      %v633 = vsel %vm629, %v626, %v631
      %v634 = vmax.f32 %v559, %v632
      %v635 = vmax.f32 %v560, %v633
      %s636 = scalar_lea.vmem %s332, 48
      %v637 = vld [vmem:[%s636] sm:$0xff]
      %v638 = vld [vmem:[%s636 + $0x8] sm:$0xff]
      %v640 = vsel %vm362, %v637, 0
      %v643 = vsel %vm362, %v638, 0
      %645 = vmatpush.msra.mxu0 0.0
      %646 = vmatpush.msra.mxu0 0.0
      %647 = vmatpush.msra.mxu0 0.0
      %648 = vmatpush.msra.mxu0 0.0
      %649 = vmatpush.msra.mxu0 0.0
      %650 = vmatpush.msra.mxu0 0.0
      %651 = vmatpush.msra.mxu0 0.0
      %652 = vmatpush.msra.mxu0 0.0
      %653 = vmatpush.msra.mxu0 0.0
      %654 = vmatpush.msra.mxu0 0.0
      %655 = vmatpush.msra.mxu0 0.0
      %656 = vmatpush.msra.mxu0 0.0
      %657 = vmatpush.msra.mxu0 0.0
      %658 = vmatpush.msra.mxu0 0.0
      %659 = vmatpush.msra.mxu0 %v407
      %660 = vmatpush.msra.mxu0 %v398
      %661 = vmatmul.f32.gmra.mxu0 %v640
      %v662 = vpop.f32.mrf.mxu0
      %v663 = vadd.f32 %v391, %v662
      %664 = vmatmul.f32.gmra.mxu0 %v643
      %v665 = vpop.f32.mrf.mxu0
      %v666 = vadd.f32 %v394, %v665
      %667 = vdwg.mxu0
      %vm668 = vcmp.gt.f32.partialorder %v663, 0.0
      %vm669 = vcmp.gt.f32.partialorder %v666, 0.0
      %v670 = vmul.f32 %v663, 0.2
      %v671 = vmul.f32 %v666, 0.2
      %v672 = vsel %vm668, %v663, %v670
      %v673 = vsel %vm669, %v666, %v671
      %v675 = vsel %vm450, %v672, 0
      %v678 = vsel %vm450, %v673, 0
      %680 = vmatpush.msra.mxu0 0.0
      %681 = vmatpush.msra.mxu0 0.0
      %682 = vmatpush.msra.mxu0 0.0
      %683 = vmatpush.msra.mxu0 0.0
      %684 = vmatpush.msra.mxu0 0.0
      %685 = vmatpush.msra.mxu0 0.0
      %686 = vmatpush.msra.mxu0 0.0
      %687 = vmatpush.msra.mxu0 0.0
      %688 = vmatpush.msra.mxu0 %v445
      %689 = vmatpush.msra.mxu0 %v444
      %690 = vmatpush.msra.mxu0 %v443
      %691 = vmatpush.msra.mxu0 %v442
      %692 = vmatpush.msra.mxu0 %v441
      %693 = vmatpush.msra.mxu0 %v440
      %694 = vmatpush.msra.mxu0 %v439
      %695 = vmatpush.msra.mxu0 %v438
      %696 = vmatmul.f32.gmra.mxu0 %v675
      %v697 = vpop.f32.mrf.mxu0
      %v698 = vadd.f32 %v448, %v697
      %699 = vmatmul.f32.gmra.mxu0 %v678
      %v700 = vpop.f32.mrf.mxu0
      %v701 = vadd.f32 %v448, %v700
      %702 = vdwg.mxu0
      %vm703 = vcmp.gt.f32.partialorder %v698, 0.0
      %vm704 = vcmp.gt.f32.partialorder %v701, 0.0
      %v705 = vmul.f32 %v698, 0.2
      %v706 = vmul.f32 %v701, 0.2
      %v707 = vsel %vm703, %v698, %v705
      %v708 = vsel %vm704, %v701, %v706
      %v709 = vmax.f32 %v634, %v707
      %v710 = vmax.f32 %v635, %v708
      %711 = vst.msk [vmem:[%s352] sm:$0xff] %vm450, %v709
      %712 = vst.msk [vmem:[%s352 + $0x8] sm:$0xff] %vm450, %v710
      %s713 = smul.u32 2, %s23
      %p714 = scmp.lt.s32.totalorder %s22, 1
      %s715 = scalar_select %p714, %s22, 1
      %p716 = scmp.lt.s32.totalorder %s713, 1
      %s717 = scalar_select %p716, %s713, 1
      %s718 = smul.addr %s715, 2
      %s719 = sadd.s32 %s717, %s718
      %s720 = smul.addr %s719, 8
      %s721 = scalar_lea.vmem %s7, %s720
      // Predicated region
      $region49: #{dgcnn_semseg_forward.7} parent=47 // pred_check
        %p722 = pneg %p211
      $region50: #{dgcnn_semseg_forward.7} parent=47 // pred_check_branch
        %724 = sbr.rel (%p722) target = $region52
      $region51: #{dgcnn_semseg_forward.7} parent=47 // pred_region
        %s725 = smul.u32 2, %s23
      $region52: #{dgcnn_semseg_forward.7} parent=47 // pred_fallthru
        _
    $region48: #{dgcnn_semseg_forward.7} parent=5 // pred_fallthru
      _
    %p726 = scmp.le.s32.totalorder 2, %s13
    // Predicated region
    $region53: #{dgcnn_semseg_forward.7} parent=5 // pred_check
      %p727 = pneg %p726
    $region54: #{dgcnn_semseg_forward.7} parent=5 // pred_check_branch
      %729 = sbr.rel (%p727) target = $region56
    $region55: #{dgcnn_semseg_forward.7} parent=5 // pred_region
      %s730 = ssub.s32 %s13, 2
      // Predicated region
      $region57: #{dgcnn_semseg_forward.7} parent=55 // pred_check
        %p731 = pneg %p217
      $region58: #{dgcnn_semseg_forward.7} parent=55 // pred_check_branch
        %733 = sbr.rel (%p731) target = $region60
      $region59: #{dgcnn_semseg_forward.7} parent=55 // pred_region
        %s734 = smul.u32 2, %s25
        %p735 = scmp.lt.s32.totalorder %s24, 1
        %s736 = scalar_select %p735, %s24, 1
        %p737 = scmp.lt.s32.totalorder %s734, 1
        %s738 = scalar_select %p737, %s734, 1
        %s739 = smul.addr %s736, 2
        %s740 = sadd.s32 %s738, %s739
        %s741 = smul.addr %s740, 8
        %s742 = scalar_lea.vmem %s7, %s741
      $region60: #{dgcnn_semseg_forward.7} parent=55 // pred_fallthru
        _
    $region56: #{dgcnn_semseg_forward.7} parent=5 // pred_fallthru
      _
  $region6: #{dgcnn_semseg_forward.7} parent=0 // loop_footer
    %s17 = sadd.s32 1, %s13
  $region7: #{dgcnn_semseg_forward.7} parent=0 // loop_footer_branch
    %12 = sbr.rel target = $region3
  $region8: #{dgcnn_semseg_forward.7} parent=0 // loop_exit
    _

// kernel: dgcnn_semseg_forward.6
$region0: #{dgcnn_semseg_forward.6}
  #allocation0 [shape = 'u32[]', space=smem, size = 0x4, offset = 0x4, fixed_abs, tag = 'smem constant byte address 0x4 - core index']
  #allocation1 [shape = 'u32[72,128]{1,0:T(1,128)}', space=vmem, size = 0x9000, scoped, tag = 'internal scratch']
  %s0 = inlined_call_operand.vmem [shape: f32[2,16,33], index: 0, kind: input, shape index: {}]
  %s1 = inlined_call_operand.vmem [shape: f32[2,33,16], index: 1, kind: input, shape index: {}]
  %s2 = inlined_call_operand.vmem [shape: f32[2,16,1], index: 2, kind: input, shape index: {}]
  %s3 = inlined_call_operand.vmem [shape: f32[2,1,16], index: 3, kind: input, shape index: {}]
  %s4 = inlined_call_operand.vmem [shape: f32[2,16,16], index: 4, kind: output, shape index: {}]
  %s5 = sld [smem:[#allocation0]]
  $region49: #{dgcnn_semseg_forward.6} parent=0
    _
  %s7 = ssub.s32 1, %s5
  %s8 = scalar_select 0, %s7, %s5
  loop: start=0, step=1, limit=4
  $region2: #{dgcnn_semseg_forward.6} parent=0 // loop_pre_header
    _
  $region3: #{dgcnn_semseg_forward.6} parent=0 // loop_header
    %s10 = sphi 0, %s14
    %p11 = scmp.ge.s32.totalorder %s10, 4
    %s17 = sphi 0, %s29
    %s18 = sphi 0, %s25
    %s19 = sphi 0, %s17
    %s20 = sphi 0, %s18
    %s21 = sphi 0, %s19
    %s22 = sphi 0, %s20
    %s34 = sphi 0, %s36
    %s37 = sphi 0, %s34
    %s38 = sphi 0, %s37
    %s54 = sphi 0, %s38
    %s60 = sphi 0, %s62
    %s63 = sphi 0, %s60
    %s64 = sphi 0, %s63
    %s80 = sphi 0, %s64
    %s88 = sphi 0, %s90
    %s91 = sphi 0, %s88
    %s92 = sphi 0, %s91
    %s108 = sphi 0, %s92
    %s114 = sphi 0, %s116
    %s117 = sphi 0, %s114
    %s118 = sphi 0, %s117
    %s134 = sphi 0, %s118
    %s142 = sphi 0, %s144
    %s145 = sphi 0, %s142
    %s146 = sphi 0, %s145
    %s162 = sphi 0, %s146
  $region4: #{dgcnn_semseg_forward.6} parent=0 // loop_header_branch
    %13 = sbr.rel (%p11) target = $region8
  $region5: #{dgcnn_semseg_forward.6} parent=0 // loop_body
    %s15 = ssub.s32 %s10, 1
    %s16 = ssub.s32 %s10, 2
    %s23 = sadd.s32 1, %s18
    %p24 = scmp.ge.s32.totalorder %s23, 1
    %s25 = scalar_select %p24, 0, %s23
    %s26 = sadd.s32 1, %s17
    %s27 = scalar_select %p24, %s26, %s17
    %p28 = scmp.ge.s32.totalorder %s27, 2
    %s29 = scalar_select %p28, 0, %s27
    %s30 = ssub.s32 %s17, %s29
    %s31 = ssub.s32 %s18, %s25
    %s32 = sor.u32 %s30, %s31
    %p33 = scmp.eq.s32.totalorder %s32, 0
    %s35 = sadd.s32 %s34, 1
    %s36 = scalar_select %p33, %s34, %s35
    %p39 = pneg %p33
    %p40 = scmp.eq.s32.totalorder %s10, 1
    %p41 = por %p39, %p40
    %p42 = scmp.ne.s32.totalorder %s34, %s37
    %p43 = scmp.eq.s32.totalorder %s10, 0
    %p44 = por %p42, %p43
    %p45 = scmp.ne.s32.totalorder %s34, %s37
    %p46 = scmp.eq.s32.totalorder %s15, 1
    %p47 = por %p45, %p46
    %p48 = scmp.ne.s32.totalorder %s37, %s38
    %p49 = scmp.eq.s32.totalorder %s15, 0
    %p50 = por %p48, %p49
    %p51 = scmp.ne.s32.totalorder %s37, %s38
    %p52 = scmp.eq.s32.totalorder %s16, 1
    %p53 = por %p51, %p52
    %p55 = scmp.ne.s32.totalorder %s38, %s54
    %p56 = scmp.eq.s32.totalorder %s16, 0
    %p57 = por %p55, %p56
    %s58 = ssub.s32 %s17, %s29
    %p59 = scmp.eq.s32.totalorder %s58, 0
    %s61 = sadd.s32 %s60, 1
    %s62 = scalar_select %p59, %s60, %s61
    %p65 = pneg %p59
    %p66 = scmp.eq.s32.totalorder %s10, 1
    %p67 = por %p65, %p66
    %p68 = scmp.ne.s32.totalorder %s60, %s63
    %p69 = scmp.eq.s32.totalorder %s10, 0
    %p70 = por %p68, %p69
    %p71 = scmp.ne.s32.totalorder %s60, %s63
    %p72 = scmp.eq.s32.totalorder %s15, 1
    %p73 = por %p71, %p72
    %p74 = scmp.ne.s32.totalorder %s63, %s64
    %p75 = scmp.eq.s32.totalorder %s15, 0
    %p76 = por %p74, %p75
    %p77 = scmp.ne.s32.totalorder %s63, %s64
    %p78 = scmp.eq.s32.totalorder %s16, 1
    %p79 = por %p77, %p78
    %p81 = scmp.ne.s32.totalorder %s64, %s80
    %p82 = scmp.eq.s32.totalorder %s16, 0
    %p83 = por %p81, %p82
    %s84 = ssub.s32 %s17, %s29
    %s85 = ssub.s32 %s18, %s25
    %s86 = sor.u32 %s84, %s85
    %p87 = scmp.eq.s32.totalorder %s86, 0
    %s89 = sadd.s32 %s88, 1
    %s90 = scalar_select %p87, %s88, %s89
    %p93 = pneg %p87
    %p94 = scmp.eq.s32.totalorder %s10, 1
    %p95 = por %p93, %p94
    %p96 = scmp.ne.s32.totalorder %s88, %s91
    %p97 = scmp.eq.s32.totalorder %s10, 0
    %p98 = por %p96, %p97
    %p99 = scmp.ne.s32.totalorder %s88, %s91
    %p100 = scmp.eq.s32.totalorder %s15, 1
    %p101 = por %p99, %p100
    %p102 = scmp.ne.s32.totalorder %s91, %s92
    %p103 = scmp.eq.s32.totalorder %s15, 0
    %p104 = por %p102, %p103
    %p105 = scmp.ne.s32.totalorder %s91, %s92
    %p106 = scmp.eq.s32.totalorder %s16, 1
    %p107 = por %p105, %p106
    %p109 = scmp.ne.s32.totalorder %s92, %s108
    %p110 = scmp.eq.s32.totalorder %s16, 0
    %p111 = por %p109, %p110
    %s112 = ssub.s32 %s17, %s29
    %p113 = scmp.eq.s32.totalorder %s112, 0
    %s115 = sadd.s32 %s114, 1
    %s116 = scalar_select %p113, %s114, %s115
    %p119 = pneg %p113
    %p120 = scmp.eq.s32.totalorder %s10, 1
    %p121 = por %p119, %p120
    %p122 = scmp.ne.s32.totalorder %s114, %s117
    %p123 = scmp.eq.s32.totalorder %s10, 0
    %p124 = por %p122, %p123
    %p125 = scmp.ne.s32.totalorder %s114, %s117
    %p126 = scmp.eq.s32.totalorder %s15, 1
    %p127 = por %p125, %p126
    %p128 = scmp.ne.s32.totalorder %s117, %s118
    %p129 = scmp.eq.s32.totalorder %s15, 0
    %p130 = por %p128, %p129
    %p131 = scmp.ne.s32.totalorder %s117, %s118
    %p132 = scmp.eq.s32.totalorder %s16, 1
    %p133 = por %p131, %p132
    %p135 = scmp.ne.s32.totalorder %s118, %s134
    %p136 = scmp.eq.s32.totalorder %s16, 0
    %p137 = por %p135, %p136
    %s138 = ssub.s32 %s17, %s29
    %s139 = ssub.s32 %s18, %s25
    %s140 = sor.u32 %s138, %s139
    %p141 = scmp.eq.s32.totalorder %s140, 0
    %s143 = sadd.s32 %s142, 1
    %s144 = scalar_select %p141, %s142, %s143
    %p147 = pneg %p141
    %p148 = scmp.eq.s32.totalorder %s10, 1
    %p149 = por %p147, %p148
    %p150 = scmp.ne.s32.totalorder %s142, %s145
    %p151 = scmp.eq.s32.totalorder %s10, 0
    %p152 = por %p150, %p151
    %p153 = scmp.ne.s32.totalorder %s142, %s145
    %p154 = scmp.eq.s32.totalorder %s15, 1
    %p155 = por %p153, %p154
    %p156 = scmp.ne.s32.totalorder %s145, %s146
    %p157 = scmp.eq.s32.totalorder %s15, 0
    %p158 = por %p156, %p157
    %p159 = scmp.ne.s32.totalorder %s145, %s146
    %p160 = scmp.eq.s32.totalorder %s16, 1
    %p161 = por %p159, %p160
    %p163 = scmp.ne.s32.totalorder %s146, %s162
    %p164 = scmp.eq.s32.totalorder %s16, 0
    %p165 = por %p163, %p164
    %p166 = scmp.le.s32.totalorder 1, %s10
    %p167 = scmp.lt.s32.totalorder %s10, 3
    %p168 = pnand %p166, %p167
    %p169 = pneg %p168
    // Predicated region
    $region9: #{dgcnn_semseg_forward.6} parent=5 // pred_check
      _
    $region10: #{dgcnn_semseg_forward.6} parent=5 // pred_check_branch
      %171 = sbr.rel (%p168) target = $region12
    $region11: #{dgcnn_semseg_forward.6} parent=5 // pred_region
      %s172 = ssub.s32 %s10, 1
    $region12: #{dgcnn_semseg_forward.6} parent=5 // pred_fallthru
      _
    %p173 = scmp.lt.s32.totalorder %s10, 2
    // Predicated region
    $region13: #{dgcnn_semseg_forward.6} parent=5 // pred_check
      %p174 = pneg %p173
    $region14: #{dgcnn_semseg_forward.6} parent=5 // pred_check_branch
      %176 = sbr.rel (%p174) target = $region16
    $region15: #{dgcnn_semseg_forward.6} parent=5 // pred_region
      // Predicated region
      $region17: #{dgcnn_semseg_forward.6} parent=15 // pred_check
        %p177 = pneg %p44
      $region18: #{dgcnn_semseg_forward.6} parent=15 // pred_check_branch
        %179 = sbr.rel (%p177) target = $region20
      $region19: #{dgcnn_semseg_forward.6} parent=15 // pred_region
        %s180 = smul.u32 2, %s18
        %p181 = scmp.lt.s32.totalorder %s17, 1
        %s182 = scalar_select %p181, %s17, 1
        %p183 = scmp.lt.s32.totalorder %s180, 1
        %s184 = scalar_select %p183, %s180, 1
        %s185 = smul.addr %s182, 2
        %s186 = sadd.s32 %s184, %s185
        %s187 = smul.addr %s186, 8
        %s188 = scalar_lea.vmem %s0, %s187
        %s189 = smul.u32 2, %s18
      $region20: #{dgcnn_semseg_forward.6} parent=15 // pred_fallthru
        _
      // Predicated region
      $region21: #{dgcnn_semseg_forward.6} parent=15 // pred_check
        %p190 = pneg %p70
      $region22: #{dgcnn_semseg_forward.6} parent=15 // pred_check_branch
        %192 = sbr.rel (%p190) target = $region24
      $region23: #{dgcnn_semseg_forward.6} parent=15 // pred_region
        %p193 = scmp.lt.s32.totalorder %s17, 1
        %s194 = scalar_select %p193, %s17, 1
        %s195 = smul.addr %s194, 5
        %s196 = smul.addr %s195, 8
        %s197 = scalar_lea.vmem %s1, %s196
      $region24: #{dgcnn_semseg_forward.6} parent=15 // pred_fallthru
        _
      // Predicated region
      $region25: #{dgcnn_semseg_forward.6} parent=15 // pred_check
        %p198 = pneg %p98
      $region26: #{dgcnn_semseg_forward.6} parent=15 // pred_check_branch
        %200 = sbr.rel (%p198) target = $region28
      $region27: #{dgcnn_semseg_forward.6} parent=15 // pred_region
        %s201 = smul.u32 2, %s18
        %p202 = scmp.lt.s32.totalorder %s17, 1
        %s203 = scalar_select %p202, %s17, 1
        %p204 = scmp.lt.s32.totalorder %s201, 1
        %s205 = scalar_select %p204, %s201, 1
        %s206 = smul.addr %s203, 2
        %s207 = sadd.s32 %s205, %s206
        %s208 = smul.addr %s207, 8
        %s209 = scalar_lea.vmem %s2, %s208
        %s210 = smul.u32 2, %s18
      $region28: #{dgcnn_semseg_forward.6} parent=15 // pred_fallthru
        _
      // Predicated region
      $region29: #{dgcnn_semseg_forward.6} parent=15 // pred_check
        %p211 = pneg %p124
      $region30: #{dgcnn_semseg_forward.6} parent=15 // pred_check_branch
        %213 = sbr.rel (%p211) target = $region32
      $region31: #{dgcnn_semseg_forward.6} parent=15 // pred_region
        %p214 = scmp.lt.s32.totalorder %s17, 1
        %s215 = scalar_select %p214, %s17, 1
        %s216 = scalar_lea.vmem %s3, %s215
      $region32: #{dgcnn_semseg_forward.6} parent=15 // pred_fallthru
        _
    $region16: #{dgcnn_semseg_forward.6} parent=5 // pred_fallthru
      _
    %p217 = scmp.le.s32.totalorder 1, %s10
    %p218 = scmp.lt.s32.totalorder %s10, 3
    %p219 = pnand %p217, %p218
    %p220 = pneg %p219
    // Predicated region
    $region33: #{dgcnn_semseg_forward.6} parent=5 // pred_check
      _
    $region34: #{dgcnn_semseg_forward.6} parent=5 // pred_check_branch
      %222 = sbr.rel (%p219) target = $region36
    $region35: #{dgcnn_semseg_forward.6} parent=5 // pred_region
      %s223 = ssub.s32 %s10, 1
      %s224 = smul.u32 2, %s20
      %p225 = scmp.lt.s32.totalorder %s19, 1
      %s226 = scalar_select %p225, %s19, 1
      %p227 = scmp.lt.s32.totalorder %s224, 1
      %s228 = scalar_select %p227, %s224, 1
      %s229 = smul.addr %s226, 2
      %s230 = sadd.s32 %s228, %s229
      %s231 = smul.addr %s230, 8
      %s232 = scalar_lea.vmem %s0, %s231
      %p233 = pneg %p50
      %p234 = pneg %p47
      %p235 = scmp.lt.s32.totalorder %s19, 1
      %s236 = scalar_select %p235, %s19, 1
      %s237 = smul.addr %s236, 5
      %s238 = smul.addr %s237, 8
      %s239 = scalar_lea.vmem %s1, %s238
      %p240 = pneg %p76
      %p241 = pneg %p73
      %s242 = smul.u32 2, %s20
      %p243 = scmp.lt.s32.totalorder %s19, 1
      %s244 = scalar_select %p243, %s19, 1
      %p245 = scmp.lt.s32.totalorder %s242, 1
      %s246 = scalar_select %p245, %s242, 1
      %s247 = smul.addr %s244, 2
      %s248 = sadd.s32 %s246, %s247
      %s249 = smul.addr %s248, 8
      %s250 = scalar_lea.vmem %s2, %s249
      %p251 = pneg %p104
      %p252 = pneg %p101
      %p253 = scmp.lt.s32.totalorder %s19, 1
      %s254 = scalar_select %p253, %s19, 1
      %s255 = scalar_lea.vmem %s3, %s254
      %p256 = pneg %p130
      %p257 = pneg %p127
      %p258 = pneg %p158
      %p259 = pneg %p155
      %s260 = smul.u32 2, %s20
      %p261 = scmp.lt.s32.totalorder %s19, 1
      %s262 = scalar_select %p261, %s19, 1
      %p263 = scmp.lt.s32.totalorder %s260, 1
      %s264 = scalar_select %p263, %s260, 1
      %s265 = smul.addr %s262, 2
      %s266 = sadd.s32 %s264, %s265
      %s267 = smul.addr %s266, 8
      %s268 = scalar_lea.vmem %s4, %s267
      %s269 = smul.u32 2, %s20
      %p270 = scmp.lt.s32.totalorder %s19, 1
      %s271 = scalar_select %p270, %s19, 1
      %p272 = scmp.lt.s32.totalorder %s269, 1
      %s273 = scalar_select %p272, %s269, 1
      %s274 = smul.addr %s271, 2
      %s275 = sadd.s32 %s273, %s274
      %s276 = smul.addr %s275, 8
      %s277 = scalar_lea.vmem %s0, %s276
      %s278 = smul.u32 2, %s20
      %p279 = scmp.lt.s32.totalorder %s19, 1
      %s280 = scalar_select %p279, %s19, 1
      %s281 = smul.addr %s280, 5
      %s282 = smul.addr %s281, 8
      %s283 = scalar_lea.vmem %s1, %s282
      %s284 = smul.u32 2, %s20
      %p285 = scmp.lt.s32.totalorder %s19, 1
      %s286 = scalar_select %p285, %s19, 1
      %p287 = scmp.lt.s32.totalorder %s284, 1
      %s288 = scalar_select %p287, %s284, 1
      %s289 = smul.addr %s286, 2
      %s290 = sadd.s32 %s288, %s289
      %s291 = smul.addr %s290, 8
      %s292 = scalar_lea.vmem %s2, %s291
      %s293 = smul.u32 2, %s20
      %p294 = scmp.lt.s32.totalorder %s19, 1
      %s295 = scalar_select %p294, %s19, 1
      %s296 = scalar_lea.vmem %s3, %s295
      %s297 = smul.u32 2, %s20
      %p298 = scmp.lt.s32.totalorder %s19, 1
      %s299 = scalar_select %p298, %s19, 1
      %p300 = scmp.lt.s32.totalorder %s297, 1
      %s301 = scalar_select %p300, %s297, 1
      %s302 = smul.addr %s299, 2
      %s303 = sadd.s32 %s301, %s302
      %s304 = smul.addr %s303, 8
      %s305 = scalar_lea.vmem %s4, %s304
      %s306 = smul.u32 2, %s20
      %v307 = vld [vmem:[%s277] sm:$0xff]
      %v308 = vld [vmem:[%s277 + $0x8] sm:$0xff]
      %v309 = vld [vmem:[%s283] sm:$0xff]
      %v310 = vld [vmem:[%s283 + $0x8] sm:$0xff]
      %v311 = vld [vmem:[%s283 + $0x10] sm:$0xff]
      %v312 = vld [vmem:[%s283 + $0x18] sm:$0xff]
      %v313 = vld [vmem:[%s283 + $0x20] sm:$0x1]
      %vm314 = vcmask 269312
      %v316 = vsel %vm314, %v307, 0
      %v319 = vsel %vm314, %v308, 0
      %vm321 = vcmask 1040384
      %v323 = vsel %vm321, %v313, 0
      %325 = vmatpush.msra.mxu0 0.0
      %326 = vmatpush.msra.mxu0 0.0
      %327 = vmatpush.msra.mxu0 0.0
      %328 = vmatpush.msra.mxu0 0.0
      %329 = vmatpush.msra.mxu0 0.0
      %330 = vmatpush.msra.mxu0 0.0
      %331 = vmatpush.msra.mxu0 0.0
      %332 = vmatpush.msra.mxu0 0.0
      %333 = vmatpush.msra.mxu0 0.0
      %334 = vmatpush.msra.mxu0 0.0
      %335 = vmatpush.msra.mxu0 0.0
      %336 = vmatpush.msra.mxu0 %v323
      %337 = vmatpush.msra.mxu0 %v312
      %338 = vmatpush.msra.mxu0 %v311
      %339 = vmatpush.msra.mxu0 %v310
      %340 = vmatpush.msra.mxu0 %v309
      %341 = vmatmul.f32.gmra.mxu0 %v316
      %v342 = vpop.f32.mrf.mxu0
      %v343 = vadd.f32 0.0, %v342
      %344 = vmatmul.f32.gmra.mxu0 %v319
      %v345 = vpop.f32.mrf.mxu0
      %v346 = vadd.f32 0.0, %v345
      %347 = vdwg.mxu0
      %v348 = vmul.f32 %v343, 2.0
      %v349 = vmul.f32 %v346, 2.0
      %v350 = vld [vmem:[%s292] sm:$0xff]
      %v351 = vld [vmem:[%s292 + $0x8] sm:$0xff]
      %353 = vset.pattern.permute.xlu0 0
      %354 = vperm.xlu0 %353, %v350
      %v355 = vpop.permute.xlu0 %354
      %358 = vset.pattern.permute.xlu0 0
      %359 = vperm.xlu0 %358, %v351
      %v360 = vpop.permute.xlu0 %359
      %v362 = vsub.f32 %v348, %v355
      %v363 = vsub.f32 %v349, %v360
      %v364 = vld [vmem:[%s296] sm:$0x1]
      %v366 = vperm.slane %v364, 0
      %v368 = vsub.f32 %v362, %v366
      %v369 = vsub.f32 %v363, %v366
      %vm370 = vcmask 130048
      %371 = vst.msk [vmem:[%s305] sm:$0xff] %vm370, %v368
      %372 = vst.msk [vmem:[%s305 + $0x8] sm:$0xff] %vm370, %v369
      %s373 = smul.u32 2, %s20
      %p374 = scmp.lt.s32.totalorder %s19, 1
      %s375 = scalar_select %p374, %s19, 1
      %p376 = scmp.lt.s32.totalorder %s373, 1
      %s377 = scalar_select %p376, %s373, 1
      %s378 = smul.addr %s375, 2
      %s379 = sadd.s32 %s377, %s378
      %s380 = smul.addr %s379, 8
      %s381 = scalar_lea.vmem %s4, %s380
      // Predicated region
      $region37: #{dgcnn_semseg_forward.6} parent=35 // pred_check
        %p382 = pneg %p155
      $region38: #{dgcnn_semseg_forward.6} parent=35 // pred_check_branch
        %384 = sbr.rel (%p382) target = $region40
      $region39: #{dgcnn_semseg_forward.6} parent=35 // pred_region
        %s385 = smul.u32 2, %s20
      $region40: #{dgcnn_semseg_forward.6} parent=35 // pred_fallthru
        _
    $region36: #{dgcnn_semseg_forward.6} parent=5 // pred_fallthru
      _
    %p386 = scmp.le.s32.totalorder 2, %s10
    // Predicated region
    $region41: #{dgcnn_semseg_forward.6} parent=5 // pred_check
      %p387 = pneg %p386
    $region42: #{dgcnn_semseg_forward.6} parent=5 // pred_check_branch
      %389 = sbr.rel (%p387) target = $region44
    $region43: #{dgcnn_semseg_forward.6} parent=5 // pred_region
      %s390 = ssub.s32 %s10, 2
      // Predicated region
      $region45: #{dgcnn_semseg_forward.6} parent=43 // pred_check
        %p391 = pneg %p161
      $region46: #{dgcnn_semseg_forward.6} parent=43 // pred_check_branch
        %393 = sbr.rel (%p391) target = $region48
      $region47: #{dgcnn_semseg_forward.6} parent=43 // pred_region
        %s394 = smul.u32 2, %s22
        %p395 = scmp.lt.s32.totalorder %s21, 1
        %s396 = scalar_select %p395, %s21, 1
        %p397 = scmp.lt.s32.totalorder %s394, 1
        %s398 = scalar_select %p397, %s394, 1
        %s399 = smul.addr %s396, 2
        %s400 = sadd.s32 %s398, %s399
        %s401 = smul.addr %s400, 8
        %s402 = scalar_lea.vmem %s4, %s401
      $region48: #{dgcnn_semseg_forward.6} parent=43 // pred_fallthru
        _
    $region44: #{dgcnn_semseg_forward.6} parent=5 // pred_fallthru
      _
  $region6: #{dgcnn_semseg_forward.6} parent=0 // loop_footer
    %s14 = sadd.s32 1, %s10
  $region7: #{dgcnn_semseg_forward.6} parent=0 // loop_footer_branch
    %9 = sbr.rel target = $region3
  $region8: #{dgcnn_semseg_forward.6} parent=0 // loop_exit
    _

// kernel: dgcnn_semseg_forward.9
$region0: #{dgcnn_semseg_forward.9}
  #allocation0 [shape = 'u32[]', space=smem, size = 0x4, offset = 0x4, fixed_abs, tag = 'smem constant byte address 0x4 - core index']
  #allocation1 [shape = 'u32[72,128]{1,0:T(1,128)}', space=vmem, size = 0x9000, scoped, tag = 'internal scratch']
  %s0 = inlined_call_operand.vmem [shape: f32[2,4,16,64], index: 0, kind: input, shape index: {}]
  %s1 = inlined_call_operand.vmem [shape: f32[2,16,64], index: 1, kind: input, shape index: {}]
  %s2 = inlined_call_operand.vmem [shape: f32[64,64], index: 2, kind: input, shape index: {}]
  %s3 = inlined_call_operand.vmem [shape: f32[64,64], index: 3, kind: input, shape index: {}]
  %s4 = inlined_call_operand.vmem [shape: f32[1,64], index: 4, kind: input, shape index: {}]
  %s5 = inlined_call_operand.vmem [shape: f32[2,16,64], index: 5, kind: output, shape index: {}]
  %s6 = sld [smem:[#allocation0]]
  $region53: #{dgcnn_semseg_forward.9} parent=0
    _
  %s8 = ssub.s32 1, %s6
  %s9 = scalar_select 0, %s8, %s6
  loop: start=0, step=1, limit=4
  $region2: #{dgcnn_semseg_forward.9} parent=0 // loop_pre_header
    _
  $region3: #{dgcnn_semseg_forward.9} parent=0 // loop_header
    %s11 = sphi 0, %s15
    %p12 = scmp.ge.s32.totalorder %s11, 4
    %s18 = sphi 0, %s30
    %s19 = sphi 0, %s26
    %s20 = sphi 0, %s18
    %s21 = sphi 0, %s19
    %s22 = sphi 0, %s20
    %s23 = sphi 0, %s21
    %s35 = sphi 0, %s37
    %s38 = sphi 0, %s35
    %s39 = sphi 0, %s38
    %s55 = sphi 0, %s39
    %s63 = sphi 0, %s65
    %s66 = sphi 0, %s63
    %s67 = sphi 0, %s66
    %s83 = sphi 0, %s67
    %s87 = sphi 0, %s87
    %s89 = sphi 0, %s87
    %s90 = sphi 0, %s89
    %s104 = sphi 0, %s90
    %s108 = sphi 0, %s108
    %s110 = sphi 0, %s108
    %s111 = sphi 0, %s110
    %s125 = sphi 0, %s111
    %s129 = sphi 0, %s129
    %s131 = sphi 0, %s129
    %s132 = sphi 0, %s131
    %s146 = sphi 0, %s132
    %s154 = sphi 0, %s156
    %s157 = sphi 0, %s154
    %s158 = sphi 0, %s157
    %s174 = sphi 0, %s158
  $region4: #{dgcnn_semseg_forward.9} parent=0 // loop_header_branch
    %14 = sbr.rel (%p12) target = $region8
  $region5: #{dgcnn_semseg_forward.9} parent=0 // loop_body
    %s16 = ssub.s32 %s11, 1
    %s17 = ssub.s32 %s11, 2
    %s24 = sadd.s32 1, %s19
    %p25 = scmp.ge.s32.totalorder %s24, 1
    %s26 = scalar_select %p25, 0, %s24
    %s27 = sadd.s32 1, %s18
    %s28 = scalar_select %p25, %s27, %s18
    %p29 = scmp.ge.s32.totalorder %s28, 2
    %s30 = scalar_select %p29, 0, %s28
    %s31 = ssub.s32 %s18, %s30
    %s32 = ssub.s32 %s19, %s26
    %s33 = sor.u32 %s31, %s32
    %p34 = scmp.eq.s32.totalorder %s33, 0
    %s36 = sadd.s32 %s35, 1
    %s37 = scalar_select %p34, %s35, %s36
    %p40 = pneg %p34
    %p41 = scmp.eq.s32.totalorder %s11, 1
    %p42 = por %p40, %p41
    %p43 = scmp.ne.s32.totalorder %s35, %s38
    %p44 = scmp.eq.s32.totalorder %s11, 0
    %p45 = por %p43, %p44
    %p46 = scmp.ne.s32.totalorder %s35, %s38
    %p47 = scmp.eq.s32.totalorder %s16, 1
    %p48 = por %p46, %p47
    %p49 = scmp.ne.s32.totalorder %s38, %s39
    %p50 = scmp.eq.s32.totalorder %s16, 0
    %p51 = por %p49, %p50
    %p52 = scmp.ne.s32.totalorder %s38, %s39
    %p53 = scmp.eq.s32.totalorder %s17, 1
    %p54 = por %p52, %p53
    %p56 = scmp.ne.s32.totalorder %s39, %s55
    %p57 = scmp.eq.s32.totalorder %s17, 0
    %p58 = por %p56, %p57
    %s59 = ssub.s32 %s18, %s30
    %s60 = ssub.s32 %s19, %s26
    %s61 = sor.u32 %s59, %s60
    %p62 = scmp.eq.s32.totalorder %s61, 0
    %s64 = sadd.s32 %s63, 1
    %s65 = scalar_select %p62, %s63, %s64
    %p68 = pneg %p62
    %p69 = scmp.eq.s32.totalorder %s11, 1
    %p70 = por %p68, %p69
    %p71 = scmp.ne.s32.totalorder %s63, %s66
    %p72 = scmp.eq.s32.totalorder %s11, 0
    %p73 = por %p71, %p72
    %p74 = scmp.ne.s32.totalorder %s63, %s66
    %p75 = scmp.eq.s32.totalorder %s16, 1
    %p76 = por %p74, %p75
    %p77 = scmp.ne.s32.totalorder %s66, %s67
    %p78 = scmp.eq.s32.totalorder %s16, 0
    %p79 = por %p77, %p78
    %p80 = scmp.ne.s32.totalorder %s66, %s67
    %p81 = scmp.eq.s32.totalorder %s17, 1
    %p82 = por %p80, %p81
    %p84 = scmp.ne.s32.totalorder %s67, %s83
    %p85 = scmp.eq.s32.totalorder %s17, 0
    %p86 = por %p84, %p85
    %s88 = sadd.s32 %s87, 1
    %p91 = scmp.eq.s32.totalorder %s11, 1
    %p92 = scmp.ne.s32.totalorder %s87, %s89
    %p93 = scmp.eq.s32.totalorder %s11, 0
    %p94 = por %p92, %p93
    %p95 = scmp.ne.s32.totalorder %s87, %s89
    %p96 = scmp.eq.s32.totalorder %s16, 1
    %p97 = por %p95, %p96
    %p98 = scmp.ne.s32.totalorder %s89, %s90
    %p99 = scmp.eq.s32.totalorder %s16, 0
    %p100 = por %p98, %p99
    %p101 = scmp.ne.s32.totalorder %s89, %s90
    %p102 = scmp.eq.s32.totalorder %s17, 1
    %p103 = por %p101, %p102
    %p105 = scmp.ne.s32.totalorder %s90, %s104
    %p106 = scmp.eq.s32.totalorder %s17, 0
    %p107 = por %p105, %p106
    %s109 = sadd.s32 %s108, 1
    %p112 = scmp.eq.s32.totalorder %s11, 1
    %p113 = scmp.ne.s32.totalorder %s108, %s110
    %p114 = scmp.eq.s32.totalorder %s11, 0
    %p115 = por %p113, %p114
    %p116 = scmp.ne.s32.totalorder %s108, %s110
    %p117 = scmp.eq.s32.totalorder %s16, 1
    %p118 = por %p116, %p117
    %p119 = scmp.ne.s32.totalorder %s110, %s111
    %p120 = scmp.eq.s32.totalorder %s16, 0
    %p121 = por %p119, %p120
    %p122 = scmp.ne.s32.totalorder %s110, %s111
    %p123 = scmp.eq.s32.totalorder %s17, 1
    %p124 = por %p122, %p123
    %p126 = scmp.ne.s32.totalorder %s111, %s125
    %p127 = scmp.eq.s32.totalorder %s17, 0
    %p128 = por %p126, %p127
    %s130 = sadd.s32 %s129, 1
    %p133 = scmp.eq.s32.totalorder %s11, 1
    %p134 = scmp.ne.s32.totalorder %s129, %s131
    %p135 = scmp.eq.s32.totalorder %s11, 0
    %p136 = por %p134, %p135
    %p137 = scmp.ne.s32.totalorder %s129, %s131
    %p138 = scmp.eq.s32.totalorder %s16, 1
    %p139 = por %p137, %p138
    %p140 = scmp.ne.s32.totalorder %s131, %s132
    %p141 = scmp.eq.s32.totalorder %s16, 0
    %p142 = por %p140, %p141
    %p143 = scmp.ne.s32.totalorder %s131, %s132
    %p144 = scmp.eq.s32.totalorder %s17, 1
    %p145 = por %p143, %p144
    %p147 = scmp.ne.s32.totalorder %s132, %s146
    %p148 = scmp.eq.s32.totalorder %s17, 0
    %p149 = por %p147, %p148
    %s150 = ssub.s32 %s18, %s30
    %s151 = ssub.s32 %s19, %s26
    %s152 = sor.u32 %s150, %s151
    %p153 = scmp.eq.s32.totalorder %s152, 0
    %s155 = sadd.s32 %s154, 1
    %s156 = scalar_select %p153, %s154, %s155
    %p159 = pneg %p153
    %p160 = scmp.eq.s32.totalorder %s11, 1
    %p161 = por %p159, %p160
    %p162 = scmp.ne.s32.totalorder %s154, %s157
    %p163 = scmp.eq.s32.totalorder %s11, 0
    %p164 = por %p162, %p163
    %p165 = scmp.ne.s32.totalorder %s154, %s157
    %p166 = scmp.eq.s32.totalorder %s16, 1
    %p167 = por %p165, %p166
    %p168 = scmp.ne.s32.totalorder %s157, %s158
    %p169 = scmp.eq.s32.totalorder %s16, 0
    %p170 = por %p168, %p169
    %p171 = scmp.ne.s32.totalorder %s157, %s158
    %p172 = scmp.eq.s32.totalorder %s17, 1
    %p173 = por %p171, %p172
    %p175 = scmp.ne.s32.totalorder %s158, %s174
    %p176 = scmp.eq.s32.totalorder %s17, 0
    %p177 = por %p175, %p176
    %p178 = scmp.le.s32.totalorder 1, %s11
    %p179 = scmp.lt.s32.totalorder %s11, 3
    %p180 = pnand %p178, %p179
    %p181 = pneg %p180
    // Predicated region
    $region9: #{dgcnn_semseg_forward.9} parent=5 // pred_check
      _
    $region10: #{dgcnn_semseg_forward.9} parent=5 // pred_check_branch
      %183 = sbr.rel (%p180) target = $region12
    $region11: #{dgcnn_semseg_forward.9} parent=5 // pred_region
      %s184 = ssub.s32 %s11, 1
      // Predicated region
      $region13: #{dgcnn_semseg_forward.9} parent=11 // pred_check
        %p185 = pneg %p100
      $region14: #{dgcnn_semseg_forward.9} parent=11 // pred_check_branch
        %187 = sbr.rel (%p185) target = $region16
      $region15: #{dgcnn_semseg_forward.9} parent=11 // pred_region
        _
      $region16: #{dgcnn_semseg_forward.9} parent=11 // pred_fallthru
        _
      // Predicated region
      $region17: #{dgcnn_semseg_forward.9} parent=11 // pred_check
        %p188 = pneg %p121
      $region18: #{dgcnn_semseg_forward.9} parent=11 // pred_check_branch
        %190 = sbr.rel (%p188) target = $region20
      $region19: #{dgcnn_semseg_forward.9} parent=11 // pred_region
        _
      $region20: #{dgcnn_semseg_forward.9} parent=11 // pred_fallthru
        _
      // Predicated region
      $region21: #{dgcnn_semseg_forward.9} parent=11 // pred_check
        %p191 = pneg %p142
      $region22: #{dgcnn_semseg_forward.9} parent=11 // pred_check_branch
        %193 = sbr.rel (%p191) target = $region24
      $region23: #{dgcnn_semseg_forward.9} parent=11 // pred_region
        _
      $region24: #{dgcnn_semseg_forward.9} parent=11 // pred_fallthru
        _
    $region12: #{dgcnn_semseg_forward.9} parent=5 // pred_fallthru
      _
    %p194 = scmp.lt.s32.totalorder %s11, 2
    // Predicated region
    $region25: #{dgcnn_semseg_forward.9} parent=5 // pred_check
      %p195 = pneg %p194
    $region26: #{dgcnn_semseg_forward.9} parent=5 // pred_check_branch
      %197 = sbr.rel (%p195) target = $region28
    $region27: #{dgcnn_semseg_forward.9} parent=5 // pred_region
      // Predicated region
      $region29: #{dgcnn_semseg_forward.9} parent=27 // pred_check
        %p198 = pneg %p45
      $region30: #{dgcnn_semseg_forward.9} parent=27 // pred_check_branch
        %200 = sbr.rel (%p198) target = $region32
      $region31: #{dgcnn_semseg_forward.9} parent=27 // pred_region
        %s201 = smul.u32 2, %s19
        %p202 = scmp.lt.s32.totalorder %s18, 1
        %s203 = scalar_select %p202, %s18, 1
        %p204 = scmp.lt.s32.totalorder %s201, 1
        %s205 = scalar_select %p204, %s201, 1
        %s206 = smul.addr %s203, 8
        %s207 = sadd.s32 %s205, %s206
        %s208 = smul.addr %s207, 8
        %s209 = scalar_lea.vmem %s0, %s208
        %s210 = smul.u32 2, %s19
      $region32: #{dgcnn_semseg_forward.9} parent=27 // pred_fallthru
        _
      // Predicated region
      $region33: #{dgcnn_semseg_forward.9} parent=27 // pred_check
        %p211 = pneg %p73
      $region34: #{dgcnn_semseg_forward.9} parent=27 // pred_check_branch
        %213 = sbr.rel (%p211) target = $region36
      $region35: #{dgcnn_semseg_forward.9} parent=27 // pred_region
        %s214 = smul.u32 2, %s19
        %p215 = scmp.lt.s32.totalorder %s18, 1
        %s216 = scalar_select %p215, %s18, 1
        %p217 = scmp.lt.s32.totalorder %s214, 1
        %s218 = scalar_select %p217, %s214, 1
        %s219 = smul.addr %s216, 2
        %s220 = sadd.s32 %s218, %s219
        %s221 = smul.addr %s220, 8
        %s222 = scalar_lea.vmem %s1, %s221
        %s223 = smul.u32 2, %s19
      $region36: #{dgcnn_semseg_forward.9} parent=27 // pred_fallthru
        _
    $region28: #{dgcnn_semseg_forward.9} parent=5 // pred_fallthru
      _
    %p224 = scmp.le.s32.totalorder 1, %s11
    %p225 = scmp.lt.s32.totalorder %s11, 3
    %p226 = pnand %p224, %p225
    %p227 = pneg %p226
    // Predicated region
    $region37: #{dgcnn_semseg_forward.9} parent=5 // pred_check
      _
    $region38: #{dgcnn_semseg_forward.9} parent=5 // pred_check_branch
      %229 = sbr.rel (%p226) target = $region40
    $region39: #{dgcnn_semseg_forward.9} parent=5 // pred_region
      %s230 = ssub.s32 %s11, 1
      %s231 = smul.u32 2, %s21
      %p232 = scmp.lt.s32.totalorder %s20, 1
      %s233 = scalar_select %p232, %s20, 1
      %p234 = scmp.lt.s32.totalorder %s231, 1
      %s235 = scalar_select %p234, %s231, 1
      %s236 = smul.addr %s233, 8
      %s237 = sadd.s32 %s235, %s236
      %s238 = smul.addr %s237, 8
      %s239 = scalar_lea.vmem %s0, %s238
      %p240 = pneg %p51
      %p241 = pneg %p48
      %s242 = smul.u32 2, %s21
      %p243 = scmp.lt.s32.totalorder %s20, 1
      %s244 = scalar_select %p243, %s20, 1
      %p245 = scmp.lt.s32.totalorder %s242, 1
      %s246 = scalar_select %p245, %s242, 1
      %s247 = smul.addr %s244, 2
      %s248 = sadd.s32 %s246, %s247
      %s249 = smul.addr %s248, 8
      %s250 = scalar_lea.vmem %s1, %s249
      %p251 = pneg %p79
      %p252 = pneg %p76
      %p253 = pneg %p100
      %p254 = pneg %p97
      %p255 = pneg %p121
      %p256 = pneg %p118
      %p257 = pneg %p142
      %p258 = pneg %p139
      %p259 = pneg %p170
      %p260 = pneg %p167
      %s261 = smul.u32 2, %s21
      %p262 = scmp.lt.s32.totalorder %s20, 1
      %s263 = scalar_select %p262, %s20, 1
      %p264 = scmp.lt.s32.totalorder %s261, 1
      %s265 = scalar_select %p264, %s261, 1
      %s266 = smul.addr %s263, 2
      %s267 = sadd.s32 %s265, %s266
      %s268 = smul.addr %s267, 8
      %s269 = scalar_lea.vmem %s5, %s268
      %s270 = smul.u32 2, %s21
      %p271 = scmp.lt.s32.totalorder %s20, 1
      %s272 = scalar_select %p271, %s20, 1
      %p273 = scmp.lt.s32.totalorder %s270, 1
      %s274 = scalar_select %p273, %s270, 1
      %s275 = smul.addr %s272, 8
      %s276 = sadd.s32 %s274, %s275
      %s277 = smul.addr %s276, 8
      %s278 = scalar_lea.vmem %s0, %s277
      %s279 = smul.u32 2, %s21
      %s280 = smul.u32 2, %s21
      %p281 = scmp.lt.s32.totalorder %s20, 1
      %s282 = scalar_select %p281, %s20, 1
      %p283 = scmp.lt.s32.totalorder %s280, 1
      %s284 = scalar_select %p283, %s280, 1
      %s285 = smul.addr %s282, 2
      %s286 = sadd.s32 %s284, %s285
      %s287 = smul.addr %s286, 8
      %s288 = scalar_lea.vmem %s1, %s287
      %s289 = smul.u32 2, %s21
      %s290 = smul.u32 2, %s21
      %p291 = scmp.lt.s32.totalorder %s20, 1
      %s292 = scalar_select %p291, %s20, 1
      %p293 = scmp.lt.s32.totalorder %s290, 1
      %s294 = scalar_select %p293, %s290, 1
      %s295 = smul.addr %s292, 2
      %s296 = sadd.s32 %s294, %s295
      %s297 = smul.addr %s296, 8
      %s298 = scalar_lea.vmem %s5, %s297
      %s299 = smul.u32 2, %s21
      %v300 = vld [vmem:[%s288] sm:$0xff]
      %v301 = vld [vmem:[%s288 + $0x8] sm:$0xff]
      %v302 = vld [vmem:[%s3] sm:$0xff]
      %v303 = vld [vmem:[%s3 + $0x8] sm:$0xff]
      %v304 = vld [vmem:[%s3 + $0x10] sm:$0xff]
      %v305 = vld [vmem:[%s3 + $0x18] sm:$0xff]
      %v306 = vld [vmem:[%s3 + $0x20] sm:$0xff]
      %v307 = vld [vmem:[%s3 + $0x28] sm:$0xff]
      %v308 = vld [vmem:[%s3 + $0x30] sm:$0xff]
      %v309 = vld [vmem:[%s3 + $0x38] sm:$0xff]
      %v310 = vld [vmem:[%s4] sm:$0x1]
      %v312 = vperm.slane %v310, 0
      %vm314 = vcmask 523264
      %v316 = vsel %vm314, %v300, 0
      %v319 = vsel %vm314, %v301, 0
      %321 = vmatpush.msra.mxu0 0.0
      %322 = vmatpush.msra.mxu0 0.0
      %323 = vmatpush.msra.mxu0 0.0
      %324 = vmatpush.msra.mxu0 0.0
      %325 = vmatpush.msra.mxu0 0.0
      %326 = vmatpush.msra.mxu0 0.0
      %327 = vmatpush.msra.mxu0 0.0
      %328 = vmatpush.msra.mxu0 0.0
      %329 = vmatpush.msra.mxu0 %v309
      %330 = vmatpush.msra.mxu0 %v308
      %331 = vmatpush.msra.mxu0 %v307
      %332 = vmatpush.msra.mxu0 %v306
      %333 = vmatpush.msra.mxu0 %v305
      %334 = vmatpush.msra.mxu0 %v304
      %335 = vmatpush.msra.mxu0 %v303
      %336 = vmatpush.msra.mxu0 %v302
      %337 = vmatmul.f32.gmra.mxu0 %v316
      %v338 = vpop.f32.mrf.mxu0
      %v339 = vadd.f32 %v312, %v338
      %340 = vmatmul.f32.gmra.mxu0 %v319
      %v341 = vpop.f32.mrf.mxu0
      %v342 = vadd.f32 %v312, %v341
      %343 = vdwg.mxu0
      %v344 = vld [vmem:[%s278] sm:$0xff]
      %v345 = vld [vmem:[%s278 + $0x8] sm:$0xff]
      %v346 = vld [vmem:[%s2] sm:$0xff]
      %v347 = vld [vmem:[%s2 + $0x8] sm:$0xff]
      %v348 = vld [vmem:[%s2 + $0x10] sm:$0xff]
      %v349 = vld [vmem:[%s2 + $0x18] sm:$0xff]
      %v350 = vld [vmem:[%s2 + $0x20] sm:$0xff]
      %v351 = vld [vmem:[%s2 + $0x28] sm:$0xff]
      %v352 = vld [vmem:[%s2 + $0x30] sm:$0xff]
      %v353 = vld [vmem:[%s2 + $0x38] sm:$0xff]
      %v355 = vsel %vm314, %v344, 0
      %v358 = vsel %vm314, %v345, 0
      %360 = vmatpush.msra.mxu0 0.0
      %361 = vmatpush.msra.mxu0 0.0
      %362 = vmatpush.msra.mxu0 0.0
      %363 = vmatpush.msra.mxu0 0.0
      %364 = vmatpush.msra.mxu0 0.0
      %365 = vmatpush.msra.mxu0 0.0
      %366 = vmatpush.msra.mxu0 0.0
      %367 = vmatpush.msra.mxu0 0.0
      %368 = vmatpush.msra.mxu0 %v353
      %369 = vmatpush.msra.mxu0 %v352
      %370 = vmatpush.msra.mxu0 %v351
      %371 = vmatpush.msra.mxu0 %v350
      %372 = vmatpush.msra.mxu0 %v349
      %373 = vmatpush.msra.mxu0 %v348
      %374 = vmatpush.msra.mxu0 %v347
      %375 = vmatpush.msra.mxu0 %v346
      %376 = vmatmul.f32.gmra.mxu0 %v355
      %v377 = vpop.f32.mrf.mxu0
      %v378 = vadd.f32 %v339, %v377
      %379 = vmatmul.f32.gmra.mxu0 %v358
      %v380 = vpop.f32.mrf.mxu0
      %v381 = vadd.f32 %v342, %v380
      %382 = vdwg.mxu0
      %vm383 = vcmp.gt.f32.partialorder %v378, 0.0
      %vm384 = vcmp.gt.f32.partialorder %v381, 0.0
      %v385 = vmul.f32 %v378, 0.2
      %v386 = vmul.f32 %v381, 0.2
      %v387 = vsel %vm383, %v378, %v385
      %v388 = vsel %vm384, %v381, %v386
      %s389 = scalar_lea.vmem %s278, 16
      %v390 = vld [vmem:[%s389] sm:$0xff]
      %v391 = vld [vmem:[%s389 + $0x8] sm:$0xff]
      %v393 = vsel %vm314, %v390, 0
      %v396 = vsel %vm314, %v391, 0
      %398 = vmatpush.msra.mxu0 0.0
      %399 = vmatpush.msra.mxu0 0.0
      %400 = vmatpush.msra.mxu0 0.0
      %401 = vmatpush.msra.mxu0 0.0
      %402 = vmatpush.msra.mxu0 0.0
      %403 = vmatpush.msra.mxu0 0.0
      %404 = vmatpush.msra.mxu0 0.0
      %405 = vmatpush.msra.mxu0 0.0
      %406 = vmatpush.msra.mxu0 %v353
      %407 = vmatpush.msra.mxu0 %v352
      %408 = vmatpush.msra.mxu0 %v351
      %409 = vmatpush.msra.mxu0 %v350
      %410 = vmatpush.msra.mxu0 %v349
      %411 = vmatpush.msra.mxu0 %v348
      %412 = vmatpush.msra.mxu0 %v347
      %413 = vmatpush.msra.mxu0 %v346
      %414 = vmatmul.f32.gmra.mxu0 %v393
      %v415 = vpop.f32.mrf.mxu0
      %v416 = vadd.f32 %v339, %v415
      %417 = vmatmul.f32.gmra.mxu0 %v396
      %v418 = vpop.f32.mrf.mxu0
      %v419 = vadd.f32 %v342, %v418
      %420 = vdwg.mxu0
      %vm421 = vcmp.gt.f32.partialorder %v416, 0.0
      %vm422 = vcmp.gt.f32.partialorder %v419, 0.0
      %v423 = vmul.f32 %v416, 0.2
      %v424 = vmul.f32 %v419, 0.2
      %v425 = vsel %vm421, %v416, %v423
      %v426 = vsel %vm422, %v419, %v424
      %v427 = vmax.f32 %v387, %v425
      %v428 = vmax.f32 %v388, %v426
      %s429 = scalar_lea.vmem %s278, 32
      %v430 = vld [vmem:[%s429] sm:$0xff]
      %v431 = vld [vmem:[%s429 + $0x8] sm:$0xff]
      %v433 = vsel %vm314, %v430, 0
      %v436 = vsel %vm314, %v431, 0
      %438 = vmatpush.msra.mxu0 0.0
      %439 = vmatpush.msra.mxu0 0.0
      %440 = vmatpush.msra.mxu0 0.0
      %441 = vmatpush.msra.mxu0 0.0
      %442 = vmatpush.msra.mxu0 0.0
      %443 = vmatpush.msra.mxu0 0.0
      %444 = vmatpush.msra.mxu0 0.0
      %445 = vmatpush.msra.mxu0 0.0
      %446 = vmatpush.msra.mxu0 %v353
      %447 = vmatpush.msra.mxu0 %v352
      %448 = vmatpush.msra.mxu0 %v351
      %449 = vmatpush.msra.mxu0 %v350
      %450 = vmatpush.msra.mxu0 %v349
      %451 = vmatpush.msra.mxu0 %v348
      %452 = vmatpush.msra.mxu0 %v347
      %453 = vmatpush.msra.mxu0 %v346
      %454 = vmatmul.f32.gmra.mxu0 %v433
      %v455 = vpop.f32.mrf.mxu0
      %v456 = vadd.f32 %v339, %v455
      %457 = vmatmul.f32.gmra.mxu0 %v436
      %v458 = vpop.f32.mrf.mxu0
      %v459 = vadd.f32 %v342, %v458
      %460 = vdwg.mxu0
      %vm461 = vcmp.gt.f32.partialorder %v456, 0.0
      %vm462 = vcmp.gt.f32.partialorder %v459, 0.0
      %v463 = vmul.f32 %v456, 0.2
      %v464 = vmul.f32 %v459, 0.2
      %v465 = vsel %vm461, %v456, %v463
      %v466 = vsel %vm462, %v459, %v464
      %v467 = vmax.f32 %v427, %v465
      %v468 = vmax.f32 %v428, %v466
      %s469 = scalar_lea.vmem %s278, 48
      %v470 = vld [vmem:[%s469] sm:$0xff]
      %v471 = vld [vmem:[%s469 + $0x8] sm:$0xff]
      %v473 = vsel %vm314, %v470, 0
      %v476 = vsel %vm314, %v471, 0
      %478 = vmatpush.msra.mxu0 0.0
      %479 = vmatpush.msra.mxu0 0.0
      %480 = vmatpush.msra.mxu0 0.0
      %481 = vmatpush.msra.mxu0 0.0
      %482 = vmatpush.msra.mxu0 0.0
      %483 = vmatpush.msra.mxu0 0.0
      %484 = vmatpush.msra.mxu0 0.0
      %485 = vmatpush.msra.mxu0 0.0
      %486 = vmatpush.msra.mxu0 %v353
      %487 = vmatpush.msra.mxu0 %v352
      %488 = vmatpush.msra.mxu0 %v351
      %489 = vmatpush.msra.mxu0 %v350
      %490 = vmatpush.msra.mxu0 %v349
      %491 = vmatpush.msra.mxu0 %v348
      %492 = vmatpush.msra.mxu0 %v347
      %493 = vmatpush.msra.mxu0 %v346
      %494 = vmatmul.f32.gmra.mxu0 %v473
      %v495 = vpop.f32.mrf.mxu0
      %v496 = vadd.f32 %v339, %v495
      %497 = vmatmul.f32.gmra.mxu0 %v476
      %v498 = vpop.f32.mrf.mxu0
      %v499 = vadd.f32 %v342, %v498
      %500 = vdwg.mxu0
      %vm501 = vcmp.gt.f32.partialorder %v496, 0.0
      %vm502 = vcmp.gt.f32.partialorder %v499, 0.0
      %v503 = vmul.f32 %v496, 0.2
      %v504 = vmul.f32 %v499, 0.2
      %v505 = vsel %vm501, %v496, %v503
      %v506 = vsel %vm502, %v499, %v504
      %v507 = vmax.f32 %v467, %v505
      %v508 = vmax.f32 %v468, %v506
      %509 = vst.msk [vmem:[%s298] sm:$0xff] %vm314, %v507
      %510 = vst.msk [vmem:[%s298 + $0x8] sm:$0xff] %vm314, %v508
      %s511 = smul.u32 2, %s21
      %p512 = scmp.lt.s32.totalorder %s20, 1
      %s513 = scalar_select %p512, %s20, 1
      %p514 = scmp.lt.s32.totalorder %s511, 1
      %s515 = scalar_select %p514, %s511, 1
      %s516 = smul.addr %s513, 2
      %s517 = sadd.s32 %s515, %s516
      %s518 = smul.addr %s517, 8
      %s519 = scalar_lea.vmem %s5, %s518
      // Predicated region
      $region41: #{dgcnn_semseg_forward.9} parent=39 // pred_check
        %p520 = pneg %p167
      $region42: #{dgcnn_semseg_forward.9} parent=39 // pred_check_branch
        %522 = sbr.rel (%p520) target = $region44
      $region43: #{dgcnn_semseg_forward.9} parent=39 // pred_region
        %s523 = smul.u32 2, %s21
      $region44: #{dgcnn_semseg_forward.9} parent=39 // pred_fallthru
        _
    $region40: #{dgcnn_semseg_forward.9} parent=5 // pred_fallthru
      _
    %p524 = scmp.le.s32.totalorder 2, %s11
    // Predicated region
    $region45: #{dgcnn_semseg_forward.9} parent=5 // pred_check
      %p525 = pneg %p524
    $region46: #{dgcnn_semseg_forward.9} parent=5 // pred_check_branch
      %527 = sbr.rel (%p525) target = $region48
    $region47: #{dgcnn_semseg_forward.9} parent=5 // pred_region
      %s528 = ssub.s32 %s11, 2
      // Predicated region
      $region49: #{dgcnn_semseg_forward.9} parent=47 // pred_check
        %p529 = pneg %p173
      $region50: #{dgcnn_semseg_forward.9} parent=47 // pred_check_branch
        %531 = sbr.rel (%p529) target = $region52
      $region51: #{dgcnn_semseg_forward.9} parent=47 // pred_region
        %s532 = smul.u32 2, %s23
        %p533 = scmp.lt.s32.totalorder %s22, 1
        %s534 = scalar_select %p533, %s22, 1
        %p535 = scmp.lt.s32.totalorder %s532, 1
        %s536 = scalar_select %p535, %s532, 1
        %s537 = smul.addr %s534, 2
        %s538 = sadd.s32 %s536, %s537
        %s539 = smul.addr %s538, 8
        %s540 = scalar_lea.vmem %s5, %s539
      $region52: #{dgcnn_semseg_forward.9} parent=47 // pred_fallthru
        _
    $region48: #{dgcnn_semseg_forward.9} parent=5 // pred_fallthru
      _
  $region6: #{dgcnn_semseg_forward.9} parent=0 // loop_footer
    %s15 = sadd.s32 1, %s11
  $region7: #{dgcnn_semseg_forward.9} parent=0 // loop_footer_branch
    %10 = sbr.rel target = $region3
  $region8: #{dgcnn_semseg_forward.9} parent=0 // loop_exit
    _

// kernel: dgcnn_semseg_forward.8
$region0: #{dgcnn_semseg_forward.8}
  #allocation0 [shape = 'u32[]', space=smem, size = 0x4, offset = 0x4, fixed_abs, tag = 'smem constant byte address 0x4 - core index']
  #allocation1 [shape = 'u32[72,128]{1,0:T(1,128)}', space=vmem, size = 0x9000, scoped, tag = 'internal scratch']
  %s0 = inlined_call_operand.vmem [shape: f32[2,4,16,64], index: 0, kind: input, shape index: {}]
  %s1 = inlined_call_operand.vmem [shape: f32[2,16,64], index: 1, kind: input, shape index: {}]
  %s2 = inlined_call_operand.vmem [shape: f32[64,64], index: 2, kind: input, shape index: {}]
  %s3 = inlined_call_operand.vmem [shape: f32[64,64], index: 3, kind: input, shape index: {}]
  %s4 = inlined_call_operand.vmem [shape: f32[1,64], index: 4, kind: input, shape index: {}]
  %s5 = inlined_call_operand.vmem [shape: f32[64,64], index: 5, kind: input, shape index: {}]
  %s6 = inlined_call_operand.vmem [shape: f32[1,64], index: 6, kind: input, shape index: {}]
  %s7 = inlined_call_operand.vmem [shape: f32[2,16,64], index: 7, kind: output, shape index: {}]
  %s8 = sld [smem:[#allocation0]]
  $region61: #{dgcnn_semseg_forward.8} parent=0
    _
  %s10 = ssub.s32 1, %s8
  %s11 = scalar_select 0, %s10, %s8
  loop: start=0, step=1, limit=4
  $region2: #{dgcnn_semseg_forward.8} parent=0 // loop_pre_header
    _
  $region3: #{dgcnn_semseg_forward.8} parent=0 // loop_header
    %s13 = sphi 0, %s17
    %p14 = scmp.ge.s32.totalorder %s13, 4
    %s20 = sphi 0, %s32
    %s21 = sphi 0, %s28
    %s22 = sphi 0, %s20
    %s23 = sphi 0, %s21
    %s24 = sphi 0, %s22
    %s25 = sphi 0, %s23
    %s37 = sphi 0, %s39
    %s40 = sphi 0, %s37
    %s41 = sphi 0, %s40
    %s57 = sphi 0, %s41
    %s65 = sphi 0, %s67
    %s68 = sphi 0, %s65
    %s69 = sphi 0, %s68
    %s85 = sphi 0, %s69
    %s89 = sphi 0, %s89
    %s91 = sphi 0, %s89
    %s92 = sphi 0, %s91
    %s106 = sphi 0, %s92
    %s110 = sphi 0, %s110
    %s112 = sphi 0, %s110
    %s113 = sphi 0, %s112
    %s127 = sphi 0, %s113
    %s131 = sphi 0, %s131
    %s133 = sphi 0, %s131
    %s134 = sphi 0, %s133
    %s148 = sphi 0, %s134
    %s152 = sphi 0, %s152
    %s154 = sphi 0, %s152
    %s155 = sphi 0, %s154
    %s169 = sphi 0, %s155
    %s173 = sphi 0, %s173
    %s175 = sphi 0, %s173
    %s176 = sphi 0, %s175
    %s190 = sphi 0, %s176
    %s198 = sphi 0, %s200
    %s201 = sphi 0, %s198
    %s202 = sphi 0, %s201
    %s218 = sphi 0, %s202
  $region4: #{dgcnn_semseg_forward.8} parent=0 // loop_header_branch
    %16 = sbr.rel (%p14) target = $region8
  $region5: #{dgcnn_semseg_forward.8} parent=0 // loop_body
    %s18 = ssub.s32 %s13, 1
    %s19 = ssub.s32 %s13, 2
    %s26 = sadd.s32 1, %s21
    %p27 = scmp.ge.s32.totalorder %s26, 1
    %s28 = scalar_select %p27, 0, %s26
    %s29 = sadd.s32 1, %s20
    %s30 = scalar_select %p27, %s29, %s20
    %p31 = scmp.ge.s32.totalorder %s30, 2
    %s32 = scalar_select %p31, 0, %s30
    %s33 = ssub.s32 %s20, %s32
    %s34 = ssub.s32 %s21, %s28
    %s35 = sor.u32 %s33, %s34
    %p36 = scmp.eq.s32.totalorder %s35, 0
    %s38 = sadd.s32 %s37, 1
    %s39 = scalar_select %p36, %s37, %s38
    %p42 = pneg %p36
    %p43 = scmp.eq.s32.totalorder %s13, 1
    %p44 = por %p42, %p43
    %p45 = scmp.ne.s32.totalorder %s37, %s40
    %p46 = scmp.eq.s32.totalorder %s13, 0
    %p47 = por %p45, %p46
    %p48 = scmp.ne.s32.totalorder %s37, %s40
    %p49 = scmp.eq.s32.totalorder %s18, 1
    %p50 = por %p48, %p49
    %p51 = scmp.ne.s32.totalorder %s40, %s41
    %p52 = scmp.eq.s32.totalorder %s18, 0
    %p53 = por %p51, %p52
    %p54 = scmp.ne.s32.totalorder %s40, %s41
    %p55 = scmp.eq.s32.totalorder %s19, 1
    %p56 = por %p54, %p55
    %p58 = scmp.ne.s32.totalorder %s41, %s57
    %p59 = scmp.eq.s32.totalorder %s19, 0
    %p60 = por %p58, %p59
    %s61 = ssub.s32 %s20, %s32
    %s62 = ssub.s32 %s21, %s28
    %s63 = sor.u32 %s61, %s62
    %p64 = scmp.eq.s32.totalorder %s63, 0
    %s66 = sadd.s32 %s65, 1
    %s67 = scalar_select %p64, %s65, %s66
    %p70 = pneg %p64
    %p71 = scmp.eq.s32.totalorder %s13, 1
    %p72 = por %p70, %p71
    %p73 = scmp.ne.s32.totalorder %s65, %s68
    %p74 = scmp.eq.s32.totalorder %s13, 0
    %p75 = por %p73, %p74
    %p76 = scmp.ne.s32.totalorder %s65, %s68
    %p77 = scmp.eq.s32.totalorder %s18, 1
    %p78 = por %p76, %p77
    %p79 = scmp.ne.s32.totalorder %s68, %s69
    %p80 = scmp.eq.s32.totalorder %s18, 0
    %p81 = por %p79, %p80
    %p82 = scmp.ne.s32.totalorder %s68, %s69
    %p83 = scmp.eq.s32.totalorder %s19, 1
    %p84 = por %p82, %p83
    %p86 = scmp.ne.s32.totalorder %s69, %s85
    %p87 = scmp.eq.s32.totalorder %s19, 0
    %p88 = por %p86, %p87
    %s90 = sadd.s32 %s89, 1
    %p93 = scmp.eq.s32.totalorder %s13, 1
    %p94 = scmp.ne.s32.totalorder %s89, %s91
    %p95 = scmp.eq.s32.totalorder %s13, 0
    %p96 = por %p94, %p95
    %p97 = scmp.ne.s32.totalorder %s89, %s91
    %p98 = scmp.eq.s32.totalorder %s18, 1
    %p99 = por %p97, %p98
    %p100 = scmp.ne.s32.totalorder %s91, %s92
    %p101 = scmp.eq.s32.totalorder %s18, 0
    %p102 = por %p100, %p101
    %p103 = scmp.ne.s32.totalorder %s91, %s92
    %p104 = scmp.eq.s32.totalorder %s19, 1
    %p105 = por %p103, %p104
    %p107 = scmp.ne.s32.totalorder %s92, %s106
    %p108 = scmp.eq.s32.totalorder %s19, 0
    %p109 = por %p107, %p108
    %s111 = sadd.s32 %s110, 1
    %p114 = scmp.eq.s32.totalorder %s13, 1
    %p115 = scmp.ne.s32.totalorder %s110, %s112
    %p116 = scmp.eq.s32.totalorder %s13, 0
    %p117 = por %p115, %p116
    %p118 = scmp.ne.s32.totalorder %s110, %s112
    %p119 = scmp.eq.s32.totalorder %s18, 1
    %p120 = por %p118, %p119
    %p121 = scmp.ne.s32.totalorder %s112, %s113
    %p122 = scmp.eq.s32.totalorder %s18, 0
    %p123 = por %p121, %p122
    %p124 = scmp.ne.s32.totalorder %s112, %s113
    %p125 = scmp.eq.s32.totalorder %s19, 1
    %p126 = por %p124, %p125
    %p128 = scmp.ne.s32.totalorder %s113, %s127
    %p129 = scmp.eq.s32.totalorder %s19, 0
    %p130 = por %p128, %p129
    %s132 = sadd.s32 %s131, 1
    %p135 = scmp.eq.s32.totalorder %s13, 1
    %p136 = scmp.ne.s32.totalorder %s131, %s133
    %p137 = scmp.eq.s32.totalorder %s13, 0
    %p138 = por %p136, %p137
    %p139 = scmp.ne.s32.totalorder %s131, %s133
    %p140 = scmp.eq.s32.totalorder %s18, 1
    %p141 = por %p139, %p140
    %p142 = scmp.ne.s32.totalorder %s133, %s134
    %p143 = scmp.eq.s32.totalorder %s18, 0
    %p144 = por %p142, %p143
    %p145 = scmp.ne.s32.totalorder %s133, %s134
    %p146 = scmp.eq.s32.totalorder %s19, 1
    %p147 = por %p145, %p146
    %p149 = scmp.ne.s32.totalorder %s134, %s148
    %p150 = scmp.eq.s32.totalorder %s19, 0
    %p151 = por %p149, %p150
    %s153 = sadd.s32 %s152, 1
    %p156 = scmp.eq.s32.totalorder %s13, 1
    %p157 = scmp.ne.s32.totalorder %s152, %s154
    %p158 = scmp.eq.s32.totalorder %s13, 0
    %p159 = por %p157, %p158
    %p160 = scmp.ne.s32.totalorder %s152, %s154
    %p161 = scmp.eq.s32.totalorder %s18, 1
    %p162 = por %p160, %p161
    %p163 = scmp.ne.s32.totalorder %s154, %s155
    %p164 = scmp.eq.s32.totalorder %s18, 0
    %p165 = por %p163, %p164
    %p166 = scmp.ne.s32.totalorder %s154, %s155
    %p167 = scmp.eq.s32.totalorder %s19, 1
    %p168 = por %p166, %p167
    %p170 = scmp.ne.s32.totalorder %s155, %s169
    %p171 = scmp.eq.s32.totalorder %s19, 0
    %p172 = por %p170, %p171
    %s174 = sadd.s32 %s173, 1
    %p177 = scmp.eq.s32.totalorder %s13, 1
    %p178 = scmp.ne.s32.totalorder %s173, %s175
    %p179 = scmp.eq.s32.totalorder %s13, 0
    %p180 = por %p178, %p179
    %p181 = scmp.ne.s32.totalorder %s173, %s175
    %p182 = scmp.eq.s32.totalorder %s18, 1
    %p183 = por %p181, %p182
    %p184 = scmp.ne.s32.totalorder %s175, %s176
    %p185 = scmp.eq.s32.totalorder %s18, 0
    %p186 = por %p184, %p185
    %p187 = scmp.ne.s32.totalorder %s175, %s176
    %p188 = scmp.eq.s32.totalorder %s19, 1
    %p189 = por %p187, %p188
    %p191 = scmp.ne.s32.totalorder %s176, %s190
    %p192 = scmp.eq.s32.totalorder %s19, 0
    %p193 = por %p191, %p192
    %s194 = ssub.s32 %s20, %s32
    %s195 = ssub.s32 %s21, %s28
    %s196 = sor.u32 %s194, %s195
    %p197 = scmp.eq.s32.totalorder %s196, 0
    %s199 = sadd.s32 %s198, 1
    %s200 = scalar_select %p197, %s198, %s199
    %p203 = pneg %p197
    %p204 = scmp.eq.s32.totalorder %s13, 1
    %p205 = por %p203, %p204
    %p206 = scmp.ne.s32.totalorder %s198, %s201
    %p207 = scmp.eq.s32.totalorder %s13, 0
    %p208 = por %p206, %p207
    %p209 = scmp.ne.s32.totalorder %s198, %s201
    %p210 = scmp.eq.s32.totalorder %s18, 1
    %p211 = por %p209, %p210
    %p212 = scmp.ne.s32.totalorder %s201, %s202
    %p213 = scmp.eq.s32.totalorder %s18, 0
    %p214 = por %p212, %p213
    %p215 = scmp.ne.s32.totalorder %s201, %s202
    %p216 = scmp.eq.s32.totalorder %s19, 1
    %p217 = por %p215, %p216
    %p219 = scmp.ne.s32.totalorder %s202, %s218
    %p220 = scmp.eq.s32.totalorder %s19, 0
    %p221 = por %p219, %p220
    %p222 = scmp.le.s32.totalorder 1, %s13
    %p223 = scmp.lt.s32.totalorder %s13, 3
    %p224 = pnand %p222, %p223
    %p225 = pneg %p224
    // Predicated region
    $region9: #{dgcnn_semseg_forward.8} parent=5 // pred_check
      _
    $region10: #{dgcnn_semseg_forward.8} parent=5 // pred_check_branch
      %227 = sbr.rel (%p224) target = $region12
    $region11: #{dgcnn_semseg_forward.8} parent=5 // pred_region
      %s228 = ssub.s32 %s13, 1
      // Predicated region
      $region13: #{dgcnn_semseg_forward.8} parent=11 // pred_check
        %p229 = pneg %p102
      $region14: #{dgcnn_semseg_forward.8} parent=11 // pred_check_branch
        %231 = sbr.rel (%p229) target = $region16
      $region15: #{dgcnn_semseg_forward.8} parent=11 // pred_region
        _
      $region16: #{dgcnn_semseg_forward.8} parent=11 // pred_fallthru
        _
      // Predicated region
      $region17: #{dgcnn_semseg_forward.8} parent=11 // pred_check
        %p232 = pneg %p123
      $region18: #{dgcnn_semseg_forward.8} parent=11 // pred_check_branch
        %234 = sbr.rel (%p232) target = $region20
      $region19: #{dgcnn_semseg_forward.8} parent=11 // pred_region
        _
      $region20: #{dgcnn_semseg_forward.8} parent=11 // pred_fallthru
        _
      // Predicated region
      $region21: #{dgcnn_semseg_forward.8} parent=11 // pred_check
        %p235 = pneg %p144
      $region22: #{dgcnn_semseg_forward.8} parent=11 // pred_check_branch
        %237 = sbr.rel (%p235) target = $region24
      $region23: #{dgcnn_semseg_forward.8} parent=11 // pred_region
        _
      $region24: #{dgcnn_semseg_forward.8} parent=11 // pred_fallthru
        _
      // Predicated region
      $region25: #{dgcnn_semseg_forward.8} parent=11 // pred_check
        %p238 = pneg %p165
      $region26: #{dgcnn_semseg_forward.8} parent=11 // pred_check_branch
        %240 = sbr.rel (%p238) target = $region28
      $region27: #{dgcnn_semseg_forward.8} parent=11 // pred_region
        _
      $region28: #{dgcnn_semseg_forward.8} parent=11 // pred_fallthru
        _
      // Predicated region
      $region29: #{dgcnn_semseg_forward.8} parent=11 // pred_check
        %p241 = pneg %p186
      $region30: #{dgcnn_semseg_forward.8} parent=11 // pred_check_branch
        %243 = sbr.rel (%p241) target = $region32
      $region31: #{dgcnn_semseg_forward.8} parent=11 // pred_region
        _
      $region32: #{dgcnn_semseg_forward.8} parent=11 // pred_fallthru
        _
    $region12: #{dgcnn_semseg_forward.8} parent=5 // pred_fallthru
      _
    %p244 = scmp.lt.s32.totalorder %s13, 2
    // Predicated region
    $region33: #{dgcnn_semseg_forward.8} parent=5 // pred_check
      %p245 = pneg %p244
    $region34: #{dgcnn_semseg_forward.8} parent=5 // pred_check_branch
      %247 = sbr.rel (%p245) target = $region36
    $region35: #{dgcnn_semseg_forward.8} parent=5 // pred_region
      // Predicated region
      $region37: #{dgcnn_semseg_forward.8} parent=35 // pred_check
        %p248 = pneg %p47
      $region38: #{dgcnn_semseg_forward.8} parent=35 // pred_check_branch
        %250 = sbr.rel (%p248) target = $region40
      $region39: #{dgcnn_semseg_forward.8} parent=35 // pred_region
        %s251 = smul.u32 2, %s21
        %p252 = scmp.lt.s32.totalorder %s20, 1
        %s253 = scalar_select %p252, %s20, 1
        %p254 = scmp.lt.s32.totalorder %s251, 1
        %s255 = scalar_select %p254, %s251, 1
        %s256 = smul.addr %s253, 8
        %s257 = sadd.s32 %s255, %s256
        %s258 = smul.addr %s257, 8
        %s259 = scalar_lea.vmem %s0, %s258
        %s260 = smul.u32 2, %s21
      $region40: #{dgcnn_semseg_forward.8} parent=35 // pred_fallthru
        _
      // Predicated region
      $region41: #{dgcnn_semseg_forward.8} parent=35 // pred_check
        %p261 = pneg %p75
      $region42: #{dgcnn_semseg_forward.8} parent=35 // pred_check_branch
        %263 = sbr.rel (%p261) target = $region44
      $region43: #{dgcnn_semseg_forward.8} parent=35 // pred_region
        %s264 = smul.u32 2, %s21
        %p265 = scmp.lt.s32.totalorder %s20, 1
        %s266 = scalar_select %p265, %s20, 1
        %p267 = scmp.lt.s32.totalorder %s264, 1
        %s268 = scalar_select %p267, %s264, 1
        %s269 = smul.addr %s266, 2
        %s270 = sadd.s32 %s268, %s269
        %s271 = smul.addr %s270, 8
        %s272 = scalar_lea.vmem %s1, %s271
        %s273 = smul.u32 2, %s21
      $region44: #{dgcnn_semseg_forward.8} parent=35 // pred_fallthru
        _
    $region36: #{dgcnn_semseg_forward.8} parent=5 // pred_fallthru
      _
    %p274 = scmp.le.s32.totalorder 1, %s13
    %p275 = scmp.lt.s32.totalorder %s13, 3
    %p276 = pnand %p274, %p275
    %p277 = pneg %p276
    // Predicated region
    $region45: #{dgcnn_semseg_forward.8} parent=5 // pred_check
      _
    $region46: #{dgcnn_semseg_forward.8} parent=5 // pred_check_branch
      %279 = sbr.rel (%p276) target = $region48
    $region47: #{dgcnn_semseg_forward.8} parent=5 // pred_region
      %s280 = ssub.s32 %s13, 1
      %s281 = smul.u32 2, %s23
      %p282 = scmp.lt.s32.totalorder %s22, 1
      %s283 = scalar_select %p282, %s22, 1
      %p284 = scmp.lt.s32.totalorder %s281, 1
      %s285 = scalar_select %p284, %s281, 1
      %s286 = smul.addr %s283, 8
      %s287 = sadd.s32 %s285, %s286
      %s288 = smul.addr %s287, 8
      %s289 = scalar_lea.vmem %s0, %s288
      %p290 = pneg %p53
      %p291 = pneg %p50
      %s292 = smul.u32 2, %s23
      %p293 = scmp.lt.s32.totalorder %s22, 1
      %s294 = scalar_select %p293, %s22, 1
      %p295 = scmp.lt.s32.totalorder %s292, 1
      %s296 = scalar_select %p295, %s292, 1
      %s297 = smul.addr %s294, 2
      %s298 = sadd.s32 %s296, %s297
      %s299 = smul.addr %s298, 8
      %s300 = scalar_lea.vmem %s1, %s299
      %p301 = pneg %p81
      %p302 = pneg %p78
      %p303 = pneg %p102
      %p304 = pneg %p99
      %p305 = pneg %p123
      %p306 = pneg %p120
      %p307 = pneg %p144
      %p308 = pneg %p141
      %p309 = pneg %p165
      %p310 = pneg %p162
      %p311 = pneg %p186
      %p312 = pneg %p183
      %p313 = pneg %p214
      %p314 = pneg %p211
      %s315 = smul.u32 2, %s23
      %p316 = scmp.lt.s32.totalorder %s22, 1
      %s317 = scalar_select %p316, %s22, 1
      %p318 = scmp.lt.s32.totalorder %s315, 1
      %s319 = scalar_select %p318, %s315, 1
      %s320 = smul.addr %s317, 2
      %s321 = sadd.s32 %s319, %s320
      %s322 = smul.addr %s321, 8
      %s323 = scalar_lea.vmem %s7, %s322
      %s324 = smul.u32 2, %s23
      %p325 = scmp.lt.s32.totalorder %s22, 1
      %s326 = scalar_select %p325, %s22, 1
      %p327 = scmp.lt.s32.totalorder %s324, 1
      %s328 = scalar_select %p327, %s324, 1
      %s329 = smul.addr %s326, 8
      %s330 = sadd.s32 %s328, %s329
      %s331 = smul.addr %s330, 8
      %s332 = scalar_lea.vmem %s0, %s331
      %s333 = smul.u32 2, %s23
      %s334 = smul.u32 2, %s23
      %p335 = scmp.lt.s32.totalorder %s22, 1
      %s336 = scalar_select %p335, %s22, 1
      %p337 = scmp.lt.s32.totalorder %s334, 1
      %s338 = scalar_select %p337, %s334, 1
      %s339 = smul.addr %s336, 2
      %s340 = sadd.s32 %s338, %s339
      %s341 = smul.addr %s340, 8
      %s342 = scalar_lea.vmem %s1, %s341
      %s343 = smul.u32 2, %s23
      %s344 = smul.u32 2, %s23
      %p345 = scmp.lt.s32.totalorder %s22, 1
      %s346 = scalar_select %p345, %s22, 1
      %p347 = scmp.lt.s32.totalorder %s344, 1
      %s348 = scalar_select %p347, %s344, 1
      %s349 = smul.addr %s346, 2
      %s350 = sadd.s32 %s348, %s349
      %s351 = smul.addr %s350, 8
      %s352 = scalar_lea.vmem %s7, %s351
      %s353 = smul.u32 2, %s23
      %v354 = vld [vmem:[%s342] sm:$0xff]
      %v355 = vld [vmem:[%s342 + $0x8] sm:$0xff]
      %v356 = vld [vmem:[%s3] sm:$0xff]
      %v357 = vld [vmem:[%s3 + $0x8] sm:$0xff]
      %v358 = vld [vmem:[%s3 + $0x10] sm:$0xff]
      %v359 = vld [vmem:[%s3 + $0x18] sm:$0xff]
      %v360 = vld [vmem:[%s3 + $0x20] sm:$0xff]
      %v361 = vld [vmem:[%s3 + $0x28] sm:$0xff]
      %v362 = vld [vmem:[%s3 + $0x30] sm:$0xff]
      %v363 = vld [vmem:[%s3 + $0x38] sm:$0xff]
      %v364 = vld [vmem:[%s4] sm:$0x1]
      %v366 = vperm.slane %v364, 0
      %vm368 = vcmask 523264
      %v370 = vsel %vm368, %v354, 0
      %v373 = vsel %vm368, %v355, 0
      %375 = vmatpush.msra.mxu0 0.0
      %376 = vmatpush.msra.mxu0 0.0
      %377 = vmatpush.msra.mxu0 0.0
      %378 = vmatpush.msra.mxu0 0.0
      %379 = vmatpush.msra.mxu0 0.0
      %380 = vmatpush.msra.mxu0 0.0
      %381 = vmatpush.msra.mxu0 0.0
      %382 = vmatpush.msra.mxu0 0.0
      %383 = vmatpush.msra.mxu0 %v363
      %384 = vmatpush.msra.mxu0 %v362
      %385 = vmatpush.msra.mxu0 %v361
      %386 = vmatpush.msra.mxu0 %v360
      %387 = vmatpush.msra.mxu0 %v359
      %388 = vmatpush.msra.mxu0 %v358
      %389 = vmatpush.msra.mxu0 %v357
      %390 = vmatpush.msra.mxu0 %v356
      %391 = vmatmul.f32.gmra.mxu0 %v370
      %v392 = vpop.f32.mrf.mxu0
      %v393 = vadd.f32 %v366, %v392
      %394 = vmatmul.f32.gmra.mxu0 %v373
      %v395 = vpop.f32.mrf.mxu0
      %v396 = vadd.f32 %v366, %v395
      %397 = vdwg.mxu0
      %v398 = vld [vmem:[%s332] sm:$0xff]
      %v399 = vld [vmem:[%s332 + $0x8] sm:$0xff]
      %v400 = vld [vmem:[%s2] sm:$0xff]
      %v401 = vld [vmem:[%s2 + $0x8] sm:$0xff]
      %v402 = vld [vmem:[%s2 + $0x10] sm:$0xff]
      %v403 = vld [vmem:[%s2 + $0x18] sm:$0xff]
      %v404 = vld [vmem:[%s2 + $0x20] sm:$0xff]
      %v405 = vld [vmem:[%s2 + $0x28] sm:$0xff]
      %v406 = vld [vmem:[%s2 + $0x30] sm:$0xff]
      %v407 = vld [vmem:[%s2 + $0x38] sm:$0xff]
      %v409 = vsel %vm368, %v398, 0
      %v412 = vsel %vm368, %v399, 0
      %414 = vmatpush.msra.mxu0 0.0
      %415 = vmatpush.msra.mxu0 0.0
      %416 = vmatpush.msra.mxu0 0.0
      %417 = vmatpush.msra.mxu0 0.0
      %418 = vmatpush.msra.mxu0 0.0
      %419 = vmatpush.msra.mxu0 0.0
      %420 = vmatpush.msra.mxu0 0.0
      %421 = vmatpush.msra.mxu0 0.0
      %422 = vmatpush.msra.mxu0 %v407
      %423 = vmatpush.msra.mxu0 %v406
      %424 = vmatpush.msra.mxu0 %v405
      %425 = vmatpush.msra.mxu0 %v404
      %426 = vmatpush.msra.mxu0 %v403
      %427 = vmatpush.msra.mxu0 %v402
      %428 = vmatpush.msra.mxu0 %v401
      %429 = vmatpush.msra.mxu0 %v400
      %430 = vmatmul.f32.gmra.mxu0 %v409
      %v431 = vpop.f32.mrf.mxu0
      %v432 = vadd.f32 %v393, %v431
      %433 = vmatmul.f32.gmra.mxu0 %v412
      %v434 = vpop.f32.mrf.mxu0
      %v435 = vadd.f32 %v396, %v434
      %436 = vdwg.mxu0
      %vm437 = vcmp.gt.f32.partialorder %v432, 0.0
      %vm438 = vcmp.gt.f32.partialorder %v435, 0.0
      %v439 = vmul.f32 %v432, 0.2
      %v440 = vmul.f32 %v435, 0.2
      %v441 = vsel %vm437, %v432, %v439
      %v442 = vsel %vm438, %v435, %v440
      %v443 = vld [vmem:[%s5] sm:$0xff]
      %v444 = vld [vmem:[%s5 + $0x8] sm:$0xff]
      %v445 = vld [vmem:[%s5 + $0x10] sm:$0xff]
      %v446 = vld [vmem:[%s5 + $0x18] sm:$0xff]
      %v447 = vld [vmem:[%s5 + $0x20] sm:$0xff]
      %v448 = vld [vmem:[%s5 + $0x28] sm:$0xff]
      %v449 = vld [vmem:[%s5 + $0x30] sm:$0xff]
      %v450 = vld [vmem:[%s5 + $0x38] sm:$0xff]
      %v451 = vld [vmem:[%s6] sm:$0x1]
      %v453 = vperm.slane %v451, 0
      %v456 = vsel %vm368, %v441, 0
      %v459 = vsel %vm368, %v442, 0
      %461 = vmatpush.msra.mxu0 0.0
      %462 = vmatpush.msra.mxu0 0.0
      %463 = vmatpush.msra.mxu0 0.0
      %464 = vmatpush.msra.mxu0 0.0
      %465 = vmatpush.msra.mxu0 0.0
      %466 = vmatpush.msra.mxu0 0.0
      %467 = vmatpush.msra.mxu0 0.0
      %468 = vmatpush.msra.mxu0 0.0
      %469 = vmatpush.msra.mxu0 %v450
      %470 = vmatpush.msra.mxu0 %v449
      %471 = vmatpush.msra.mxu0 %v448
      %472 = vmatpush.msra.mxu0 %v447
      %473 = vmatpush.msra.mxu0 %v446
      %474 = vmatpush.msra.mxu0 %v445
      %475 = vmatpush.msra.mxu0 %v444
      %476 = vmatpush.msra.mxu0 %v443
      %477 = vmatmul.f32.gmra.mxu0 %v456
      %v478 = vpop.f32.mrf.mxu0
      %v479 = vadd.f32 %v453, %v478
      %480 = vmatmul.f32.gmra.mxu0 %v459
      %v481 = vpop.f32.mrf.mxu0
      %v482 = vadd.f32 %v453, %v481
      %483 = vdwg.mxu0
      %vm484 = vcmp.gt.f32.partialorder %v479, 0.0
      %vm485 = vcmp.gt.f32.partialorder %v482, 0.0
      %v486 = vmul.f32 %v479, 0.2
      %v487 = vmul.f32 %v482, 0.2
      %v488 = vsel %vm484, %v479, %v486
      %v489 = vsel %vm485, %v482, %v487
      %s490 = scalar_lea.vmem %s332, 16
      %v491 = vld [vmem:[%s490] sm:$0xff]
      %v492 = vld [vmem:[%s490 + $0x8] sm:$0xff]
      %v494 = vsel %vm368, %v491, 0
      %v497 = vsel %vm368, %v492, 0
      %499 = vmatpush.msra.mxu0 0.0
      %500 = vmatpush.msra.mxu0 0.0
      %501 = vmatpush.msra.mxu0 0.0
      %502 = vmatpush.msra.mxu0 0.0
      %503 = vmatpush.msra.mxu0 0.0
      %504 = vmatpush.msra.mxu0 0.0
      %505 = vmatpush.msra.mxu0 0.0
      %506 = vmatpush.msra.mxu0 0.0
      %507 = vmatpush.msra.mxu0 %v407
      %508 = vmatpush.msra.mxu0 %v406
      %509 = vmatpush.msra.mxu0 %v405
      %510 = vmatpush.msra.mxu0 %v404
      %511 = vmatpush.msra.mxu0 %v403
      %512 = vmatpush.msra.mxu0 %v402
      %513 = vmatpush.msra.mxu0 %v401
      %514 = vmatpush.msra.mxu0 %v400
      %515 = vmatmul.f32.gmra.mxu0 %v494
      %v516 = vpop.f32.mrf.mxu0
      %v517 = vadd.f32 %v393, %v516
      %518 = vmatmul.f32.gmra.mxu0 %v497
      %v519 = vpop.f32.mrf.mxu0
      %v520 = vadd.f32 %v396, %v519
      %521 = vdwg.mxu0
      %vm522 = vcmp.gt.f32.partialorder %v517, 0.0
      %vm523 = vcmp.gt.f32.partialorder %v520, 0.0
      %v524 = vmul.f32 %v517, 0.2
      %v525 = vmul.f32 %v520, 0.2
      %v526 = vsel %vm522, %v517, %v524
      %v527 = vsel %vm523, %v520, %v525
      %v529 = vsel %vm368, %v526, 0
      %v532 = vsel %vm368, %v527, 0
      %534 = vmatpush.msra.mxu0 0.0
      %535 = vmatpush.msra.mxu0 0.0
      %536 = vmatpush.msra.mxu0 0.0
      %537 = vmatpush.msra.mxu0 0.0
      %538 = vmatpush.msra.mxu0 0.0
      %539 = vmatpush.msra.mxu0 0.0
      %540 = vmatpush.msra.mxu0 0.0
      %541 = vmatpush.msra.mxu0 0.0
      %542 = vmatpush.msra.mxu0 %v450
      %543 = vmatpush.msra.mxu0 %v449
      %544 = vmatpush.msra.mxu0 %v448
      %545 = vmatpush.msra.mxu0 %v447
      %546 = vmatpush.msra.mxu0 %v446
      %547 = vmatpush.msra.mxu0 %v445
      %548 = vmatpush.msra.mxu0 %v444
      %549 = vmatpush.msra.mxu0 %v443
      %550 = vmatmul.f32.gmra.mxu0 %v529
      %v551 = vpop.f32.mrf.mxu0
      %v552 = vadd.f32 %v453, %v551
      %553 = vmatmul.f32.gmra.mxu0 %v532
      %v554 = vpop.f32.mrf.mxu0
      %v555 = vadd.f32 %v453, %v554
      %556 = vdwg.mxu0
      %vm557 = vcmp.gt.f32.partialorder %v552, 0.0
      %vm558 = vcmp.gt.f32.partialorder %v555, 0.0
      %v559 = vmul.f32 %v552, 0.2
      %v560 = vmul.f32 %v555, 0.2
      %v561 = vsel %vm557, %v552, %v559
      %v562 = vsel %vm558, %v555, %v560
      %v563 = vmax.f32 %v488, %v561
      %v564 = vmax.f32 %v489, %v562
      %s565 = scalar_lea.vmem %s332, 32
      %v566 = vld [vmem:[%s565] sm:$0xff]
      %v567 = vld [vmem:[%s565 + $0x8] sm:$0xff]
      %v569 = vsel %vm368, %v566, 0
      %v572 = vsel %vm368, %v567, 0
      %574 = vmatpush.msra.mxu0 0.0
      %575 = vmatpush.msra.mxu0 0.0
      %576 = vmatpush.msra.mxu0 0.0
      %577 = vmatpush.msra.mxu0 0.0
      %578 = vmatpush.msra.mxu0 0.0
      %579 = vmatpush.msra.mxu0 0.0
      %580 = vmatpush.msra.mxu0 0.0
      %581 = vmatpush.msra.mxu0 0.0
      %582 = vmatpush.msra.mxu0 %v407
      %583 = vmatpush.msra.mxu0 %v406
      %584 = vmatpush.msra.mxu0 %v405
      %585 = vmatpush.msra.mxu0 %v404
      %586 = vmatpush.msra.mxu0 %v403
      %587 = vmatpush.msra.mxu0 %v402
      %588 = vmatpush.msra.mxu0 %v401
      %589 = vmatpush.msra.mxu0 %v400
      %590 = vmatmul.f32.gmra.mxu0 %v569
      %v591 = vpop.f32.mrf.mxu0
      %v592 = vadd.f32 %v393, %v591
      %593 = vmatmul.f32.gmra.mxu0 %v572
      %v594 = vpop.f32.mrf.mxu0
      %v595 = vadd.f32 %v396, %v594
      %596 = vdwg.mxu0
      %vm597 = vcmp.gt.f32.partialorder %v592, 0.0
      %vm598 = vcmp.gt.f32.partialorder %v595, 0.0
      %v599 = vmul.f32 %v592, 0.2
      %v600 = vmul.f32 %v595, 0.2
      %v601 = vsel %vm597, %v592, %v599
      %v602 = vsel %vm598, %v595, %v600
      %v604 = vsel %vm368, %v601, 0
      %v607 = vsel %vm368, %v602, 0
      %609 = vmatpush.msra.mxu0 0.0
      %610 = vmatpush.msra.mxu0 0.0
      %611 = vmatpush.msra.mxu0 0.0
      %612 = vmatpush.msra.mxu0 0.0
      %613 = vmatpush.msra.mxu0 0.0
      %614 = vmatpush.msra.mxu0 0.0
      %615 = vmatpush.msra.mxu0 0.0
      %616 = vmatpush.msra.mxu0 0.0
      %617 = vmatpush.msra.mxu0 %v450
      %618 = vmatpush.msra.mxu0 %v449
      %619 = vmatpush.msra.mxu0 %v448
      %620 = vmatpush.msra.mxu0 %v447
      %621 = vmatpush.msra.mxu0 %v446
      %622 = vmatpush.msra.mxu0 %v445
      %623 = vmatpush.msra.mxu0 %v444
      %624 = vmatpush.msra.mxu0 %v443
      %625 = vmatmul.f32.gmra.mxu0 %v604
      %v626 = vpop.f32.mrf.mxu0
      %v627 = vadd.f32 %v453, %v626
      %628 = vmatmul.f32.gmra.mxu0 %v607
      %v629 = vpop.f32.mrf.mxu0
      %v630 = vadd.f32 %v453, %v629
      %631 = vdwg.mxu0
      %vm632 = vcmp.gt.f32.partialorder %v627, 0.0
      %vm633 = vcmp.gt.f32.partialorder %v630, 0.0
      %v634 = vmul.f32 %v627, 0.2
      %v635 = vmul.f32 %v630, 0.2
      %v636 = vsel %vm632, %v627, %v634
      %v637 = vsel %vm633, %v630, %v635
      %v638 = vmax.f32 %v563, %v636
      %v639 = vmax.f32 %v564, %v637
      %s640 = scalar_lea.vmem %s332, 48
      %v641 = vld [vmem:[%s640] sm:$0xff]
      %v642 = vld [vmem:[%s640 + $0x8] sm:$0xff]
      %v644 = vsel %vm368, %v641, 0
      %v647 = vsel %vm368, %v642, 0
      %649 = vmatpush.msra.mxu0 0.0
      %650 = vmatpush.msra.mxu0 0.0
      %651 = vmatpush.msra.mxu0 0.0
      %652 = vmatpush.msra.mxu0 0.0
      %653 = vmatpush.msra.mxu0 0.0
      %654 = vmatpush.msra.mxu0 0.0
      %655 = vmatpush.msra.mxu0 0.0
      %656 = vmatpush.msra.mxu0 0.0
      %657 = vmatpush.msra.mxu0 %v407
      %658 = vmatpush.msra.mxu0 %v406
      %659 = vmatpush.msra.mxu0 %v405
      %660 = vmatpush.msra.mxu0 %v404
      %661 = vmatpush.msra.mxu0 %v403
      %662 = vmatpush.msra.mxu0 %v402
      %663 = vmatpush.msra.mxu0 %v401
      %664 = vmatpush.msra.mxu0 %v400
      %665 = vmatmul.f32.gmra.mxu0 %v644
      %v666 = vpop.f32.mrf.mxu0
      %v667 = vadd.f32 %v393, %v666
      %668 = vmatmul.f32.gmra.mxu0 %v647
      %v669 = vpop.f32.mrf.mxu0
      %v670 = vadd.f32 %v396, %v669
      %671 = vdwg.mxu0
      %vm672 = vcmp.gt.f32.partialorder %v667, 0.0
      %vm673 = vcmp.gt.f32.partialorder %v670, 0.0
      %v674 = vmul.f32 %v667, 0.2
      %v675 = vmul.f32 %v670, 0.2
      %v676 = vsel %vm672, %v667, %v674
      %v677 = vsel %vm673, %v670, %v675
      %v679 = vsel %vm368, %v676, 0
      %v682 = vsel %vm368, %v677, 0
      %684 = vmatpush.msra.mxu0 0.0
      %685 = vmatpush.msra.mxu0 0.0
      %686 = vmatpush.msra.mxu0 0.0
      %687 = vmatpush.msra.mxu0 0.0
      %688 = vmatpush.msra.mxu0 0.0
      %689 = vmatpush.msra.mxu0 0.0
      %690 = vmatpush.msra.mxu0 0.0
      %691 = vmatpush.msra.mxu0 0.0
      %692 = vmatpush.msra.mxu0 %v450
      %693 = vmatpush.msra.mxu0 %v449
      %694 = vmatpush.msra.mxu0 %v448
      %695 = vmatpush.msra.mxu0 %v447
      %696 = vmatpush.msra.mxu0 %v446
      %697 = vmatpush.msra.mxu0 %v445
      %698 = vmatpush.msra.mxu0 %v444
      %699 = vmatpush.msra.mxu0 %v443
      %700 = vmatmul.f32.gmra.mxu0 %v679
      %v701 = vpop.f32.mrf.mxu0
      %v702 = vadd.f32 %v453, %v701
      %703 = vmatmul.f32.gmra.mxu0 %v682
      %v704 = vpop.f32.mrf.mxu0
      %v705 = vadd.f32 %v453, %v704
      %706 = vdwg.mxu0
      %vm707 = vcmp.gt.f32.partialorder %v702, 0.0
      %vm708 = vcmp.gt.f32.partialorder %v705, 0.0
      %v709 = vmul.f32 %v702, 0.2
      %v710 = vmul.f32 %v705, 0.2
      %v711 = vsel %vm707, %v702, %v709
      %v712 = vsel %vm708, %v705, %v710
      %v713 = vmax.f32 %v638, %v711
      %v714 = vmax.f32 %v639, %v712
      %715 = vst.msk [vmem:[%s352] sm:$0xff] %vm368, %v713
      %716 = vst.msk [vmem:[%s352 + $0x8] sm:$0xff] %vm368, %v714
      %s717 = smul.u32 2, %s23
      %p718 = scmp.lt.s32.totalorder %s22, 1
      %s719 = scalar_select %p718, %s22, 1
      %p720 = scmp.lt.s32.totalorder %s717, 1
      %s721 = scalar_select %p720, %s717, 1
      %s722 = smul.addr %s719, 2
      %s723 = sadd.s32 %s721, %s722
      %s724 = smul.addr %s723, 8
      %s725 = scalar_lea.vmem %s7, %s724
      // Predicated region
      $region49: #{dgcnn_semseg_forward.8} parent=47 // pred_check
        %p726 = pneg %p211
      $region50: #{dgcnn_semseg_forward.8} parent=47 // pred_check_branch
        %728 = sbr.rel (%p726) target = $region52
      $region51: #{dgcnn_semseg_forward.8} parent=47 // pred_region
        %s729 = smul.u32 2, %s23
      $region52: #{dgcnn_semseg_forward.8} parent=47 // pred_fallthru
        _
    $region48: #{dgcnn_semseg_forward.8} parent=5 // pred_fallthru
      _
    %p730 = scmp.le.s32.totalorder 2, %s13
    // Predicated region
    $region53: #{dgcnn_semseg_forward.8} parent=5 // pred_check
      %p731 = pneg %p730
    $region54: #{dgcnn_semseg_forward.8} parent=5 // pred_check_branch
      %733 = sbr.rel (%p731) target = $region56
    $region55: #{dgcnn_semseg_forward.8} parent=5 // pred_region
      %s734 = ssub.s32 %s13, 2
      // Predicated region
      $region57: #{dgcnn_semseg_forward.8} parent=55 // pred_check
        %p735 = pneg %p217
      $region58: #{dgcnn_semseg_forward.8} parent=55 // pred_check_branch
        %737 = sbr.rel (%p735) target = $region60
      $region59: #{dgcnn_semseg_forward.8} parent=55 // pred_region
        %s738 = smul.u32 2, %s25
        %p739 = scmp.lt.s32.totalorder %s24, 1
        %s740 = scalar_select %p739, %s24, 1
        %p741 = scmp.lt.s32.totalorder %s738, 1
        %s742 = scalar_select %p741, %s738, 1
        %s743 = smul.addr %s740, 2
        %s744 = sadd.s32 %s742, %s743
        %s745 = smul.addr %s744, 8
        %s746 = scalar_lea.vmem %s7, %s745
      $region60: #{dgcnn_semseg_forward.8} parent=55 // pred_fallthru
        _
    $region56: #{dgcnn_semseg_forward.8} parent=5 // pred_fallthru
      _
  $region6: #{dgcnn_semseg_forward.8} parent=0 // loop_footer
    %s17 = sadd.s32 1, %s13
  $region7: #{dgcnn_semseg_forward.8} parent=0 // loop_footer_branch
    %12 = sbr.rel target = $region3
  $region8: #{dgcnn_semseg_forward.8} parent=0 // loop_exit
    _

// kernel: dgcnn_semseg_forward.10
$region0: #{dgcnn_semseg_forward.10}
  #allocation0 [shape = 'u32[]', space=smem, size = 0x4, offset = 0x4, fixed_abs, tag = 'smem constant byte address 0x4 - core index']
  #allocation1 [shape = 'u32[72,128]{1,0:T(1,128)}', space=vmem, size = 0x9000, scoped, tag = 'internal scratch']
  %s0 = inlined_call_operand.vmem [shape: f32[2,16,64], index: 0, kind: input, shape index: {}]
  %s1 = inlined_call_operand.vmem [shape: f32[2,16,64], index: 1, kind: input, shape index: {}]
  %s2 = inlined_call_operand.vmem [shape: f32[2,16,64], index: 2, kind: input, shape index: {}]
  %s3 = inlined_call_operand.vmem [shape: f32[64,64], index: 3, kind: input, shape index: {}]
  %s4 = inlined_call_operand.vmem [shape: f32[64,64], index: 4, kind: input, shape index: {}]
  %s5 = inlined_call_operand.vmem [shape: f32[64,64], index: 5, kind: input, shape index: {}]
  %s6 = inlined_call_operand.vmem [shape: f32[1,64], index: 6, kind: input, shape index: {}]
  %s7 = inlined_call_operand.vmem [shape: f32[2,1,64], index: 7, kind: output, shape index: {}]
  %s8 = sld [smem:[#allocation0]]
  $region65: #{dgcnn_semseg_forward.10} parent=0
    _
  %s10 = ssub.s32 1, %s8
  %s11 = scalar_select 0, %s10, %s8
  loop: start=0, step=1, limit=4
  $region2: #{dgcnn_semseg_forward.10} parent=0 // loop_pre_header
    _
  $region3: #{dgcnn_semseg_forward.10} parent=0 // loop_header
    %s13 = sphi 0, %s17
    %p14 = scmp.ge.s32.totalorder %s13, 4
    %s20 = sphi 0, %s32
    %s21 = sphi 0, %s28
    %s22 = sphi 0, %s20
    %s23 = sphi 0, %s21
    %s24 = sphi 0, %s22
    %s25 = sphi 0, %s23
    %s37 = sphi 0, %s39
    %s40 = sphi 0, %s37
    %s41 = sphi 0, %s40
    %s57 = sphi 0, %s41
    %s65 = sphi 0, %s67
    %s68 = sphi 0, %s65
    %s69 = sphi 0, %s68
    %s85 = sphi 0, %s69
    %s93 = sphi 0, %s95
    %s96 = sphi 0, %s93
    %s97 = sphi 0, %s96
    %s113 = sphi 0, %s97
    %s117 = sphi 0, %s117
    %s119 = sphi 0, %s117
    %s120 = sphi 0, %s119
    %s134 = sphi 0, %s120
    %s138 = sphi 0, %s138
    %s140 = sphi 0, %s138
    %s141 = sphi 0, %s140
    %s155 = sphi 0, %s141
    %s159 = sphi 0, %s159
    %s161 = sphi 0, %s159
    %s162 = sphi 0, %s161
    %s176 = sphi 0, %s162
    %s180 = sphi 0, %s180
    %s182 = sphi 0, %s180
    %s183 = sphi 0, %s182
    %s197 = sphi 0, %s183
    %s203 = sphi 0, %s205
    %s206 = sphi 0, %s203
    %s207 = sphi 0, %s206
    %s223 = sphi 0, %s207
  $region4: #{dgcnn_semseg_forward.10} parent=0 // loop_header_branch
    %16 = sbr.rel (%p14) target = $region8
  $region5: #{dgcnn_semseg_forward.10} parent=0 // loop_body
    %s18 = ssub.s32 %s13, 1
    %s19 = ssub.s32 %s13, 2
    %s26 = sadd.s32 1, %s21
    %p27 = scmp.ge.s32.totalorder %s26, 1
    %s28 = scalar_select %p27, 0, %s26
    %s29 = sadd.s32 1, %s20
    %s30 = scalar_select %p27, %s29, %s20
    %p31 = scmp.ge.s32.totalorder %s30, 2
    %s32 = scalar_select %p31, 0, %s30
    %s33 = ssub.s32 %s20, %s32
    %s34 = ssub.s32 %s21, %s28
    %s35 = sor.u32 %s33, %s34
    %p36 = scmp.eq.s32.totalorder %s35, 0
    %s38 = sadd.s32 %s37, 1
    %s39 = scalar_select %p36, %s37, %s38
    %p42 = pneg %p36
    %p43 = scmp.eq.s32.totalorder %s13, 1
    %p44 = por %p42, %p43
    %p45 = scmp.ne.s32.totalorder %s37, %s40
    %p46 = scmp.eq.s32.totalorder %s13, 0
    %p47 = por %p45, %p46
    %p48 = scmp.ne.s32.totalorder %s37, %s40
    %p49 = scmp.eq.s32.totalorder %s18, 1
    %p50 = por %p48, %p49
    %p51 = scmp.ne.s32.totalorder %s40, %s41
    %p52 = scmp.eq.s32.totalorder %s18, 0
    %p53 = por %p51, %p52
    %p54 = scmp.ne.s32.totalorder %s40, %s41
    %p55 = scmp.eq.s32.totalorder %s19, 1
    %p56 = por %p54, %p55
    %p58 = scmp.ne.s32.totalorder %s41, %s57
    %p59 = scmp.eq.s32.totalorder %s19, 0
    %p60 = por %p58, %p59
    %s61 = ssub.s32 %s20, %s32
    %s62 = ssub.s32 %s21, %s28
    %s63 = sor.u32 %s61, %s62
    %p64 = scmp.eq.s32.totalorder %s63, 0
    %s66 = sadd.s32 %s65, 1
    %s67 = scalar_select %p64, %s65, %s66
    %p70 = pneg %p64
    %p71 = scmp.eq.s32.totalorder %s13, 1
    %p72 = por %p70, %p71
    %p73 = scmp.ne.s32.totalorder %s65, %s68
    %p74 = scmp.eq.s32.totalorder %s13, 0
    %p75 = por %p73, %p74
    %p76 = scmp.ne.s32.totalorder %s65, %s68
    %p77 = scmp.eq.s32.totalorder %s18, 1
    %p78 = por %p76, %p77
    %p79 = scmp.ne.s32.totalorder %s68, %s69
    %p80 = scmp.eq.s32.totalorder %s18, 0
    %p81 = por %p79, %p80
    %p82 = scmp.ne.s32.totalorder %s68, %s69
    %p83 = scmp.eq.s32.totalorder %s19, 1
    %p84 = por %p82, %p83
    %p86 = scmp.ne.s32.totalorder %s69, %s85
    %p87 = scmp.eq.s32.totalorder %s19, 0
    %p88 = por %p86, %p87
    %s89 = ssub.s32 %s20, %s32
    %s90 = ssub.s32 %s21, %s28
    %s91 = sor.u32 %s89, %s90
    %p92 = scmp.eq.s32.totalorder %s91, 0
    %s94 = sadd.s32 %s93, 1
    %s95 = scalar_select %p92, %s93, %s94
    %p98 = pneg %p92
    %p99 = scmp.eq.s32.totalorder %s13, 1
    %p100 = por %p98, %p99
    %p101 = scmp.ne.s32.totalorder %s93, %s96
    %p102 = scmp.eq.s32.totalorder %s13, 0
    %p103 = por %p101, %p102
    %p104 = scmp.ne.s32.totalorder %s93, %s96
    %p105 = scmp.eq.s32.totalorder %s18, 1
    %p106 = por %p104, %p105
    %p107 = scmp.ne.s32.totalorder %s96, %s97
    %p108 = scmp.eq.s32.totalorder %s18, 0
    %p109 = por %p107, %p108
    %p110 = scmp.ne.s32.totalorder %s96, %s97
    %p111 = scmp.eq.s32.totalorder %s19, 1
    %p112 = por %p110, %p111
    %p114 = scmp.ne.s32.totalorder %s97, %s113
    %p115 = scmp.eq.s32.totalorder %s19, 0
    %p116 = por %p114, %p115
    %s118 = sadd.s32 %s117, 1
    %p121 = scmp.eq.s32.totalorder %s13, 1
    %p122 = scmp.ne.s32.totalorder %s117, %s119
    %p123 = scmp.eq.s32.totalorder %s13, 0
    %p124 = por %p122, %p123
    %p125 = scmp.ne.s32.totalorder %s117, %s119
    %p126 = scmp.eq.s32.totalorder %s18, 1
    %p127 = por %p125, %p126
    %p128 = scmp.ne.s32.totalorder %s119, %s120
    %p129 = scmp.eq.s32.totalorder %s18, 0
    %p130 = por %p128, %p129
    %p131 = scmp.ne.s32.totalorder %s119, %s120
    %p132 = scmp.eq.s32.totalorder %s19, 1
    %p133 = por %p131, %p132
    %p135 = scmp.ne.s32.totalorder %s120, %s134
    %p136 = scmp.eq.s32.totalorder %s19, 0
    %p137 = por %p135, %p136
    %s139 = sadd.s32 %s138, 1
    %p142 = scmp.eq.s32.totalorder %s13, 1
    %p143 = scmp.ne.s32.totalorder %s138, %s140
    %p144 = scmp.eq.s32.totalorder %s13, 0
    %p145 = por %p143, %p144
    %p146 = scmp.ne.s32.totalorder %s138, %s140
    %p147 = scmp.eq.s32.totalorder %s18, 1
    %p148 = por %p146, %p147
    %p149 = scmp.ne.s32.totalorder %s140, %s141
    %p150 = scmp.eq.s32.totalorder %s18, 0
    %p151 = por %p149, %p150
    %p152 = scmp.ne.s32.totalorder %s140, %s141
    %p153 = scmp.eq.s32.totalorder %s19, 1
    %p154 = por %p152, %p153
    %p156 = scmp.ne.s32.totalorder %s141, %s155
    %p157 = scmp.eq.s32.totalorder %s19, 0
    %p158 = por %p156, %p157
    %s160 = sadd.s32 %s159, 1
    %p163 = scmp.eq.s32.totalorder %s13, 1
    %p164 = scmp.ne.s32.totalorder %s159, %s161
    %p165 = scmp.eq.s32.totalorder %s13, 0
    %p166 = por %p164, %p165
    %p167 = scmp.ne.s32.totalorder %s159, %s161
    %p168 = scmp.eq.s32.totalorder %s18, 1
    %p169 = por %p167, %p168
    %p170 = scmp.ne.s32.totalorder %s161, %s162
    %p171 = scmp.eq.s32.totalorder %s18, 0
    %p172 = por %p170, %p171
    %p173 = scmp.ne.s32.totalorder %s161, %s162
    %p174 = scmp.eq.s32.totalorder %s19, 1
    %p175 = por %p173, %p174
    %p177 = scmp.ne.s32.totalorder %s162, %s176
    %p178 = scmp.eq.s32.totalorder %s19, 0
    %p179 = por %p177, %p178
    %s181 = sadd.s32 %s180, 1
    %p184 = scmp.eq.s32.totalorder %s13, 1
    %p185 = scmp.ne.s32.totalorder %s180, %s182
    %p186 = scmp.eq.s32.totalorder %s13, 0
    %p187 = por %p185, %p186
    %p188 = scmp.ne.s32.totalorder %s180, %s182
    %p189 = scmp.eq.s32.totalorder %s18, 1
    %p190 = por %p188, %p189
    %p191 = scmp.ne.s32.totalorder %s182, %s183
    %p192 = scmp.eq.s32.totalorder %s18, 0
    %p193 = por %p191, %p192
    %p194 = scmp.ne.s32.totalorder %s182, %s183
    %p195 = scmp.eq.s32.totalorder %s19, 1
    %p196 = por %p194, %p195
    %p198 = scmp.ne.s32.totalorder %s183, %s197
    %p199 = scmp.eq.s32.totalorder %s19, 0
    %p200 = por %p198, %p199
    %s201 = ssub.s32 %s20, %s32
    %p202 = scmp.eq.s32.totalorder %s201, 0
    %s204 = sadd.s32 %s203, 1
    %s205 = scalar_select %p202, %s203, %s204
    %p208 = pneg %p202
    %p209 = scmp.eq.s32.totalorder %s13, 1
    %p210 = por %p208, %p209
    %p211 = scmp.ne.s32.totalorder %s203, %s206
    %p212 = scmp.eq.s32.totalorder %s13, 0
    %p213 = por %p211, %p212
    %p214 = scmp.ne.s32.totalorder %s203, %s206
    %p215 = scmp.eq.s32.totalorder %s18, 1
    %p216 = por %p214, %p215
    %p217 = scmp.ne.s32.totalorder %s206, %s207
    %p218 = scmp.eq.s32.totalorder %s18, 0
    %p219 = por %p217, %p218
    %p220 = scmp.ne.s32.totalorder %s206, %s207
    %p221 = scmp.eq.s32.totalorder %s19, 1
    %p222 = por %p220, %p221
    %p224 = scmp.ne.s32.totalorder %s207, %s223
    %p225 = scmp.eq.s32.totalorder %s19, 0
    %p226 = por %p224, %p225
    %p227 = scmp.le.s32.totalorder 1, %s13
    %p228 = scmp.lt.s32.totalorder %s13, 3
    %p229 = pnand %p227, %p228
    %p230 = pneg %p229
    // Predicated region
    $region9: #{dgcnn_semseg_forward.10} parent=5 // pred_check
      _
    $region10: #{dgcnn_semseg_forward.10} parent=5 // pred_check_branch
      %232 = sbr.rel (%p229) target = $region12
    $region11: #{dgcnn_semseg_forward.10} parent=5 // pred_region
      %s233 = ssub.s32 %s13, 1
      // Predicated region
      $region13: #{dgcnn_semseg_forward.10} parent=11 // pred_check
        %p234 = pneg %p130
      $region14: #{dgcnn_semseg_forward.10} parent=11 // pred_check_branch
        %236 = sbr.rel (%p234) target = $region16
      $region15: #{dgcnn_semseg_forward.10} parent=11 // pred_region
        _
      $region16: #{dgcnn_semseg_forward.10} parent=11 // pred_fallthru
        _
      // Predicated region
      $region17: #{dgcnn_semseg_forward.10} parent=11 // pred_check
        %p237 = pneg %p151
      $region18: #{dgcnn_semseg_forward.10} parent=11 // pred_check_branch
        %239 = sbr.rel (%p237) target = $region20
      $region19: #{dgcnn_semseg_forward.10} parent=11 // pred_region
        _
      $region20: #{dgcnn_semseg_forward.10} parent=11 // pred_fallthru
        _
      // Predicated region
      $region21: #{dgcnn_semseg_forward.10} parent=11 // pred_check
        %p240 = pneg %p172
      $region22: #{dgcnn_semseg_forward.10} parent=11 // pred_check_branch
        %242 = sbr.rel (%p240) target = $region24
      $region23: #{dgcnn_semseg_forward.10} parent=11 // pred_region
        _
      $region24: #{dgcnn_semseg_forward.10} parent=11 // pred_fallthru
        _
      // Predicated region
      $region25: #{dgcnn_semseg_forward.10} parent=11 // pred_check
        %p243 = pneg %p193
      $region26: #{dgcnn_semseg_forward.10} parent=11 // pred_check_branch
        %245 = sbr.rel (%p243) target = $region28
      $region27: #{dgcnn_semseg_forward.10} parent=11 // pred_region
        _
      $region28: #{dgcnn_semseg_forward.10} parent=11 // pred_fallthru
        _
    $region12: #{dgcnn_semseg_forward.10} parent=5 // pred_fallthru
      _
    %p246 = scmp.lt.s32.totalorder %s13, 2
    // Predicated region
    $region29: #{dgcnn_semseg_forward.10} parent=5 // pred_check
      %p247 = pneg %p246
    $region30: #{dgcnn_semseg_forward.10} parent=5 // pred_check_branch
      %249 = sbr.rel (%p247) target = $region32
    $region31: #{dgcnn_semseg_forward.10} parent=5 // pred_region
      // Predicated region
      $region33: #{dgcnn_semseg_forward.10} parent=31 // pred_check
        %p250 = pneg %p47
      $region34: #{dgcnn_semseg_forward.10} parent=31 // pred_check_branch
        %252 = sbr.rel (%p250) target = $region36
      $region35: #{dgcnn_semseg_forward.10} parent=31 // pred_region
        %s253 = smul.u32 2, %s21
        %p254 = scmp.lt.s32.totalorder %s20, 1
        %s255 = scalar_select %p254, %s20, 1
        %p256 = scmp.lt.s32.totalorder %s253, 1
        %s257 = scalar_select %p256, %s253, 1
        %s258 = smul.addr %s255, 2
        %s259 = sadd.s32 %s257, %s258
        %s260 = smul.addr %s259, 8
        %s261 = scalar_lea.vmem %s0, %s260
        %s262 = smul.u32 2, %s21
      $region36: #{dgcnn_semseg_forward.10} parent=31 // pred_fallthru
        _
      // Predicated region
      $region37: #{dgcnn_semseg_forward.10} parent=31 // pred_check
        %p263 = pneg %p75
      $region38: #{dgcnn_semseg_forward.10} parent=31 // pred_check_branch
        %265 = sbr.rel (%p263) target = $region40
      $region39: #{dgcnn_semseg_forward.10} parent=31 // pred_region
        %s266 = smul.u32 2, %s21
        %p267 = scmp.lt.s32.totalorder %s20, 1
        %s268 = scalar_select %p267, %s20, 1
        %p269 = scmp.lt.s32.totalorder %s266, 1
        %s270 = scalar_select %p269, %s266, 1
        %s271 = smul.addr %s268, 2
        %s272 = sadd.s32 %s270, %s271
        %s273 = smul.addr %s272, 8
        %s274 = scalar_lea.vmem %s1, %s273
        %s275 = smul.u32 2, %s21
      $region40: #{dgcnn_semseg_forward.10} parent=31 // pred_fallthru
        _
      // Predicated region
      $region41: #{dgcnn_semseg_forward.10} parent=31 // pred_check
        %p276 = pneg %p103
      $region42: #{dgcnn_semseg_forward.10} parent=31 // pred_check_branch
        %278 = sbr.rel (%p276) target = $region44
      $region43: #{dgcnn_semseg_forward.10} parent=31 // pred_region
        %s279 = smul.u32 2, %s21
        %p280 = scmp.lt.s32.totalorder %s20, 1
        %s281 = scalar_select %p280, %s20, 1
        %p282 = scmp.lt.s32.totalorder %s279, 1
        %s283 = scalar_select %p282, %s279, 1
        %s284 = smul.addr %s281, 2
        %s285 = sadd.s32 %s283, %s284
        %s286 = smul.addr %s285, 8
        %s287 = scalar_lea.vmem %s2, %s286
        %s288 = smul.u32 2, %s21
      $region44: #{dgcnn_semseg_forward.10} parent=31 // pred_fallthru
        _
    $region32: #{dgcnn_semseg_forward.10} parent=5 // pred_fallthru
      _
    %p289 = scmp.le.s32.totalorder 1, %s13
    %p290 = scmp.lt.s32.totalorder %s13, 3
    %p291 = pnand %p289, %p290
    %p292 = pneg %p291
    // Predicated region
    $region45: #{dgcnn_semseg_forward.10} parent=5 // pred_check
      _
    $region46: #{dgcnn_semseg_forward.10} parent=5 // pred_check_branch
      %294 = sbr.rel (%p291) target = $region48
    $region47: #{dgcnn_semseg_forward.10} parent=5 // pred_region
      %s295 = ssub.s32 %s13, 1
      %s296 = smul.u32 2, %s23
      %p297 = scmp.lt.s32.totalorder %s22, 1
      %s298 = scalar_select %p297, %s22, 1
      %p299 = scmp.lt.s32.totalorder %s296, 1
      %s300 = scalar_select %p299, %s296, 1
      %s301 = smul.addr %s298, 2
      %s302 = sadd.s32 %s300, %s301
      %s303 = smul.addr %s302, 8
      %s304 = scalar_lea.vmem %s0, %s303
      %p305 = pneg %p53
      %p306 = pneg %p50
      %s307 = smul.u32 2, %s23
      %p308 = scmp.lt.s32.totalorder %s22, 1
      %s309 = scalar_select %p308, %s22, 1
      %p310 = scmp.lt.s32.totalorder %s307, 1
      %s311 = scalar_select %p310, %s307, 1
      %s312 = smul.addr %s309, 2
      %s313 = sadd.s32 %s311, %s312
      %s314 = smul.addr %s313, 8
      %s315 = scalar_lea.vmem %s1, %s314
      %p316 = pneg %p81
      %p317 = pneg %p78
      %s318 = smul.u32 2, %s23
      %p319 = scmp.lt.s32.totalorder %s22, 1
      %s320 = scalar_select %p319, %s22, 1
      %p321 = scmp.lt.s32.totalorder %s318, 1
      %s322 = scalar_select %p321, %s318, 1
      %s323 = smul.addr %s320, 2
      %s324 = sadd.s32 %s322, %s323
      %s325 = smul.addr %s324, 8
      %s326 = scalar_lea.vmem %s2, %s325
      %p327 = pneg %p109
      %p328 = pneg %p106
      %p329 = pneg %p130
      %p330 = pneg %p127
      %p331 = pneg %p151
      %p332 = pneg %p148
      %p333 = pneg %p172
      %p334 = pneg %p169
      %p335 = pneg %p193
      %p336 = pneg %p190
      %p337 = pneg %p219
      %p338 = pneg %p216
      %p339 = scmp.lt.s32.totalorder %s22, 1
      %s340 = scalar_select %p339, %s22, 1
      %s341 = scalar_lea.vmem %s7, %s340
      %s342 = smul.u32 2, %s23
      %p343 = scmp.lt.s32.totalorder %s22, 1
      %s344 = scalar_select %p343, %s22, 1
      %p345 = scmp.lt.s32.totalorder %s342, 1
      %s346 = scalar_select %p345, %s342, 1
      %s347 = smul.addr %s344, 2
      %s348 = sadd.s32 %s346, %s347
      %s349 = smul.addr %s348, 8
      %s350 = scalar_lea.vmem %s0, %s349
      %s351 = smul.u32 2, %s23
      %s352 = smul.u32 2, %s23
      %p353 = scmp.lt.s32.totalorder %s22, 1
      %s354 = scalar_select %p353, %s22, 1
      %p355 = scmp.lt.s32.totalorder %s352, 1
      %s356 = scalar_select %p355, %s352, 1
      %s357 = smul.addr %s354, 2
      %s358 = sadd.s32 %s356, %s357
      %s359 = smul.addr %s358, 8
      %s360 = scalar_lea.vmem %s1, %s359
      %s361 = smul.u32 2, %s23
      %s362 = smul.u32 2, %s23
      %p363 = scmp.lt.s32.totalorder %s22, 1
      %s364 = scalar_select %p363, %s22, 1
      %p365 = scmp.lt.s32.totalorder %s362, 1
      %s366 = scalar_select %p365, %s362, 1
      %s367 = smul.addr %s364, 2
      %s368 = sadd.s32 %s366, %s367
      %s369 = smul.addr %s368, 8
      %s370 = scalar_lea.vmem %s2, %s369
      %s371 = smul.u32 2, %s23
      %p372 = scmp.lt.s32.totalorder %s22, 1
      %s373 = scalar_select %p372, %s22, 1
      %s374 = scalar_lea.vmem %s7, %s373
      %p375 = scmp.eq.s32.totalorder %s23, 0
      // Predicated region
      $region49: #{dgcnn_semseg_forward.10} parent=47 // pred_check
        %p376 = pneg %p375
      $region50: #{dgcnn_semseg_forward.10} parent=47 // pred_check_branch
        %378 = sbr.rel (%p376) target = $region52
      $region51: #{dgcnn_semseg_forward.10} parent=47 // pred_region
        %vm379 = vcmask 516096
        %380 = vst.msk [vmem:[%s374] sm:$0x1] %vm379, -inf
      $region52: #{dgcnn_semseg_forward.10} parent=47 // pred_fallthru
        _
      %v381 = vld [vmem:[%s350] sm:$0xff]
      %v382 = vld [vmem:[%s350 + $0x8] sm:$0xff]
      %v383 = vld [vmem:[%s3] sm:$0xff]
      %v384 = vld [vmem:[%s3 + $0x8] sm:$0xff]
      %v385 = vld [vmem:[%s3 + $0x10] sm:$0xff]
      %v386 = vld [vmem:[%s3 + $0x18] sm:$0xff]
      %v387 = vld [vmem:[%s3 + $0x20] sm:$0xff]
      %v388 = vld [vmem:[%s3 + $0x28] sm:$0xff]
      %v389 = vld [vmem:[%s3 + $0x30] sm:$0xff]
      %v390 = vld [vmem:[%s3 + $0x38] sm:$0xff]
      %v391 = vld [vmem:[%s360] sm:$0xff]
      %v392 = vld [vmem:[%s360 + $0x8] sm:$0xff]
      %v393 = vld [vmem:[%s4] sm:$0xff]
      %v394 = vld [vmem:[%s4 + $0x8] sm:$0xff]
      %v395 = vld [vmem:[%s4 + $0x10] sm:$0xff]
      %v396 = vld [vmem:[%s4 + $0x18] sm:$0xff]
      %v397 = vld [vmem:[%s4 + $0x20] sm:$0xff]
      %v398 = vld [vmem:[%s4 + $0x28] sm:$0xff]
      %v399 = vld [vmem:[%s4 + $0x30] sm:$0xff]
      %v400 = vld [vmem:[%s4 + $0x38] sm:$0xff]
      %vm401 = vcmask 523264
      %v403 = vsel %vm401, %v391, 0
      %v406 = vsel %vm401, %v392, 0
      %408 = vmatpush.msra.mxu0 0.0
      %409 = vmatpush.msra.mxu0 0.0
      %410 = vmatpush.msra.mxu0 0.0
      %411 = vmatpush.msra.mxu0 0.0
      %412 = vmatpush.msra.mxu0 0.0
      %413 = vmatpush.msra.mxu0 0.0
      %414 = vmatpush.msra.mxu0 0.0
      %415 = vmatpush.msra.mxu0 0.0
      %416 = vmatpush.msra.mxu0 %v400
      %417 = vmatpush.msra.mxu0 %v399
      %418 = vmatpush.msra.mxu0 %v398
      %419 = vmatpush.msra.mxu0 %v397
      %420 = vmatpush.msra.mxu0 %v396
      %421 = vmatpush.msra.mxu0 %v395
      %422 = vmatpush.msra.mxu0 %v394
      %423 = vmatpush.msra.mxu0 %v393
      %424 = vmatmul.f32.gmra.mxu0 %v403
      %v425 = vpop.f32.mrf.mxu0
      %v426 = vadd.f32 0.0, %v425
      %427 = vmatmul.f32.gmra.mxu0 %v406
      %v428 = vpop.f32.mrf.mxu0
      %v429 = vadd.f32 0.0, %v428
      %430 = vdwg.mxu0
      %v432 = vsel %vm401, %v381, 0
      %v435 = vsel %vm401, %v382, 0
      %437 = vmatpush.msra.mxu0 0.0
      %438 = vmatpush.msra.mxu0 0.0
      %439 = vmatpush.msra.mxu0 0.0
      %440 = vmatpush.msra.mxu0 0.0
      %441 = vmatpush.msra.mxu0 0.0
      %442 = vmatpush.msra.mxu0 0.0
      %443 = vmatpush.msra.mxu0 0.0
      %444 = vmatpush.msra.mxu0 0.0
      %445 = vmatpush.msra.mxu0 %v390
      %446 = vmatpush.msra.mxu0 %v389
      %447 = vmatpush.msra.mxu0 %v388
      %448 = vmatpush.msra.mxu0 %v387
      %449 = vmatpush.msra.mxu0 %v386
      %450 = vmatpush.msra.mxu0 %v385
      %451 = vmatpush.msra.mxu0 %v384
      %452 = vmatpush.msra.mxu0 %v383
      %453 = vmatmul.f32.gmra.mxu0 %v432
      %v454 = vpop.f32.mrf.mxu0
      %v455 = vadd.f32 %v426, %v454
      %456 = vmatmul.f32.gmra.mxu0 %v435
      %v457 = vpop.f32.mrf.mxu0
      %v458 = vadd.f32 %v429, %v457
      %459 = vdwg.mxu0
      %v460 = vld [vmem:[%s370] sm:$0xff]
      %v461 = vld [vmem:[%s370 + $0x8] sm:$0xff]
      %v462 = vld [vmem:[%s5] sm:$0xff]
      %v463 = vld [vmem:[%s5 + $0x8] sm:$0xff]
      %v464 = vld [vmem:[%s5 + $0x10] sm:$0xff]
      %v465 = vld [vmem:[%s5 + $0x18] sm:$0xff]
      %v466 = vld [vmem:[%s5 + $0x20] sm:$0xff]
      %v467 = vld [vmem:[%s5 + $0x28] sm:$0xff]
      %v468 = vld [vmem:[%s5 + $0x30] sm:$0xff]
      %v469 = vld [vmem:[%s5 + $0x38] sm:$0xff]
      %v471 = vsel %vm401, %v460, 0
      %v474 = vsel %vm401, %v461, 0
      %476 = vmatpush.msra.mxu0 0.0
      %477 = vmatpush.msra.mxu0 0.0
      %478 = vmatpush.msra.mxu0 0.0
      %479 = vmatpush.msra.mxu0 0.0
      %480 = vmatpush.msra.mxu0 0.0
      %481 = vmatpush.msra.mxu0 0.0
      %482 = vmatpush.msra.mxu0 0.0
      %483 = vmatpush.msra.mxu0 0.0
      %484 = vmatpush.msra.mxu0 %v469
      %485 = vmatpush.msra.mxu0 %v468
      %486 = vmatpush.msra.mxu0 %v467
      %487 = vmatpush.msra.mxu0 %v466
      %488 = vmatpush.msra.mxu0 %v465
      %489 = vmatpush.msra.mxu0 %v464
      %490 = vmatpush.msra.mxu0 %v463
      %491 = vmatpush.msra.mxu0 %v462
      %492 = vmatmul.f32.gmra.mxu0 %v471
      %v493 = vpop.f32.mrf.mxu0
      %v494 = vadd.f32 0.0, %v493
      %495 = vmatmul.f32.gmra.mxu0 %v474
      %v496 = vpop.f32.mrf.mxu0
      %v497 = vadd.f32 0.0, %v496
      %498 = vdwg.mxu0
      %v499 = vadd.f32 %v455, %v494
      %v500 = vadd.f32 %v458, %v497
      %v501 = vld [vmem:[%s6] sm:$0x1]
      %v503 = vperm.slane %v501, 0
      %v505 = vadd.f32 %v499, %v503
      %v506 = vadd.f32 %v500, %v503
      %vm507 = vcmp.gt.f32.partialorder %v505, 0.0
      %vm508 = vcmp.gt.f32.partialorder %v506, 0.0
      %v509 = vmul.f32 %v505, 0.2
      %v510 = vmul.f32 %v506, 0.2
      %v511 = vsel %vm507, %v505, %v509
      %v512 = vsel %vm508, %v506, %v510
      %s513 = smul.u32 %s23, 16
      %v514 = vlaneseq
      %v515 = vshrl.u32 %v514, 7
      %v516 = vadd.s32 %v515, 8
      %v517 = vstv %s513
      %v518 = vadd.s32 %v517, %v515
      %v519 = vadd.s32 %v517, %v516
      %vm520 = vcmp.lt.s32.totalorder %v518, 16
      %vm521 = vcmp.lt.s32.totalorder %v519, 16
      %v522 = vsel %vm520, %v511, -inf
      %v523 = vsel %vm521, %v512, -inf
      %v524 = vld [vmem:[%s374] sm:$0x1]
      %v525 = vsel %vm401, %v522, -inf
      %v526 = vsel %vm401, %v523, -inf
      %v527 = vmax.f32 %v525, %v526
      %v528 = vrot.slane %v527, 4
      %v529 = vmax.f32 %v527, %v528
      %v530 = vrot.slane %v529, 2
      %v531 = vmax.f32 %v529, %v530
      %v532 = vrot.slane %v531, 1
      %v533 = vmax.f32 %v531, %v532
      %v534 = vmax.f32 %v524, %v533
      %vm535 = vcmask 516096
      %536 = vst.msk [vmem:[%s374] sm:$0x1] %vm535, %v534
      %p537 = scmp.lt.s32.totalorder %s22, 1
      %s538 = scalar_select %p537, %s22, 1
      %s539 = scalar_lea.vmem %s7, %s538
      // Predicated region
      $region53: #{dgcnn_semseg_forward.10} parent=47 // pred_check
        %p540 = pneg %p216
      $region54: #{dgcnn_semseg_forward.10} parent=47 // pred_check_branch
        %542 = sbr.rel (%p540) target = $region56
      $region55: #{dgcnn_semseg_forward.10} parent=47 // pred_region
        _
      $region56: #{dgcnn_semseg_forward.10} parent=47 // pred_fallthru
        _
    $region48: #{dgcnn_semseg_forward.10} parent=5 // pred_fallthru
      _
    %p543 = scmp.le.s32.totalorder 2, %s13
    // Predicated region
    $region57: #{dgcnn_semseg_forward.10} parent=5 // pred_check
      %p544 = pneg %p543
    $region58: #{dgcnn_semseg_forward.10} parent=5 // pred_check_branch
      %546 = sbr.rel (%p544) target = $region60
    $region59: #{dgcnn_semseg_forward.10} parent=5 // pred_region
      %s547 = ssub.s32 %s13, 2
      // Predicated region
      $region61: #{dgcnn_semseg_forward.10} parent=59 // pred_check
        %p548 = pneg %p222
      $region62: #{dgcnn_semseg_forward.10} parent=59 // pred_check_branch
        %550 = sbr.rel (%p548) target = $region64
      $region63: #{dgcnn_semseg_forward.10} parent=59 // pred_region
        %p551 = scmp.lt.s32.totalorder %s24, 1
        %s552 = scalar_select %p551, %s24, 1
        %s553 = scalar_lea.vmem %s7, %s552
      $region64: #{dgcnn_semseg_forward.10} parent=59 // pred_fallthru
        _
    $region60: #{dgcnn_semseg_forward.10} parent=5 // pred_fallthru
      _
  $region6: #{dgcnn_semseg_forward.10} parent=0 // loop_footer
    %s17 = sadd.s32 1, %s13
  $region7: #{dgcnn_semseg_forward.10} parent=0 // loop_footer_branch
    %12 = sbr.rel target = $region3
  $region8: #{dgcnn_semseg_forward.10} parent=0 // loop_exit
    _

// kernel: dgcnn_semseg_forward.11
$region0: #{dgcnn_semseg_forward.11}
  #allocation0 [shape = 'u32[]', space=smem, size = 0x4, offset = 0x4, fixed_abs, tag = 'smem constant byte address 0x4 - core index']
  #allocation1 [shape = 'u32[72,128]{1,0:T(1,128)}', space=vmem, size = 0x9000, scoped, tag = 'internal scratch']
  %s0 = inlined_call_operand.vmem [shape: f32[2,16,64], index: 0, kind: input, shape index: {}]
  %s1 = inlined_call_operand.vmem [shape: f32[2,16,64], index: 1, kind: input, shape index: {}]
  %s2 = inlined_call_operand.vmem [shape: f32[2,16,64], index: 2, kind: input, shape index: {}]
  %s3 = inlined_call_operand.vmem [shape: f32[2,1,512], index: 3, kind: input, shape index: {}]
  %s4 = inlined_call_operand.vmem [shape: f32[64,512], index: 4, kind: input, shape index: {}]
  %s5 = inlined_call_operand.vmem [shape: f32[64,512], index: 5, kind: input, shape index: {}]
  %s6 = inlined_call_operand.vmem [shape: f32[64,512], index: 6, kind: input, shape index: {}]
  %s7 = inlined_call_operand.vmem [shape: f32[512,256], index: 7, kind: input, shape index: {}]
  %s8 = inlined_call_operand.vmem [shape: f32[1,256], index: 8, kind: input, shape index: {}]
  %s9 = inlined_call_operand.vmem [shape: f32[256,13], index: 9, kind: input, shape index: {}]
  %s10 = inlined_call_operand.vmem [shape: f32[2,16,13], index: 10, kind: output, shape index: {}]
  %s11 = sld [smem:[#allocation0]]
  $region73: #{dgcnn_semseg_forward.11} parent=0
    _
  %s13 = ssub.s32 1, %s11
  %s14 = scalar_select 0, %s13, %s11
  loop: start=0, step=1, limit=4
  $region2: #{dgcnn_semseg_forward.11} parent=0 // loop_pre_header
    _
  $region3: #{dgcnn_semseg_forward.11} parent=0 // loop_header
    %s16 = sphi 0, %s20
    %p17 = scmp.ge.s32.totalorder %s16, 4
    %s23 = sphi 0, %s35
    %s24 = sphi 0, %s31
    %s25 = sphi 0, %s23
    %s26 = sphi 0, %s24
    %s27 = sphi 0, %s25
    %s28 = sphi 0, %s26
    %s40 = sphi 0, %s42
    %s43 = sphi 0, %s40
    %s44 = sphi 0, %s43
    %s60 = sphi 0, %s44
    %s68 = sphi 0, %s70
    %s71 = sphi 0, %s68
    %s72 = sphi 0, %s71
    %s88 = sphi 0, %s72
    %s96 = sphi 0, %s98
    %s99 = sphi 0, %s96
    %s100 = sphi 0, %s99
    %s116 = sphi 0, %s100
    %s122 = sphi 0, %s124
    %s125 = sphi 0, %s122
    %s126 = sphi 0, %s125
    %s142 = sphi 0, %s126
    %s146 = sphi 0, %s146
    %s148 = sphi 0, %s146
    %s149 = sphi 0, %s148
    %s163 = sphi 0, %s149
    %s167 = sphi 0, %s167
    %s169 = sphi 0, %s167
    %s170 = sphi 0, %s169
    %s184 = sphi 0, %s170
    %s188 = sphi 0, %s188
    %s190 = sphi 0, %s188
    %s191 = sphi 0, %s190
    %s205 = sphi 0, %s191
    %s209 = sphi 0, %s209
    %s211 = sphi 0, %s209
    %s212 = sphi 0, %s211
    %s226 = sphi 0, %s212
    %s230 = sphi 0, %s230
    %s232 = sphi 0, %s230
    %s233 = sphi 0, %s232
    %s247 = sphi 0, %s233
    %s251 = sphi 0, %s251
    %s253 = sphi 0, %s251
    %s254 = sphi 0, %s253
    %s268 = sphi 0, %s254
    %s276 = sphi 0, %s278
    %s279 = sphi 0, %s276
    %s280 = sphi 0, %s279
    %s296 = sphi 0, %s280
  $region4: #{dgcnn_semseg_forward.11} parent=0 // loop_header_branch
    %19 = sbr.rel (%p17) target = $region8
  $region5: #{dgcnn_semseg_forward.11} parent=0 // loop_body
    %s21 = ssub.s32 %s16, 1
    %s22 = ssub.s32 %s16, 2
    %s29 = sadd.s32 1, %s24
    %p30 = scmp.ge.s32.totalorder %s29, 1
    %s31 = scalar_select %p30, 0, %s29
    %s32 = sadd.s32 1, %s23
    %s33 = scalar_select %p30, %s32, %s23
    %p34 = scmp.ge.s32.totalorder %s33, 2
    %s35 = scalar_select %p34, 0, %s33
    %s36 = ssub.s32 %s23, %s35
    %s37 = ssub.s32 %s24, %s31
    %s38 = sor.u32 %s36, %s37
    %p39 = scmp.eq.s32.totalorder %s38, 0
    %s41 = sadd.s32 %s40, 1
    %s42 = scalar_select %p39, %s40, %s41
    %p45 = pneg %p39
    %p46 = scmp.eq.s32.totalorder %s16, 1
    %p47 = por %p45, %p46
    %p48 = scmp.ne.s32.totalorder %s40, %s43
    %p49 = scmp.eq.s32.totalorder %s16, 0
    %p50 = por %p48, %p49
    %p51 = scmp.ne.s32.totalorder %s40, %s43
    %p52 = scmp.eq.s32.totalorder %s21, 1
    %p53 = por %p51, %p52
    %p54 = scmp.ne.s32.totalorder %s43, %s44
    %p55 = scmp.eq.s32.totalorder %s21, 0
    %p56 = por %p54, %p55
    %p57 = scmp.ne.s32.totalorder %s43, %s44
    %p58 = scmp.eq.s32.totalorder %s22, 1
    %p59 = por %p57, %p58
    %p61 = scmp.ne.s32.totalorder %s44, %s60
    %p62 = scmp.eq.s32.totalorder %s22, 0
    %p63 = por %p61, %p62
    %s64 = ssub.s32 %s23, %s35
    %s65 = ssub.s32 %s24, %s31
    %s66 = sor.u32 %s64, %s65
    %p67 = scmp.eq.s32.totalorder %s66, 0
    %s69 = sadd.s32 %s68, 1
    %s70 = scalar_select %p67, %s68, %s69
    %p73 = pneg %p67
    %p74 = scmp.eq.s32.totalorder %s16, 1
    %p75 = por %p73, %p74
    %p76 = scmp.ne.s32.totalorder %s68, %s71
    %p77 = scmp.eq.s32.totalorder %s16, 0
    %p78 = por %p76, %p77
    %p79 = scmp.ne.s32.totalorder %s68, %s71
    %p80 = scmp.eq.s32.totalorder %s21, 1
    %p81 = por %p79, %p80
    %p82 = scmp.ne.s32.totalorder %s71, %s72
    %p83 = scmp.eq.s32.totalorder %s21, 0
    %p84 = por %p82, %p83
    %p85 = scmp.ne.s32.totalorder %s71, %s72
    %p86 = scmp.eq.s32.totalorder %s22, 1
    %p87 = por %p85, %p86
    %p89 = scmp.ne.s32.totalorder %s72, %s88
    %p90 = scmp.eq.s32.totalorder %s22, 0
    %p91 = por %p89, %p90
    %s92 = ssub.s32 %s23, %s35
    %s93 = ssub.s32 %s24, %s31
    %s94 = sor.u32 %s92, %s93
    %p95 = scmp.eq.s32.totalorder %s94, 0
    %s97 = sadd.s32 %s96, 1
    %s98 = scalar_select %p95, %s96, %s97
    %p101 = pneg %p95
    %p102 = scmp.eq.s32.totalorder %s16, 1
    %p103 = por %p101, %p102
    %p104 = scmp.ne.s32.totalorder %s96, %s99
    %p105 = scmp.eq.s32.totalorder %s16, 0
    %p106 = por %p104, %p105
    %p107 = scmp.ne.s32.totalorder %s96, %s99
    %p108 = scmp.eq.s32.totalorder %s21, 1
    %p109 = por %p107, %p108
    %p110 = scmp.ne.s32.totalorder %s99, %s100
    %p111 = scmp.eq.s32.totalorder %s21, 0
    %p112 = por %p110, %p111
    %p113 = scmp.ne.s32.totalorder %s99, %s100
    %p114 = scmp.eq.s32.totalorder %s22, 1
    %p115 = por %p113, %p114
    %p117 = scmp.ne.s32.totalorder %s100, %s116
    %p118 = scmp.eq.s32.totalorder %s22, 0
    %p119 = por %p117, %p118
    %s120 = ssub.s32 %s23, %s35
    %p121 = scmp.eq.s32.totalorder %s120, 0
    %s123 = sadd.s32 %s122, 1
    %s124 = scalar_select %p121, %s122, %s123
    %p127 = pneg %p121
    %p128 = scmp.eq.s32.totalorder %s16, 1
    %p129 = por %p127, %p128
    %p130 = scmp.ne.s32.totalorder %s122, %s125
    %p131 = scmp.eq.s32.totalorder %s16, 0
    %p132 = por %p130, %p131
    %p133 = scmp.ne.s32.totalorder %s122, %s125
    %p134 = scmp.eq.s32.totalorder %s21, 1
    %p135 = por %p133, %p134
    %p136 = scmp.ne.s32.totalorder %s125, %s126
    %p137 = scmp.eq.s32.totalorder %s21, 0
    %p138 = por %p136, %p137
    %p139 = scmp.ne.s32.totalorder %s125, %s126
    %p140 = scmp.eq.s32.totalorder %s22, 1
    %p141 = por %p139, %p140
    %p143 = scmp.ne.s32.totalorder %s126, %s142
    %p144 = scmp.eq.s32.totalorder %s22, 0
    %p145 = por %p143, %p144
    %s147 = sadd.s32 %s146, 1
    %p150 = scmp.eq.s32.totalorder %s16, 1
    %p151 = scmp.ne.s32.totalorder %s146, %s148
    %p152 = scmp.eq.s32.totalorder %s16, 0
    %p153 = por %p151, %p152
    %p154 = scmp.ne.s32.totalorder %s146, %s148
    %p155 = scmp.eq.s32.totalorder %s21, 1
    %p156 = por %p154, %p155
    %p157 = scmp.ne.s32.totalorder %s148, %s149
    %p158 = scmp.eq.s32.totalorder %s21, 0
    %p159 = por %p157, %p158
    %p160 = scmp.ne.s32.totalorder %s148, %s149
    %p161 = scmp.eq.s32.totalorder %s22, 1
    %p162 = por %p160, %p161
    %p164 = scmp.ne.s32.totalorder %s149, %s163
    %p165 = scmp.eq.s32.totalorder %s22, 0
    %p166 = por %p164, %p165
    %s168 = sadd.s32 %s167, 1
    %p171 = scmp.eq.s32.totalorder %s16, 1
    %p172 = scmp.ne.s32.totalorder %s167, %s169
    %p173 = scmp.eq.s32.totalorder %s16, 0
    %p174 = por %p172, %p173
    %p175 = scmp.ne.s32.totalorder %s167, %s169
    %p176 = scmp.eq.s32.totalorder %s21, 1
    %p177 = por %p175, %p176
    %p178 = scmp.ne.s32.totalorder %s169, %s170
    %p179 = scmp.eq.s32.totalorder %s21, 0
    %p180 = por %p178, %p179
    %p181 = scmp.ne.s32.totalorder %s169, %s170
    %p182 = scmp.eq.s32.totalorder %s22, 1
    %p183 = por %p181, %p182
    %p185 = scmp.ne.s32.totalorder %s170, %s184
    %p186 = scmp.eq.s32.totalorder %s22, 0
    %p187 = por %p185, %p186
    %s189 = sadd.s32 %s188, 1
    %p192 = scmp.eq.s32.totalorder %s16, 1
    %p193 = scmp.ne.s32.totalorder %s188, %s190
    %p194 = scmp.eq.s32.totalorder %s16, 0
    %p195 = por %p193, %p194
    %p196 = scmp.ne.s32.totalorder %s188, %s190
    %p197 = scmp.eq.s32.totalorder %s21, 1
    %p198 = por %p196, %p197
    %p199 = scmp.ne.s32.totalorder %s190, %s191
    %p200 = scmp.eq.s32.totalorder %s21, 0
    %p201 = por %p199, %p200
    %p202 = scmp.ne.s32.totalorder %s190, %s191
    %p203 = scmp.eq.s32.totalorder %s22, 1
    %p204 = por %p202, %p203
    %p206 = scmp.ne.s32.totalorder %s191, %s205
    %p207 = scmp.eq.s32.totalorder %s22, 0
    %p208 = por %p206, %p207
    %s210 = sadd.s32 %s209, 1
    %p213 = scmp.eq.s32.totalorder %s16, 1
    %p214 = scmp.ne.s32.totalorder %s209, %s211
    %p215 = scmp.eq.s32.totalorder %s16, 0
    %p216 = por %p214, %p215
    %p217 = scmp.ne.s32.totalorder %s209, %s211
    %p218 = scmp.eq.s32.totalorder %s21, 1
    %p219 = por %p217, %p218
    %p220 = scmp.ne.s32.totalorder %s211, %s212
    %p221 = scmp.eq.s32.totalorder %s21, 0
    %p222 = por %p220, %p221
    %p223 = scmp.ne.s32.totalorder %s211, %s212
    %p224 = scmp.eq.s32.totalorder %s22, 1
    %p225 = por %p223, %p224
    %p227 = scmp.ne.s32.totalorder %s212, %s226
    %p228 = scmp.eq.s32.totalorder %s22, 0
    %p229 = por %p227, %p228
    %s231 = sadd.s32 %s230, 1
    %p234 = scmp.eq.s32.totalorder %s16, 1
    %p235 = scmp.ne.s32.totalorder %s230, %s232
    %p236 = scmp.eq.s32.totalorder %s16, 0
    %p237 = por %p235, %p236
    %p238 = scmp.ne.s32.totalorder %s230, %s232
    %p239 = scmp.eq.s32.totalorder %s21, 1
    %p240 = por %p238, %p239
    %p241 = scmp.ne.s32.totalorder %s232, %s233
    %p242 = scmp.eq.s32.totalorder %s21, 0
    %p243 = por %p241, %p242
    %p244 = scmp.ne.s32.totalorder %s232, %s233
    %p245 = scmp.eq.s32.totalorder %s22, 1
    %p246 = por %p244, %p245
    %p248 = scmp.ne.s32.totalorder %s233, %s247
    %p249 = scmp.eq.s32.totalorder %s22, 0
    %p250 = por %p248, %p249
    %s252 = sadd.s32 %s251, 1
    %p255 = scmp.eq.s32.totalorder %s16, 1
    %p256 = scmp.ne.s32.totalorder %s251, %s253
    %p257 = scmp.eq.s32.totalorder %s16, 0
    %p258 = por %p256, %p257
    %p259 = scmp.ne.s32.totalorder %s251, %s253
    %p260 = scmp.eq.s32.totalorder %s21, 1
    %p261 = por %p259, %p260
    %p262 = scmp.ne.s32.totalorder %s253, %s254
    %p263 = scmp.eq.s32.totalorder %s21, 0
    %p264 = por %p262, %p263
    %p265 = scmp.ne.s32.totalorder %s253, %s254
    %p266 = scmp.eq.s32.totalorder %s22, 1
    %p267 = por %p265, %p266
    %p269 = scmp.ne.s32.totalorder %s254, %s268
    %p270 = scmp.eq.s32.totalorder %s22, 0
    %p271 = por %p269, %p270
    %s272 = ssub.s32 %s23, %s35
    %s273 = ssub.s32 %s24, %s31
    %s274 = sor.u32 %s272, %s273
    %p275 = scmp.eq.s32.totalorder %s274, 0
    %s277 = sadd.s32 %s276, 1
    %s278 = scalar_select %p275, %s276, %s277
    %p281 = pneg %p275
    %p282 = scmp.eq.s32.totalorder %s16, 1
    %p283 = por %p281, %p282
    %p284 = scmp.ne.s32.totalorder %s276, %s279
    %p285 = scmp.eq.s32.totalorder %s16, 0
    %p286 = por %p284, %p285
    %p287 = scmp.ne.s32.totalorder %s276, %s279
    %p288 = scmp.eq.s32.totalorder %s21, 1
    %p289 = por %p287, %p288
    %p290 = scmp.ne.s32.totalorder %s279, %s280
    %p291 = scmp.eq.s32.totalorder %s21, 0
    %p292 = por %p290, %p291
    %p293 = scmp.ne.s32.totalorder %s279, %s280
    %p294 = scmp.eq.s32.totalorder %s22, 1
    %p295 = por %p293, %p294
    %p297 = scmp.ne.s32.totalorder %s280, %s296
    %p298 = scmp.eq.s32.totalorder %s22, 0
    %p299 = por %p297, %p298
    %p300 = scmp.le.s32.totalorder 1, %s16
    %p301 = scmp.lt.s32.totalorder %s16, 3
    %p302 = pnand %p300, %p301
    %p303 = pneg %p302
    // Predicated region
    $region9: #{dgcnn_semseg_forward.11} parent=5 // pred_check
      _
    $region10: #{dgcnn_semseg_forward.11} parent=5 // pred_check_branch
      %305 = sbr.rel (%p302) target = $region12
    $region11: #{dgcnn_semseg_forward.11} parent=5 // pred_region
      %s306 = ssub.s32 %s16, 1
      // Predicated region
      $region13: #{dgcnn_semseg_forward.11} parent=11 // pred_check
        %p307 = pneg %p159
      $region14: #{dgcnn_semseg_forward.11} parent=11 // pred_check_branch
        %309 = sbr.rel (%p307) target = $region16
      $region15: #{dgcnn_semseg_forward.11} parent=11 // pred_region
        _
      $region16: #{dgcnn_semseg_forward.11} parent=11 // pred_fallthru
        _
      // Predicated region
      $region17: #{dgcnn_semseg_forward.11} parent=11 // pred_check
        %p310 = pneg %p180
      $region18: #{dgcnn_semseg_forward.11} parent=11 // pred_check_branch
        %312 = sbr.rel (%p310) target = $region20
      $region19: #{dgcnn_semseg_forward.11} parent=11 // pred_region
        _
      $region20: #{dgcnn_semseg_forward.11} parent=11 // pred_fallthru
        _
      // Predicated region
      $region21: #{dgcnn_semseg_forward.11} parent=11 // pred_check
        %p313 = pneg %p201
      $region22: #{dgcnn_semseg_forward.11} parent=11 // pred_check_branch
        %315 = sbr.rel (%p313) target = $region24
      $region23: #{dgcnn_semseg_forward.11} parent=11 // pred_region
        _
      $region24: #{dgcnn_semseg_forward.11} parent=11 // pred_fallthru
        _
      // Predicated region
      $region25: #{dgcnn_semseg_forward.11} parent=11 // pred_check
        %p316 = pneg %p222
      $region26: #{dgcnn_semseg_forward.11} parent=11 // pred_check_branch
        %318 = sbr.rel (%p316) target = $region28
      $region27: #{dgcnn_semseg_forward.11} parent=11 // pred_region
        _
      $region28: #{dgcnn_semseg_forward.11} parent=11 // pred_fallthru
        _
      // Predicated region
      $region29: #{dgcnn_semseg_forward.11} parent=11 // pred_check
        %p319 = pneg %p243
      $region30: #{dgcnn_semseg_forward.11} parent=11 // pred_check_branch
        %321 = sbr.rel (%p319) target = $region32
      $region31: #{dgcnn_semseg_forward.11} parent=11 // pred_region
        _
      $region32: #{dgcnn_semseg_forward.11} parent=11 // pred_fallthru
        _
      // Predicated region
      $region33: #{dgcnn_semseg_forward.11} parent=11 // pred_check
        %p322 = pneg %p264
      $region34: #{dgcnn_semseg_forward.11} parent=11 // pred_check_branch
        %324 = sbr.rel (%p322) target = $region36
      $region35: #{dgcnn_semseg_forward.11} parent=11 // pred_region
        _
      $region36: #{dgcnn_semseg_forward.11} parent=11 // pred_fallthru
        _
    $region12: #{dgcnn_semseg_forward.11} parent=5 // pred_fallthru
      _
    %p325 = scmp.lt.s32.totalorder %s16, 2
    // Predicated region
    $region37: #{dgcnn_semseg_forward.11} parent=5 // pred_check
      %p326 = pneg %p325
    $region38: #{dgcnn_semseg_forward.11} parent=5 // pred_check_branch
      %328 = sbr.rel (%p326) target = $region40
    $region39: #{dgcnn_semseg_forward.11} parent=5 // pred_region
      // Predicated region
      $region41: #{dgcnn_semseg_forward.11} parent=39 // pred_check
        %p329 = pneg %p50
      $region42: #{dgcnn_semseg_forward.11} parent=39 // pred_check_branch
        %331 = sbr.rel (%p329) target = $region44
      $region43: #{dgcnn_semseg_forward.11} parent=39 // pred_region
        %s332 = smul.u32 2, %s24
        %p333 = scmp.lt.s32.totalorder %s23, 1
        %s334 = scalar_select %p333, %s23, 1
        %p335 = scmp.lt.s32.totalorder %s332, 1
        %s336 = scalar_select %p335, %s332, 1
        %s337 = smul.addr %s334, 2
        %s338 = sadd.s32 %s336, %s337
        %s339 = smul.addr %s338, 8
        %s340 = scalar_lea.vmem %s0, %s339
        %s341 = smul.u32 2, %s24
      $region44: #{dgcnn_semseg_forward.11} parent=39 // pred_fallthru
        _
      // Predicated region
      $region45: #{dgcnn_semseg_forward.11} parent=39 // pred_check
        %p342 = pneg %p78
      $region46: #{dgcnn_semseg_forward.11} parent=39 // pred_check_branch
        %344 = sbr.rel (%p342) target = $region48
      $region47: #{dgcnn_semseg_forward.11} parent=39 // pred_region
        %s345 = smul.u32 2, %s24
        %p346 = scmp.lt.s32.totalorder %s23, 1
        %s347 = scalar_select %p346, %s23, 1
        %p348 = scmp.lt.s32.totalorder %s345, 1
        %s349 = scalar_select %p348, %s345, 1
        %s350 = smul.addr %s347, 2
        %s351 = sadd.s32 %s349, %s350
        %s352 = smul.addr %s351, 8
        %s353 = scalar_lea.vmem %s1, %s352
        %s354 = smul.u32 2, %s24
      $region48: #{dgcnn_semseg_forward.11} parent=39 // pred_fallthru
        _
      // Predicated region
      $region49: #{dgcnn_semseg_forward.11} parent=39 // pred_check
        %p355 = pneg %p106
      $region50: #{dgcnn_semseg_forward.11} parent=39 // pred_check_branch
        %357 = sbr.rel (%p355) target = $region52
      $region51: #{dgcnn_semseg_forward.11} parent=39 // pred_region
        %s358 = smul.u32 2, %s24
        %p359 = scmp.lt.s32.totalorder %s23, 1
        %s360 = scalar_select %p359, %s23, 1
        %p361 = scmp.lt.s32.totalorder %s358, 1
        %s362 = scalar_select %p361, %s358, 1
        %s363 = smul.addr %s360, 2
        %s364 = sadd.s32 %s362, %s363
        %s365 = smul.addr %s364, 8
        %s366 = scalar_lea.vmem %s2, %s365
        %s367 = smul.u32 2, %s24
      $region52: #{dgcnn_semseg_forward.11} parent=39 // pred_fallthru
        _
      // Predicated region
      $region53: #{dgcnn_semseg_forward.11} parent=39 // pred_check
        %p368 = pneg %p132
      $region54: #{dgcnn_semseg_forward.11} parent=39 // pred_check_branch
        %370 = sbr.rel (%p368) target = $region56
      $region55: #{dgcnn_semseg_forward.11} parent=39 // pred_region
        %p371 = scmp.lt.s32.totalorder %s23, 1
        %s372 = scalar_select %p371, %s23, 1
        %s373 = smul.addr %s372, 4
        %s374 = scalar_lea.vmem %s3, %s373
      $region56: #{dgcnn_semseg_forward.11} parent=39 // pred_fallthru
        _
    $region40: #{dgcnn_semseg_forward.11} parent=5 // pred_fallthru
      _
    %p375 = scmp.le.s32.totalorder 1, %s16
    %p376 = scmp.lt.s32.totalorder %s16, 3
    %p377 = pnand %p375, %p376
    %p378 = pneg %p377
    // Predicated region
    $region57: #{dgcnn_semseg_forward.11} parent=5 // pred_check
      _
    $region58: #{dgcnn_semseg_forward.11} parent=5 // pred_check_branch
      %380 = sbr.rel (%p377) target = $region60
    $region59: #{dgcnn_semseg_forward.11} parent=5 // pred_region
      %s381 = ssub.s32 %s16, 1
      %s382 = smul.u32 2, %s26
      %p383 = scmp.lt.s32.totalorder %s25, 1
      %s384 = scalar_select %p383, %s25, 1
      %p385 = scmp.lt.s32.totalorder %s382, 1
      %s386 = scalar_select %p385, %s382, 1
      %s387 = smul.addr %s384, 2
      %s388 = sadd.s32 %s386, %s387
      %s389 = smul.addr %s388, 8
      %s390 = scalar_lea.vmem %s0, %s389
      %p391 = pneg %p56
      %p392 = pneg %p53
      %s393 = smul.u32 2, %s26
      %p394 = scmp.lt.s32.totalorder %s25, 1
      %s395 = scalar_select %p394, %s25, 1
      %p396 = scmp.lt.s32.totalorder %s393, 1
      %s397 = scalar_select %p396, %s393, 1
      %s398 = smul.addr %s395, 2
      %s399 = sadd.s32 %s397, %s398
      %s400 = smul.addr %s399, 8
      %s401 = scalar_lea.vmem %s1, %s400
      %p402 = pneg %p84
      %p403 = pneg %p81
      %s404 = smul.u32 2, %s26
      %p405 = scmp.lt.s32.totalorder %s25, 1
      %s406 = scalar_select %p405, %s25, 1
      %p407 = scmp.lt.s32.totalorder %s404, 1
      %s408 = scalar_select %p407, %s404, 1
      %s409 = smul.addr %s406, 2
      %s410 = sadd.s32 %s408, %s409
      %s411 = smul.addr %s410, 8
      %s412 = scalar_lea.vmem %s2, %s411
      %p413 = pneg %p112
      %p414 = pneg %p109
      %p415 = scmp.lt.s32.totalorder %s25, 1
      %s416 = scalar_select %p415, %s25, 1
      %s417 = smul.addr %s416, 4
      %s418 = scalar_lea.vmem %s3, %s417
      %p419 = pneg %p138
      %p420 = pneg %p135
      %p421 = pneg %p159
      %p422 = pneg %p156
      %p423 = pneg %p180
      %p424 = pneg %p177
      %p425 = pneg %p201
      %p426 = pneg %p198
      %p427 = pneg %p222
      %p428 = pneg %p219
      %p429 = pneg %p243
      %p430 = pneg %p240
      %p431 = pneg %p264
      %p432 = pneg %p261
      %p433 = pneg %p292
      %p434 = pneg %p289
      %s435 = smul.u32 2, %s26
      %p436 = scmp.lt.s32.totalorder %s25, 1
      %s437 = scalar_select %p436, %s25, 1
      %p438 = scmp.lt.s32.totalorder %s435, 1
      %s439 = scalar_select %p438, %s435, 1
      %s440 = smul.addr %s437, 2
      %s441 = sadd.s32 %s439, %s440
      %s442 = smul.addr %s441, 8
      %s443 = scalar_lea.vmem %s10, %s442
      %s444 = smul.u32 2, %s26
      %p445 = scmp.lt.s32.totalorder %s25, 1
      %s446 = scalar_select %p445, %s25, 1
      %p447 = scmp.lt.s32.totalorder %s444, 1
      %s448 = scalar_select %p447, %s444, 1
      %s449 = smul.addr %s446, 2
      %s450 = sadd.s32 %s448, %s449
      %s451 = smul.addr %s450, 8
      %s452 = scalar_lea.vmem %s0, %s451
      %s453 = smul.u32 2, %s26
      %s454 = smul.u32 2, %s26
      %p455 = scmp.lt.s32.totalorder %s25, 1
      %s456 = scalar_select %p455, %s25, 1
      %p457 = scmp.lt.s32.totalorder %s454, 1
      %s458 = scalar_select %p457, %s454, 1
      %s459 = smul.addr %s456, 2
      %s460 = sadd.s32 %s458, %s459
      %s461 = smul.addr %s460, 8
      %s462 = scalar_lea.vmem %s1, %s461
      %s463 = smul.u32 2, %s26
      %s464 = smul.u32 2, %s26
      %p465 = scmp.lt.s32.totalorder %s25, 1
      %s466 = scalar_select %p465, %s25, 1
      %p467 = scmp.lt.s32.totalorder %s464, 1
      %s468 = scalar_select %p467, %s464, 1
      %s469 = smul.addr %s466, 2
      %s470 = sadd.s32 %s468, %s469
      %s471 = smul.addr %s470, 8
      %s472 = scalar_lea.vmem %s2, %s471
      %s473 = smul.u32 2, %s26
      %p474 = scmp.lt.s32.totalorder %s25, 1
      %s475 = scalar_select %p474, %s25, 1
      %s476 = smul.addr %s475, 4
      %s477 = scalar_lea.vmem %s3, %s476
      %s478 = smul.u32 2, %s26
      %p479 = scmp.lt.s32.totalorder %s25, 1
      %s480 = scalar_select %p479, %s25, 1
      %p481 = scmp.lt.s32.totalorder %s478, 1
      %s482 = scalar_select %p481, %s478, 1
      %s483 = smul.addr %s480, 2
      %s484 = sadd.s32 %s482, %s483
      %s485 = smul.addr %s484, 8
      %s486 = scalar_lea.vmem %s10, %s485
      %s487 = smul.u32 2, %s26
      %v488 = vld [vmem:[%s452] sm:$0xff]
      %v489 = vld [vmem:[%s452 + $0x8] sm:$0xff]
      %v490 = vld [vmem:[%s4] sm:$0xff]
      %v491 = vld [vmem:[%s4 + $0x8] sm:$0xff]
      %v492 = vld [vmem:[%s4 + $0x10] sm:$0xff]
      %v493 = vld [vmem:[%s4 + $0x18] sm:$0xff]
      %v494 = vld [vmem:[%s4 + $0x20] sm:$0xff]
      %v495 = vld [vmem:[%s4 + $0x28] sm:$0xff]
      %v496 = vld [vmem:[%s4 + $0x30] sm:$0xff]
      %v497 = vld [vmem:[%s4 + $0x38] sm:$0xff]
      %v498 = vld [vmem:[%s4 + $0x40] sm:$0xff]
      %v499 = vld [vmem:[%s4 + $0x48] sm:$0xff]
      %v500 = vld [vmem:[%s4 + $0x50] sm:$0xff]
      %v501 = vld [vmem:[%s4 + $0x58] sm:$0xff]
      %v502 = vld [vmem:[%s4 + $0x60] sm:$0xff]
      %v503 = vld [vmem:[%s4 + $0x68] sm:$0xff]
      %v504 = vld [vmem:[%s4 + $0x70] sm:$0xff]
      %v505 = vld [vmem:[%s4 + $0x78] sm:$0xff]
      %v506 = vld [vmem:[%s4 + $0x80] sm:$0xff]
      %v507 = vld [vmem:[%s4 + $0x88] sm:$0xff]
      %v508 = vld [vmem:[%s4 + $0x90] sm:$0xff]
      %v509 = vld [vmem:[%s4 + $0x98] sm:$0xff]
      %v510 = vld [vmem:[%s4 + $0xa0] sm:$0xff]
      %v511 = vld [vmem:[%s4 + $0xa8] sm:$0xff]
      %v512 = vld [vmem:[%s4 + $0xb0] sm:$0xff]
      %v513 = vld [vmem:[%s4 + $0xb8] sm:$0xff]
      %v514 = vld [vmem:[%s4 + $0xc0] sm:$0xff]
      %v515 = vld [vmem:[%s4 + $0xc8] sm:$0xff]
      %v516 = vld [vmem:[%s4 + $0xd0] sm:$0xff]
      %v517 = vld [vmem:[%s4 + $0xd8] sm:$0xff]
      %v518 = vld [vmem:[%s4 + $0xe0] sm:$0xff]
      %v519 = vld [vmem:[%s4 + $0xe8] sm:$0xff]
      %v520 = vld [vmem:[%s4 + $0xf0] sm:$0xff]
      %v521 = vld [vmem:[%s4 + $0xf8] sm:$0xff]
      %v522 = vld [vmem:[%s462] sm:$0xff]
      %v523 = vld [vmem:[%s462 + $0x8] sm:$0xff]
      %v524 = vld [vmem:[%s5] sm:$0xff]
      %v525 = vld [vmem:[%s5 + $0x8] sm:$0xff]
      %v526 = vld [vmem:[%s5 + $0x10] sm:$0xff]
      %v527 = vld [vmem:[%s5 + $0x18] sm:$0xff]
      %v528 = vld [vmem:[%s5 + $0x20] sm:$0xff]
      %v529 = vld [vmem:[%s5 + $0x28] sm:$0xff]
      %v530 = vld [vmem:[%s5 + $0x30] sm:$0xff]
      %v531 = vld [vmem:[%s5 + $0x38] sm:$0xff]
      %v532 = vld [vmem:[%s5 + $0x40] sm:$0xff]
      %v533 = vld [vmem:[%s5 + $0x48] sm:$0xff]
      %v534 = vld [vmem:[%s5 + $0x50] sm:$0xff]
      %v535 = vld [vmem:[%s5 + $0x58] sm:$0xff]
      %v536 = vld [vmem:[%s5 + $0x60] sm:$0xff]
      %v537 = vld [vmem:[%s5 + $0x68] sm:$0xff]
      %v538 = vld [vmem:[%s5 + $0x70] sm:$0xff]
      %v539 = vld [vmem:[%s5 + $0x78] sm:$0xff]
      %v540 = vld [vmem:[%s5 + $0x80] sm:$0xff]
      %v541 = vld [vmem:[%s5 + $0x88] sm:$0xff]
      %v542 = vld [vmem:[%s5 + $0x90] sm:$0xff]
      %v543 = vld [vmem:[%s5 + $0x98] sm:$0xff]
      %v544 = vld [vmem:[%s5 + $0xa0] sm:$0xff]
      %v545 = vld [vmem:[%s5 + $0xa8] sm:$0xff]
      %v546 = vld [vmem:[%s5 + $0xb0] sm:$0xff]
      %v547 = vld [vmem:[%s5 + $0xb8] sm:$0xff]
      %v548 = vld [vmem:[%s5 + $0xc0] sm:$0xff]
      %v549 = vld [vmem:[%s5 + $0xc8] sm:$0xff]
      %v550 = vld [vmem:[%s5 + $0xd0] sm:$0xff]
      %v551 = vld [vmem:[%s5 + $0xd8] sm:$0xff]
      %v552 = vld [vmem:[%s5 + $0xe0] sm:$0xff]
      %v553 = vld [vmem:[%s5 + $0xe8] sm:$0xff]
      %v554 = vld [vmem:[%s5 + $0xf0] sm:$0xff]
      %v555 = vld [vmem:[%s5 + $0xf8] sm:$0xff]
      %vm556 = vcmask 523264
      %v558 = vsel %vm556, %v522, 0
      %v561 = vsel %vm556, %v523, 0
      %563 = vmatpush.msra.mxu0 0.0
      %564 = vmatpush.msra.mxu0 0.0
      %565 = vmatpush.msra.mxu0 0.0
      %566 = vmatpush.msra.mxu0 0.0
      %567 = vmatpush.msra.mxu0 0.0
      %568 = vmatpush.msra.mxu0 0.0
      %569 = vmatpush.msra.mxu0 0.0
      %570 = vmatpush.msra.mxu0 0.0
      %571 = vmatpush.msra.mxu0 %v552
      %572 = vmatpush.msra.mxu0 %v548
      %573 = vmatpush.msra.mxu0 %v544
      %574 = vmatpush.msra.mxu0 %v540
      %575 = vmatpush.msra.mxu0 %v536
      %576 = vmatpush.msra.mxu0 %v532
      %577 = vmatpush.msra.mxu0 %v528
      %578 = vmatpush.msra.mxu0 %v524
      %579 = vmatmul.f32.gmra.mxu0 %v558
      %v580 = vpop.f32.mrf.mxu0
      %v581 = vadd.f32 0.0, %v580
      %582 = vmatmul.f32.gmra.mxu0 %v561
      %v583 = vpop.f32.mrf.mxu0
      %v584 = vadd.f32 0.0, %v583
      %585 = vdwg.mxu0
      %586 = vmatpush.msra.mxu0 0.0
      %587 = vmatpush.msra.mxu0 0.0
      %588 = vmatpush.msra.mxu0 0.0
      %589 = vmatpush.msra.mxu0 0.0
      %590 = vmatpush.msra.mxu0 0.0
      %591 = vmatpush.msra.mxu0 0.0
      %592 = vmatpush.msra.mxu0 0.0
      %593 = vmatpush.msra.mxu0 0.0
      %594 = vmatpush.msra.mxu0 %v553
      %595 = vmatpush.msra.mxu0 %v549
      %596 = vmatpush.msra.mxu0 %v545
      %597 = vmatpush.msra.mxu0 %v541
      %598 = vmatpush.msra.mxu0 %v537
      %599 = vmatpush.msra.mxu0 %v533
      %600 = vmatpush.msra.mxu0 %v529
      %601 = vmatpush.msra.mxu0 %v525
      %602 = vmatmul.f32.gmra.mxu0 %v558
      %v603 = vpop.f32.mrf.mxu0
      %v604 = vadd.f32 0.0, %v603
      %605 = vmatmul.f32.gmra.mxu0 %v561
      %v606 = vpop.f32.mrf.mxu0
      %v607 = vadd.f32 0.0, %v606
      %608 = vdwg.mxu0
      %609 = vmatpush.msra.mxu0 0.0
      %610 = vmatpush.msra.mxu0 0.0
      %611 = vmatpush.msra.mxu0 0.0
      %612 = vmatpush.msra.mxu0 0.0
      %613 = vmatpush.msra.mxu0 0.0
      %614 = vmatpush.msra.mxu0 0.0
      %615 = vmatpush.msra.mxu0 0.0
      %616 = vmatpush.msra.mxu0 0.0
      %617 = vmatpush.msra.mxu0 %v554
      %618 = vmatpush.msra.mxu0 %v550
      %619 = vmatpush.msra.mxu0 %v546
      %620 = vmatpush.msra.mxu0 %v542
      %621 = vmatpush.msra.mxu0 %v538
      %622 = vmatpush.msra.mxu0 %v534
      %623 = vmatpush.msra.mxu0 %v530
      %624 = vmatpush.msra.mxu0 %v526
      %625 = vmatmul.f32.gmra.mxu0 %v558
      %v626 = vpop.f32.mrf.mxu0
      %v627 = vadd.f32 0.0, %v626
      %628 = vmatmul.f32.gmra.mxu0 %v561
      %v629 = vpop.f32.mrf.mxu0
      %v630 = vadd.f32 0.0, %v629
      %631 = vdwg.mxu0
      %632 = vmatpush.msra.mxu0 0.0
      %633 = vmatpush.msra.mxu0 0.0
      %634 = vmatpush.msra.mxu0 0.0
      %635 = vmatpush.msra.mxu0 0.0
      %636 = vmatpush.msra.mxu0 0.0
      %637 = vmatpush.msra.mxu0 0.0
      %638 = vmatpush.msra.mxu0 0.0
      %639 = vmatpush.msra.mxu0 0.0
      %640 = vmatpush.msra.mxu0 %v555
      %641 = vmatpush.msra.mxu0 %v551
      %642 = vmatpush.msra.mxu0 %v547
      %643 = vmatpush.msra.mxu0 %v543
      %644 = vmatpush.msra.mxu0 %v539
      %645 = vmatpush.msra.mxu0 %v535
      %646 = vmatpush.msra.mxu0 %v531
      %647 = vmatpush.msra.mxu0 %v527
      %648 = vmatmul.f32.gmra.mxu0 %v558
      %v649 = vpop.f32.mrf.mxu0
      %v650 = vadd.f32 0.0, %v649
      %651 = vmatmul.f32.gmra.mxu0 %v561
      %v652 = vpop.f32.mrf.mxu0
      %v653 = vadd.f32 0.0, %v652
      %654 = vdwg.mxu0
      %v656 = vsel %vm556, %v488, 0
      %v659 = vsel %vm556, %v489, 0
      %661 = vmatpush.msra.mxu0 0.0
      %662 = vmatpush.msra.mxu0 0.0
      %663 = vmatpush.msra.mxu0 0.0
      %664 = vmatpush.msra.mxu0 0.0
      %665 = vmatpush.msra.mxu0 0.0
      %666 = vmatpush.msra.mxu0 0.0
      %667 = vmatpush.msra.mxu0 0.0
      %668 = vmatpush.msra.mxu0 0.0
      %669 = vmatpush.msra.mxu0 %v518
      %670 = vmatpush.msra.mxu0 %v514
      %671 = vmatpush.msra.mxu0 %v510
      %672 = vmatpush.msra.mxu0 %v506
      %673 = vmatpush.msra.mxu0 %v502
      %674 = vmatpush.msra.mxu0 %v498
      %675 = vmatpush.msra.mxu0 %v494
      %676 = vmatpush.msra.mxu0 %v490
      %677 = vmatmul.f32.gmra.mxu0 %v656
      %v678 = vpop.f32.mrf.mxu0
      %v679 = vadd.f32 %v581, %v678
      %680 = vmatmul.f32.gmra.mxu0 %v659
      %v681 = vpop.f32.mrf.mxu0
      %v682 = vadd.f32 %v584, %v681
      %683 = vdwg.mxu0
      %684 = vmatpush.msra.mxu0 0.0
      %685 = vmatpush.msra.mxu0 0.0
      %686 = vmatpush.msra.mxu0 0.0
      %687 = vmatpush.msra.mxu0 0.0
      %688 = vmatpush.msra.mxu0 0.0
      %689 = vmatpush.msra.mxu0 0.0
      %690 = vmatpush.msra.mxu0 0.0
      %691 = vmatpush.msra.mxu0 0.0
      %692 = vmatpush.msra.mxu0 %v519
      %693 = vmatpush.msra.mxu0 %v515
      %694 = vmatpush.msra.mxu0 %v511
      %695 = vmatpush.msra.mxu0 %v507
      %696 = vmatpush.msra.mxu0 %v503
      %697 = vmatpush.msra.mxu0 %v499
      %698 = vmatpush.msra.mxu0 %v495
      %699 = vmatpush.msra.mxu0 %v491
      %700 = vmatmul.f32.gmra.mxu0 %v656
      %v701 = vpop.f32.mrf.mxu0
      %v702 = vadd.f32 %v604, %v701
      %703 = vmatmul.f32.gmra.mxu0 %v659
      %v704 = vpop.f32.mrf.mxu0
      %v705 = vadd.f32 %v607, %v704
      %706 = vdwg.mxu0
      %707 = vmatpush.msra.mxu0 0.0
      %708 = vmatpush.msra.mxu0 0.0
      %709 = vmatpush.msra.mxu0 0.0
      %710 = vmatpush.msra.mxu0 0.0
      %711 = vmatpush.msra.mxu0 0.0
      %712 = vmatpush.msra.mxu0 0.0
      %713 = vmatpush.msra.mxu0 0.0
      %714 = vmatpush.msra.mxu0 0.0
      %715 = vmatpush.msra.mxu0 %v520
      %716 = vmatpush.msra.mxu0 %v516
      %717 = vmatpush.msra.mxu0 %v512
      %718 = vmatpush.msra.mxu0 %v508
      %719 = vmatpush.msra.mxu0 %v504
      %720 = vmatpush.msra.mxu0 %v500
      %721 = vmatpush.msra.mxu0 %v496
      %722 = vmatpush.msra.mxu0 %v492
      %723 = vmatmul.f32.gmra.mxu0 %v656
      %v724 = vpop.f32.mrf.mxu0
      %v725 = vadd.f32 %v627, %v724
      %726 = vmatmul.f32.gmra.mxu0 %v659
      %v727 = vpop.f32.mrf.mxu0
      %v728 = vadd.f32 %v630, %v727
      %729 = vdwg.mxu0
      %730 = vmatpush.msra.mxu0 0.0
      %731 = vmatpush.msra.mxu0 0.0
      %732 = vmatpush.msra.mxu0 0.0
      %733 = vmatpush.msra.mxu0 0.0
      %734 = vmatpush.msra.mxu0 0.0
      %735 = vmatpush.msra.mxu0 0.0
      %736 = vmatpush.msra.mxu0 0.0
      %737 = vmatpush.msra.mxu0 0.0
      %738 = vmatpush.msra.mxu0 %v521
      %739 = vmatpush.msra.mxu0 %v517
      %740 = vmatpush.msra.mxu0 %v513
      %741 = vmatpush.msra.mxu0 %v509
      %742 = vmatpush.msra.mxu0 %v505
      %743 = vmatpush.msra.mxu0 %v501
      %744 = vmatpush.msra.mxu0 %v497
      %745 = vmatpush.msra.mxu0 %v493
      %746 = vmatmul.f32.gmra.mxu0 %v656
      %v747 = vpop.f32.mrf.mxu0
      %v748 = vadd.f32 %v650, %v747
      %749 = vmatmul.f32.gmra.mxu0 %v659
      %v750 = vpop.f32.mrf.mxu0
      %v751 = vadd.f32 %v653, %v750
      %752 = vdwg.mxu0
      %v753 = vld [vmem:[%s472] sm:$0xff]
      %v754 = vld [vmem:[%s472 + $0x8] sm:$0xff]
      %v755 = vld [vmem:[%s6] sm:$0xff]
      %v756 = vld [vmem:[%s6 + $0x8] sm:$0xff]
      %v757 = vld [vmem:[%s6 + $0x10] sm:$0xff]
      %v758 = vld [vmem:[%s6 + $0x18] sm:$0xff]
      %v759 = vld [vmem:[%s6 + $0x20] sm:$0xff]
      %v760 = vld [vmem:[%s6 + $0x28] sm:$0xff]
      %v761 = vld [vmem:[%s6 + $0x30] sm:$0xff]
      %v762 = vld [vmem:[%s6 + $0x38] sm:$0xff]
      %v763 = vld [vmem:[%s6 + $0x40] sm:$0xff]
      %v764 = vld [vmem:[%s6 + $0x48] sm:$0xff]
      %v765 = vld [vmem:[%s6 + $0x50] sm:$0xff]
      %v766 = vld [vmem:[%s6 + $0x58] sm:$0xff]
      %v767 = vld [vmem:[%s6 + $0x60] sm:$0xff]
      %v768 = vld [vmem:[%s6 + $0x68] sm:$0xff]
      %v769 = vld [vmem:[%s6 + $0x70] sm:$0xff]
      %v770 = vld [vmem:[%s6 + $0x78] sm:$0xff]
      %v771 = vld [vmem:[%s6 + $0x80] sm:$0xff]
      %v772 = vld [vmem:[%s6 + $0x88] sm:$0xff]
      %v773 = vld [vmem:[%s6 + $0x90] sm:$0xff]
      %v774 = vld [vmem:[%s6 + $0x98] sm:$0xff]
      %v775 = vld [vmem:[%s6 + $0xa0] sm:$0xff]
      %v776 = vld [vmem:[%s6 + $0xa8] sm:$0xff]
      %v777 = vld [vmem:[%s6 + $0xb0] sm:$0xff]
      %v778 = vld [vmem:[%s6 + $0xb8] sm:$0xff]
      %v779 = vld [vmem:[%s6 + $0xc0] sm:$0xff]
      %v780 = vld [vmem:[%s6 + $0xc8] sm:$0xff]
      %v781 = vld [vmem:[%s6 + $0xd0] sm:$0xff]
      %v782 = vld [vmem:[%s6 + $0xd8] sm:$0xff]
      %v783 = vld [vmem:[%s6 + $0xe0] sm:$0xff]
      %v784 = vld [vmem:[%s6 + $0xe8] sm:$0xff]
      %v785 = vld [vmem:[%s6 + $0xf0] sm:$0xff]
      %v786 = vld [vmem:[%s6 + $0xf8] sm:$0xff]
      %v788 = vsel %vm556, %v753, 0
      %v791 = vsel %vm556, %v754, 0
      %793 = vmatpush.msra.mxu0 0.0
      %794 = vmatpush.msra.mxu0 0.0
      %795 = vmatpush.msra.mxu0 0.0
      %796 = vmatpush.msra.mxu0 0.0
      %797 = vmatpush.msra.mxu0 0.0
      %798 = vmatpush.msra.mxu0 0.0
      %799 = vmatpush.msra.mxu0 0.0
      %800 = vmatpush.msra.mxu0 0.0
      %801 = vmatpush.msra.mxu0 %v783
      %802 = vmatpush.msra.mxu0 %v779
      %803 = vmatpush.msra.mxu0 %v775
      %804 = vmatpush.msra.mxu0 %v771
      %805 = vmatpush.msra.mxu0 %v767
      %806 = vmatpush.msra.mxu0 %v763
      %807 = vmatpush.msra.mxu0 %v759
      %808 = vmatpush.msra.mxu0 %v755
      %809 = vmatmul.f32.gmra.mxu0 %v788
      %v810 = vpop.f32.mrf.mxu0
      %v811 = vadd.f32 0.0, %v810
      %812 = vmatmul.f32.gmra.mxu0 %v791
      %v813 = vpop.f32.mrf.mxu0
      %v814 = vadd.f32 0.0, %v813
      %815 = vdwg.mxu0
      %816 = vmatpush.msra.mxu0 0.0
      %817 = vmatpush.msra.mxu0 0.0
      %818 = vmatpush.msra.mxu0 0.0
      %819 = vmatpush.msra.mxu0 0.0
      %820 = vmatpush.msra.mxu0 0.0
      %821 = vmatpush.msra.mxu0 0.0
      %822 = vmatpush.msra.mxu0 0.0
      %823 = vmatpush.msra.mxu0 0.0
      %824 = vmatpush.msra.mxu0 %v784
      %825 = vmatpush.msra.mxu0 %v780
      %826 = vmatpush.msra.mxu0 %v776
      %827 = vmatpush.msra.mxu0 %v772
      %828 = vmatpush.msra.mxu0 %v768
      %829 = vmatpush.msra.mxu0 %v764
      %830 = vmatpush.msra.mxu0 %v760
      %831 = vmatpush.msra.mxu0 %v756
      %832 = vmatmul.f32.gmra.mxu0 %v788
      %v833 = vpop.f32.mrf.mxu0
      %v834 = vadd.f32 0.0, %v833
      %835 = vmatmul.f32.gmra.mxu0 %v791
      %v836 = vpop.f32.mrf.mxu0
      %v837 = vadd.f32 0.0, %v836
      %838 = vdwg.mxu0
      %839 = vmatpush.msra.mxu0 0.0
      %840 = vmatpush.msra.mxu0 0.0
      %841 = vmatpush.msra.mxu0 0.0
      %842 = vmatpush.msra.mxu0 0.0
      %843 = vmatpush.msra.mxu0 0.0
      %844 = vmatpush.msra.mxu0 0.0
      %845 = vmatpush.msra.mxu0 0.0
      %846 = vmatpush.msra.mxu0 0.0
      %847 = vmatpush.msra.mxu0 %v785
      %848 = vmatpush.msra.mxu0 %v781
      %849 = vmatpush.msra.mxu0 %v777
      %850 = vmatpush.msra.mxu0 %v773
      %851 = vmatpush.msra.mxu0 %v769
      %852 = vmatpush.msra.mxu0 %v765
      %853 = vmatpush.msra.mxu0 %v761
      %854 = vmatpush.msra.mxu0 %v757
      %855 = vmatmul.f32.gmra.mxu0 %v788
      %v856 = vpop.f32.mrf.mxu0
      %v857 = vadd.f32 0.0, %v856
      %858 = vmatmul.f32.gmra.mxu0 %v791
      %v859 = vpop.f32.mrf.mxu0
      %v860 = vadd.f32 0.0, %v859
      %861 = vdwg.mxu0
      %862 = vmatpush.msra.mxu0 0.0
      %863 = vmatpush.msra.mxu0 0.0
      %864 = vmatpush.msra.mxu0 0.0
      %865 = vmatpush.msra.mxu0 0.0
      %866 = vmatpush.msra.mxu0 0.0
      %867 = vmatpush.msra.mxu0 0.0
      %868 = vmatpush.msra.mxu0 0.0
      %869 = vmatpush.msra.mxu0 0.0
      %870 = vmatpush.msra.mxu0 %v786
      %871 = vmatpush.msra.mxu0 %v782
      %872 = vmatpush.msra.mxu0 %v778
      %873 = vmatpush.msra.mxu0 %v774
      %874 = vmatpush.msra.mxu0 %v770
      %875 = vmatpush.msra.mxu0 %v766
      %876 = vmatpush.msra.mxu0 %v762
      %877 = vmatpush.msra.mxu0 %v758
      %878 = vmatmul.f32.gmra.mxu0 %v788
      %v879 = vpop.f32.mrf.mxu0
      %v880 = vadd.f32 0.0, %v879
      %881 = vmatmul.f32.gmra.mxu0 %v791
      %v882 = vpop.f32.mrf.mxu0
      %v883 = vadd.f32 0.0, %v882
      %884 = vdwg.mxu0
      %v885 = vadd.f32 %v679, %v811
      %v886 = vadd.f32 %v702, %v834
      %v887 = vadd.f32 %v725, %v857
      %v888 = vadd.f32 %v748, %v880
      %v889 = vadd.f32 %v682, %v814
      %v890 = vadd.f32 %v705, %v837
      %v891 = vadd.f32 %v728, %v860
      %v892 = vadd.f32 %v751, %v883
      %v893 = vld [vmem:[%s477] sm:$0xf]
      %v895 = vperm.slane %v893, 0
      %v896 = vperm.slane %v893, 1
      %v897 = vperm.slane %v893, 2
      %v898 = vperm.slane %v893, 3
      %v903 = vadd.f32 %v885, %v895
      %v904 = vadd.f32 %v886, %v896
      %v905 = vadd.f32 %v887, %v897
      %v906 = vadd.f32 %v888, %v898
      %v907 = vadd.f32 %v889, %v895
      %v908 = vadd.f32 %v890, %v896
      %v909 = vadd.f32 %v891, %v897
      %v910 = vadd.f32 %v892, %v898
      %vm911 = vcmp.gt.f32.partialorder %v903, 0.0
      %vm912 = vcmp.gt.f32.partialorder %v904, 0.0
      %vm913 = vcmp.gt.f32.partialorder %v905, 0.0
      %vm914 = vcmp.gt.f32.partialorder %v906, 0.0
      %vm915 = vcmp.gt.f32.partialorder %v907, 0.0
      %vm916 = vcmp.gt.f32.partialorder %v908, 0.0
      %vm917 = vcmp.gt.f32.partialorder %v909, 0.0
      %vm918 = vcmp.gt.f32.partialorder %v910, 0.0
      %v919 = vmul.f32 %v903, 0.2
      %v920 = vmul.f32 %v904, 0.2
      %v921 = vmul.f32 %v905, 0.2
      %v922 = vmul.f32 %v906, 0.2
      %v923 = vmul.f32 %v907, 0.2
      %v924 = vmul.f32 %v908, 0.2
      %v925 = vmul.f32 %v909, 0.2
      %v926 = vmul.f32 %v910, 0.2
      %v927 = vsel %vm911, %v903, %v919
      %v928 = vsel %vm912, %v904, %v920
      %v929 = vsel %vm913, %v905, %v921
      %v930 = vsel %vm914, %v906, %v922
      %v931 = vsel %vm915, %v907, %v923
      %v932 = vsel %vm916, %v908, %v924
      %v933 = vsel %vm917, %v909, %v925
      %v934 = vsel %vm918, %v910, %v926
      %v935 = vld [vmem:[%s7] sm:$0xff]
      %v936 = vld [vmem:[%s7 + $0x8] sm:$0xff]
      %v937 = vld [vmem:[%s7 + $0x10] sm:$0xff]
      %v938 = vld [vmem:[%s7 + $0x18] sm:$0xff]
      %v939 = vld [vmem:[%s7 + $0x20] sm:$0xff]
      %v940 = vld [vmem:[%s7 + $0x28] sm:$0xff]
      %v941 = vld [vmem:[%s7 + $0x30] sm:$0xff]
      %v942 = vld [vmem:[%s7 + $0x38] sm:$0xff]
      %v943 = vld [vmem:[%s7 + $0x40] sm:$0xff]
      %v944 = vld [vmem:[%s7 + $0x48] sm:$0xff]
      %v945 = vld [vmem:[%s7 + $0x50] sm:$0xff]
      %v946 = vld [vmem:[%s7 + $0x58] sm:$0xff]
      %v947 = vld [vmem:[%s7 + $0x60] sm:$0xff]
      %v948 = vld [vmem:[%s7 + $0x68] sm:$0xff]
      %v949 = vld [vmem:[%s7 + $0x70] sm:$0xff]
      %v950 = vld [vmem:[%s7 + $0x78] sm:$0xff]
      %v951 = vld [vmem:[%s7 + $0x80] sm:$0xff]
      %v952 = vld [vmem:[%s7 + $0x88] sm:$0xff]
      %v953 = vld [vmem:[%s7 + $0x90] sm:$0xff]
      %v954 = vld [vmem:[%s7 + $0x98] sm:$0xff]
      %v955 = vld [vmem:[%s7 + $0xa0] sm:$0xff]
      %v956 = vld [vmem:[%s7 + $0xa8] sm:$0xff]
      %v957 = vld [vmem:[%s7 + $0xb0] sm:$0xff]
      %v958 = vld [vmem:[%s7 + $0xb8] sm:$0xff]
      %v959 = vld [vmem:[%s7 + $0xc0] sm:$0xff]
      %v960 = vld [vmem:[%s7 + $0xc8] sm:$0xff]
      %v961 = vld [vmem:[%s7 + $0xd0] sm:$0xff]
      %v962 = vld [vmem:[%s7 + $0xd8] sm:$0xff]
      %v963 = vld [vmem:[%s7 + $0xe0] sm:$0xff]
      %v964 = vld [vmem:[%s7 + $0xe8] sm:$0xff]
      %v965 = vld [vmem:[%s7 + $0xf0] sm:$0xff]
      %v966 = vld [vmem:[%s7 + $0xf8] sm:$0xff]
      %v967 = vld [vmem:[%s7 + $0x100] sm:$0xff]
      %v968 = vld [vmem:[%s7 + $0x108] sm:$0xff]
      %v969 = vld [vmem:[%s7 + $0x110] sm:$0xff]
      %v970 = vld [vmem:[%s7 + $0x118] sm:$0xff]
      %v971 = vld [vmem:[%s7 + $0x120] sm:$0xff]
      %v972 = vld [vmem:[%s7 + $0x128] sm:$0xff]
      %v973 = vld [vmem:[%s7 + $0x130] sm:$0xff]
      %v974 = vld [vmem:[%s7 + $0x138] sm:$0xff]
      %v975 = vld [vmem:[%s7 + $0x140] sm:$0xff]
      %v976 = vld [vmem:[%s7 + $0x148] sm:$0xff]
      %v977 = vld [vmem:[%s7 + $0x150] sm:$0xff]
      %v978 = vld [vmem:[%s7 + $0x158] sm:$0xff]
      %v979 = vld [vmem:[%s7 + $0x160] sm:$0xff]
      %v980 = vld [vmem:[%s7 + $0x168] sm:$0xff]
      %v981 = vld [vmem:[%s7 + $0x170] sm:$0xff]
      %v982 = vld [vmem:[%s7 + $0x178] sm:$0xff]
      %v983 = vld [vmem:[%s7 + $0x180] sm:$0xff]
      %v984 = vld [vmem:[%s7 + $0x188] sm:$0xff]
      %v985 = vld [vmem:[%s7 + $0x190] sm:$0xff]
      %v986 = vld [vmem:[%s7 + $0x198] sm:$0xff]
      %v987 = vld [vmem:[%s7 + $0x1a0] sm:$0xff]
      %v988 = vld [vmem:[%s7 + $0x1a8] sm:$0xff]
      %v989 = vld [vmem:[%s7 + $0x1b0] sm:$0xff]
      %v990 = vld [vmem:[%s7 + $0x1b8] sm:$0xff]
      %v991 = vld [vmem:[%s7 + $0x1c0] sm:$0xff]
      %v992 = vld [vmem:[%s7 + $0x1c8] sm:$0xff]
      %v993 = vld [vmem:[%s7 + $0x1d0] sm:$0xff]
      %v994 = vld [vmem:[%s7 + $0x1d8] sm:$0xff]
      %v995 = vld [vmem:[%s7 + $0x1e0] sm:$0xff]
      %v996 = vld [vmem:[%s7 + $0x1e8] sm:$0xff]
      %v997 = vld [vmem:[%s7 + $0x1f0] sm:$0xff]
      %v998 = vld [vmem:[%s7 + $0x1f8] sm:$0xff]
      %v999 = vld [vmem:[%s7 + $0x200] sm:$0xff]
      %v1000 = vld [vmem:[%s7 + $0x208] sm:$0xff]
      %v1001 = vld [vmem:[%s7 + $0x210] sm:$0xff]
      %v1002 = vld [vmem:[%s7 + $0x218] sm:$0xff]
      %v1003 = vld [vmem:[%s7 + $0x220] sm:$0xff]
      %v1004 = vld [vmem:[%s7 + $0x228] sm:$0xff]
      %v1005 = vld [vmem:[%s7 + $0x230] sm:$0xff]
      %v1006 = vld [vmem:[%s7 + $0x238] sm:$0xff]
      %v1007 = vld [vmem:[%s7 + $0x240] sm:$0xff]
      %v1008 = vld [vmem:[%s7 + $0x248] sm:$0xff]
      %v1009 = vld [vmem:[%s7 + $0x250] sm:$0xff]
      %v1010 = vld [vmem:[%s7 + $0x258] sm:$0xff]
      %v1011 = vld [vmem:[%s7 + $0x260] sm:$0xff]
      %v1012 = vld [vmem:[%s7 + $0x268] sm:$0xff]
      %v1013 = vld [vmem:[%s7 + $0x270] sm:$0xff]
      %v1014 = vld [vmem:[%s7 + $0x278] sm:$0xff]
      %v1015 = vld [vmem:[%s7 + $0x280] sm:$0xff]
      %v1016 = vld [vmem:[%s7 + $0x288] sm:$0xff]
      %v1017 = vld [vmem:[%s7 + $0x290] sm:$0xff]
      %v1018 = vld [vmem:[%s7 + $0x298] sm:$0xff]
      %v1019 = vld [vmem:[%s7 + $0x2a0] sm:$0xff]
      %v1020 = vld [vmem:[%s7 + $0x2a8] sm:$0xff]
      %v1021 = vld [vmem:[%s7 + $0x2b0] sm:$0xff]
      %v1022 = vld [vmem:[%s7 + $0x2b8] sm:$0xff]
      %v1023 = vld [vmem:[%s7 + $0x2c0] sm:$0xff]
      %v1024 = vld [vmem:[%s7 + $0x2c8] sm:$0xff]
      %v1025 = vld [vmem:[%s7 + $0x2d0] sm:$0xff]
      %v1026 = vld [vmem:[%s7 + $0x2d8] sm:$0xff]
      %v1027 = vld [vmem:[%s7 + $0x2e0] sm:$0xff]
      %v1028 = vld [vmem:[%s7 + $0x2e8] sm:$0xff]
      %v1029 = vld [vmem:[%s7 + $0x2f0] sm:$0xff]
      %v1030 = vld [vmem:[%s7 + $0x2f8] sm:$0xff]
      %v1031 = vld [vmem:[%s7 + $0x300] sm:$0xff]
      %v1032 = vld [vmem:[%s7 + $0x308] sm:$0xff]
      %v1033 = vld [vmem:[%s7 + $0x310] sm:$0xff]
      %v1034 = vld [vmem:[%s7 + $0x318] sm:$0xff]
      %v1035 = vld [vmem:[%s7 + $0x320] sm:$0xff]
      %v1036 = vld [vmem:[%s7 + $0x328] sm:$0xff]
      %v1037 = vld [vmem:[%s7 + $0x330] sm:$0xff]
      %v1038 = vld [vmem:[%s7 + $0x338] sm:$0xff]
      %v1039 = vld [vmem:[%s7 + $0x340] sm:$0xff]
      %v1040 = vld [vmem:[%s7 + $0x348] sm:$0xff]
      %v1041 = vld [vmem:[%s7 + $0x350] sm:$0xff]
      %v1042 = vld [vmem:[%s7 + $0x358] sm:$0xff]
      %v1043 = vld [vmem:[%s7 + $0x360] sm:$0xff]
      %v1044 = vld [vmem:[%s7 + $0x368] sm:$0xff]
      %v1045 = vld [vmem:[%s7 + $0x370] sm:$0xff]
      %v1046 = vld [vmem:[%s7 + $0x378] sm:$0xff]
      %v1047 = vld [vmem:[%s7 + $0x380] sm:$0xff]
      %v1048 = vld [vmem:[%s7 + $0x388] sm:$0xff]
      %v1049 = vld [vmem:[%s7 + $0x390] sm:$0xff]
      %v1050 = vld [vmem:[%s7 + $0x398] sm:$0xff]
      %v1051 = vld [vmem:[%s7 + $0x3a0] sm:$0xff]
      %v1052 = vld [vmem:[%s7 + $0x3a8] sm:$0xff]
      %v1053 = vld [vmem:[%s7 + $0x3b0] sm:$0xff]
      %v1054 = vld [vmem:[%s7 + $0x3b8] sm:$0xff]
      %v1055 = vld [vmem:[%s7 + $0x3c0] sm:$0xff]
      %v1056 = vld [vmem:[%s7 + $0x3c8] sm:$0xff]
      %v1057 = vld [vmem:[%s7 + $0x3d0] sm:$0xff]
      %v1058 = vld [vmem:[%s7 + $0x3d8] sm:$0xff]
      %v1059 = vld [vmem:[%s7 + $0x3e0] sm:$0xff]
      %v1060 = vld [vmem:[%s7 + $0x3e8] sm:$0xff]
      %v1061 = vld [vmem:[%s7 + $0x3f0] sm:$0xff]
      %v1062 = vld [vmem:[%s7 + $0x3f8] sm:$0xff]
      %v1063 = vld [vmem:[%s8] sm:$0x3]
      %v1065 = vperm.slane %v1063, 0
      %v1066 = vperm.slane %v1063, 1
      %1069 = vmatpush.msra.mxu0 %v965
      %1070 = vmatpush.msra.mxu0 %v963
      %1071 = vmatpush.msra.mxu0 %v961
      %1072 = vmatpush.msra.mxu0 %v959
      %1073 = vmatpush.msra.mxu0 %v957
      %1074 = vmatpush.msra.mxu0 %v955
      %1075 = vmatpush.msra.mxu0 %v953
      %1076 = vmatpush.msra.mxu0 %v951
      %1077 = vmatpush.msra.mxu0 %v949
      %1078 = vmatpush.msra.mxu0 %v947
      %1079 = vmatpush.msra.mxu0 %v945
      %1080 = vmatpush.msra.mxu0 %v943
      %1081 = vmatpush.msra.mxu0 %v941
      %1082 = vmatpush.msra.mxu0 %v939
      %1083 = vmatpush.msra.mxu0 %v937
      %1084 = vmatpush.msra.mxu0 %v935
      %1085 = vmatmul.f32.gmra.mxu0 %v927
      %v1086 = vpop.f32.mrf.mxu0
      %v1087 = vadd.f32 %v1065, %v1086
      %1088 = vmatmul.f32.gmra.mxu0 %v931
      %v1089 = vpop.f32.mrf.mxu0
      %v1090 = vadd.f32 %v1065, %v1089
      %1091 = vdwg.mxu0
      %1092 = vmatpush.msra.mxu0 %v997
      %1093 = vmatpush.msra.mxu0 %v995
      %1094 = vmatpush.msra.mxu0 %v993
      %1095 = vmatpush.msra.mxu0 %v991
      %1096 = vmatpush.msra.mxu0 %v989
      %1097 = vmatpush.msra.mxu0 %v987
      %1098 = vmatpush.msra.mxu0 %v985
      %1099 = vmatpush.msra.mxu0 %v983
      %1100 = vmatpush.msra.mxu0 %v981
      %1101 = vmatpush.msra.mxu0 %v979
      %1102 = vmatpush.msra.mxu0 %v977
      %1103 = vmatpush.msra.mxu0 %v975
      %1104 = vmatpush.msra.mxu0 %v973
      %1105 = vmatpush.msra.mxu0 %v971
      %1106 = vmatpush.msra.mxu0 %v969
      %1107 = vmatpush.msra.mxu0 %v967
      %1108 = vmatmul.f32.gmra.mxu0 %v928
      %v1109 = vpop.f32.mrf.mxu0
      %v1110 = vadd.f32 %v1087, %v1109
      %1111 = vmatmul.f32.gmra.mxu0 %v932
      %v1112 = vpop.f32.mrf.mxu0
      %v1113 = vadd.f32 %v1090, %v1112
      %1114 = vdwg.mxu0
      %1115 = vmatpush.msra.mxu0 %v1029
      %1116 = vmatpush.msra.mxu0 %v1027
      %1117 = vmatpush.msra.mxu0 %v1025
      %1118 = vmatpush.msra.mxu0 %v1023
      %1119 = vmatpush.msra.mxu0 %v1021
      %1120 = vmatpush.msra.mxu0 %v1019
      %1121 = vmatpush.msra.mxu0 %v1017
      %1122 = vmatpush.msra.mxu0 %v1015
      %1123 = vmatpush.msra.mxu0 %v1013
      %1124 = vmatpush.msra.mxu0 %v1011
      %1125 = vmatpush.msra.mxu0 %v1009
      %1126 = vmatpush.msra.mxu0 %v1007
      %1127 = vmatpush.msra.mxu0 %v1005
      %1128 = vmatpush.msra.mxu0 %v1003
      %1129 = vmatpush.msra.mxu0 %v1001
      %1130 = vmatpush.msra.mxu0 %v999
      %1131 = vmatmul.f32.gmra.mxu0 %v929
      %v1132 = vpop.f32.mrf.mxu0
      %v1133 = vadd.f32 %v1110, %v1132
      %1134 = vmatmul.f32.gmra.mxu0 %v933
      %v1135 = vpop.f32.mrf.mxu0
      %v1136 = vadd.f32 %v1113, %v1135
      %1137 = vdwg.mxu0
      %1138 = vmatpush.msra.mxu0 %v1061
      %1139 = vmatpush.msra.mxu0 %v1059
      %1140 = vmatpush.msra.mxu0 %v1057
      %1141 = vmatpush.msra.mxu0 %v1055
      %1142 = vmatpush.msra.mxu0 %v1053
      %1143 = vmatpush.msra.mxu0 %v1051
      %1144 = vmatpush.msra.mxu0 %v1049
      %1145 = vmatpush.msra.mxu0 %v1047
      %1146 = vmatpush.msra.mxu0 %v1045
      %1147 = vmatpush.msra.mxu0 %v1043
      %1148 = vmatpush.msra.mxu0 %v1041
      %1149 = vmatpush.msra.mxu0 %v1039
      %1150 = vmatpush.msra.mxu0 %v1037
      %1151 = vmatpush.msra.mxu0 %v1035
      %1152 = vmatpush.msra.mxu0 %v1033
      %1153 = vmatpush.msra.mxu0 %v1031
      %1154 = vmatmul.f32.gmra.mxu0 %v930
      %v1155 = vpop.f32.mrf.mxu0
      %v1156 = vadd.f32 %v1133, %v1155
      %1157 = vmatmul.f32.gmra.mxu0 %v934
      %v1158 = vpop.f32.mrf.mxu0
      %v1159 = vadd.f32 %v1136, %v1158
      %1160 = vdwg.mxu0
      %1161 = vmatpush.msra.mxu0 %v966
      %1162 = vmatpush.msra.mxu0 %v964
      %1163 = vmatpush.msra.mxu0 %v962
      %1164 = vmatpush.msra.mxu0 %v960
      %1165 = vmatpush.msra.mxu0 %v958
      %1166 = vmatpush.msra.mxu0 %v956
      %1167 = vmatpush.msra.mxu0 %v954
      %1168 = vmatpush.msra.mxu0 %v952
      %1169 = vmatpush.msra.mxu0 %v950
      %1170 = vmatpush.msra.mxu0 %v948
      %1171 = vmatpush.msra.mxu0 %v946
      %1172 = vmatpush.msra.mxu0 %v944
      %1173 = vmatpush.msra.mxu0 %v942
      %1174 = vmatpush.msra.mxu0 %v940
      %1175 = vmatpush.msra.mxu0 %v938
      %1176 = vmatpush.msra.mxu0 %v936
      %1177 = vmatmul.f32.gmra.mxu0 %v927
      %v1178 = vpop.f32.mrf.mxu0
      %v1179 = vadd.f32 %v1066, %v1178
      %1180 = vmatmul.f32.gmra.mxu0 %v931
      %v1181 = vpop.f32.mrf.mxu0
      %v1182 = vadd.f32 %v1066, %v1181
      %1183 = vdwg.mxu0
      %1184 = vmatpush.msra.mxu0 %v998
      %1185 = vmatpush.msra.mxu0 %v996
      %1186 = vmatpush.msra.mxu0 %v994
      %1187 = vmatpush.msra.mxu0 %v992
      %1188 = vmatpush.msra.mxu0 %v990
      %1189 = vmatpush.msra.mxu0 %v988
      %1190 = vmatpush.msra.mxu0 %v986
      %1191 = vmatpush.msra.mxu0 %v984
      %1192 = vmatpush.msra.mxu0 %v982
      %1193 = vmatpush.msra.mxu0 %v980
      %1194 = vmatpush.msra.mxu0 %v978
      %1195 = vmatpush.msra.mxu0 %v976
      %1196 = vmatpush.msra.mxu0 %v974
      %1197 = vmatpush.msra.mxu0 %v972
      %1198 = vmatpush.msra.mxu0 %v970
      %1199 = vmatpush.msra.mxu0 %v968
      %1200 = vmatmul.f32.gmra.mxu0 %v928
      %v1201 = vpop.f32.mrf.mxu0
      %v1202 = vadd.f32 %v1179, %v1201
      %1203 = vmatmul.f32.gmra.mxu0 %v932
      %v1204 = vpop.f32.mrf.mxu0
      %v1205 = vadd.f32 %v1182, %v1204
      %1206 = vdwg.mxu0
      %1207 = vmatpush.msra.mxu0 %v1030
      %1208 = vmatpush.msra.mxu0 %v1028
      %1209 = vmatpush.msra.mxu0 %v1026
      %1210 = vmatpush.msra.mxu0 %v1024
      %1211 = vmatpush.msra.mxu0 %v1022
      %1212 = vmatpush.msra.mxu0 %v1020
      %1213 = vmatpush.msra.mxu0 %v1018
      %1214 = vmatpush.msra.mxu0 %v1016
      %1215 = vmatpush.msra.mxu0 %v1014
      %1216 = vmatpush.msra.mxu0 %v1012
      %1217 = vmatpush.msra.mxu0 %v1010
      %1218 = vmatpush.msra.mxu0 %v1008
      %1219 = vmatpush.msra.mxu0 %v1006
      %1220 = vmatpush.msra.mxu0 %v1004
      %1221 = vmatpush.msra.mxu0 %v1002
      %1222 = vmatpush.msra.mxu0 %v1000
      %1223 = vmatmul.f32.gmra.mxu0 %v929
      %v1224 = vpop.f32.mrf.mxu0
      %v1225 = vadd.f32 %v1202, %v1224
      %1226 = vmatmul.f32.gmra.mxu0 %v933
      %v1227 = vpop.f32.mrf.mxu0
      %v1228 = vadd.f32 %v1205, %v1227
      %1229 = vdwg.mxu0
      %1230 = vmatpush.msra.mxu0 %v1062
      %1231 = vmatpush.msra.mxu0 %v1060
      %1232 = vmatpush.msra.mxu0 %v1058
      %1233 = vmatpush.msra.mxu0 %v1056
      %1234 = vmatpush.msra.mxu0 %v1054
      %1235 = vmatpush.msra.mxu0 %v1052
      %1236 = vmatpush.msra.mxu0 %v1050
      %1237 = vmatpush.msra.mxu0 %v1048
      %1238 = vmatpush.msra.mxu0 %v1046
      %1239 = vmatpush.msra.mxu0 %v1044
      %1240 = vmatpush.msra.mxu0 %v1042
      %1241 = vmatpush.msra.mxu0 %v1040
      %1242 = vmatpush.msra.mxu0 %v1038
      %1243 = vmatpush.msra.mxu0 %v1036
      %1244 = vmatpush.msra.mxu0 %v1034
      %1245 = vmatpush.msra.mxu0 %v1032
      %1246 = vmatmul.f32.gmra.mxu0 %v930
      %v1247 = vpop.f32.mrf.mxu0
      %v1248 = vadd.f32 %v1225, %v1247
      %1249 = vmatmul.f32.gmra.mxu0 %v934
      %v1250 = vpop.f32.mrf.mxu0
      %v1251 = vadd.f32 %v1228, %v1250
      %1252 = vdwg.mxu0
      %vm1253 = vcmp.gt.f32.partialorder %v1156, 0.0
      %vm1254 = vcmp.gt.f32.partialorder %v1248, 0.0
      %vm1255 = vcmp.gt.f32.partialorder %v1159, 0.0
      %vm1256 = vcmp.gt.f32.partialorder %v1251, 0.0
      %v1257 = vmul.f32 %v1156, 0.2
      %v1258 = vmul.f32 %v1248, 0.2
      %v1259 = vmul.f32 %v1159, 0.2
      %v1260 = vmul.f32 %v1251, 0.2
      %v1261 = vsel %vm1253, %v1156, %v1257
      %v1262 = vsel %vm1254, %v1248, %v1258
      %v1263 = vsel %vm1255, %v1159, %v1259
      %v1264 = vsel %vm1256, %v1251, %v1260
      %v1265 = vld [vmem:[%s9] sm:$0xff]
      %v1266 = vld [vmem:[%s9 + $0x8] sm:$0xff]
      %v1267 = vld [vmem:[%s9 + $0x10] sm:$0xff]
      %v1268 = vld [vmem:[%s9 + $0x18] sm:$0xff]
      %v1269 = vld [vmem:[%s9 + $0x20] sm:$0xff]
      %v1270 = vld [vmem:[%s9 + $0x28] sm:$0xff]
      %v1271 = vld [vmem:[%s9 + $0x30] sm:$0xff]
      %v1272 = vld [vmem:[%s9 + $0x38] sm:$0xff]
      %v1273 = vld [vmem:[%s9 + $0x40] sm:$0xff]
      %v1274 = vld [vmem:[%s9 + $0x48] sm:$0xff]
      %v1275 = vld [vmem:[%s9 + $0x50] sm:$0xff]
      %v1276 = vld [vmem:[%s9 + $0x58] sm:$0xff]
      %v1277 = vld [vmem:[%s9 + $0x60] sm:$0xff]
      %v1278 = vld [vmem:[%s9 + $0x68] sm:$0xff]
      %v1279 = vld [vmem:[%s9 + $0x70] sm:$0xff]
      %v1280 = vld [vmem:[%s9 + $0x78] sm:$0xff]
      %v1281 = vld [vmem:[%s9 + $0x80] sm:$0xff]
      %v1282 = vld [vmem:[%s9 + $0x88] sm:$0xff]
      %v1283 = vld [vmem:[%s9 + $0x90] sm:$0xff]
      %v1284 = vld [vmem:[%s9 + $0x98] sm:$0xff]
      %v1285 = vld [vmem:[%s9 + $0xa0] sm:$0xff]
      %v1286 = vld [vmem:[%s9 + $0xa8] sm:$0xff]
      %v1287 = vld [vmem:[%s9 + $0xb0] sm:$0xff]
      %v1288 = vld [vmem:[%s9 + $0xb8] sm:$0xff]
      %v1289 = vld [vmem:[%s9 + $0xc0] sm:$0xff]
      %v1290 = vld [vmem:[%s9 + $0xc8] sm:$0xff]
      %v1291 = vld [vmem:[%s9 + $0xd0] sm:$0xff]
      %v1292 = vld [vmem:[%s9 + $0xd8] sm:$0xff]
      %v1293 = vld [vmem:[%s9 + $0xe0] sm:$0xff]
      %v1294 = vld [vmem:[%s9 + $0xe8] sm:$0xff]
      %v1295 = vld [vmem:[%s9 + $0xf0] sm:$0xff]
      %v1296 = vld [vmem:[%s9 + $0xf8] sm:$0xff]
      %1297 = vmatpush.msra.mxu0 %v1280
      %1298 = vmatpush.msra.mxu0 %v1279
      %1299 = vmatpush.msra.mxu0 %v1278
      %1300 = vmatpush.msra.mxu0 %v1277
      %1301 = vmatpush.msra.mxu0 %v1276
      %1302 = vmatpush.msra.mxu0 %v1275
      %1303 = vmatpush.msra.mxu0 %v1274
      %1304 = vmatpush.msra.mxu0 %v1273
      %1305 = vmatpush.msra.mxu0 %v1272
      %1306 = vmatpush.msra.mxu0 %v1271
      %1307 = vmatpush.msra.mxu0 %v1270
      %1308 = vmatpush.msra.mxu0 %v1269
      %1309 = vmatpush.msra.mxu0 %v1268
      %1310 = vmatpush.msra.mxu0 %v1267
      %1311 = vmatpush.msra.mxu0 %v1266
      %1312 = vmatpush.msra.mxu0 %v1265
      %1313 = vmatmul.f32.gmra.mxu0 %v1261
      %v1314 = vpop.f32.mrf.mxu0
      %v1315 = vadd.f32 0.0, %v1314
      %1316 = vmatmul.f32.gmra.mxu0 %v1263
      %v1317 = vpop.f32.mrf.mxu0
      %v1318 = vadd.f32 0.0, %v1317
      %1319 = vdwg.mxu0
      %1320 = vmatpush.msra.mxu0 %v1296
      %1321 = vmatpush.msra.mxu0 %v1295
      %1322 = vmatpush.msra.mxu0 %v1294
      %1323 = vmatpush.msra.mxu0 %v1293
      %1324 = vmatpush.msra.mxu0 %v1292
      %1325 = vmatpush.msra.mxu0 %v1291
      %1326 = vmatpush.msra.mxu0 %v1290
      %1327 = vmatpush.msra.mxu0 %v1289
      %1328 = vmatpush.msra.mxu0 %v1288
      %1329 = vmatpush.msra.mxu0 %v1287
      %1330 = vmatpush.msra.mxu0 %v1286
      %1331 = vmatpush.msra.mxu0 %v1285
      %1332 = vmatpush.msra.mxu0 %v1284
      %1333 = vmatpush.msra.mxu0 %v1283
      %1334 = vmatpush.msra.mxu0 %v1282
      %1335 = vmatpush.msra.mxu0 %v1281
      %1336 = vmatmul.f32.gmra.mxu0 %v1262
      %v1337 = vpop.f32.mrf.mxu0
      %v1338 = vadd.f32 %v1315, %v1337
      %1339 = vmatmul.f32.gmra.mxu0 %v1264
      %v1340 = vpop.f32.mrf.mxu0
      %v1341 = vadd.f32 %v1318, %v1340
      %1342 = vdwg.mxu0
      %vm1343 = vcmask 105472
      %1344 = vst.msk [vmem:[%s486] sm:$0xff] %vm1343, %v1338
      %1345 = vst.msk [vmem:[%s486 + $0x8] sm:$0xff] %vm1343, %v1341
      %s1346 = smul.u32 2, %s26
      %p1347 = scmp.lt.s32.totalorder %s25, 1
      %s1348 = scalar_select %p1347, %s25, 1
      %p1349 = scmp.lt.s32.totalorder %s1346, 1
      %s1350 = scalar_select %p1349, %s1346, 1
      %s1351 = smul.addr %s1348, 2
      %s1352 = sadd.s32 %s1350, %s1351
      %s1353 = smul.addr %s1352, 8
      %s1354 = scalar_lea.vmem %s10, %s1353
      // Predicated region
      $region61: #{dgcnn_semseg_forward.11} parent=59 // pred_check
        %p1355 = pneg %p289
      $region62: #{dgcnn_semseg_forward.11} parent=59 // pred_check_branch
        %1357 = sbr.rel (%p1355) target = $region64
      $region63: #{dgcnn_semseg_forward.11} parent=59 // pred_region
        %s1358 = smul.u32 2, %s26
      $region64: #{dgcnn_semseg_forward.11} parent=59 // pred_fallthru
        _
    $region60: #{dgcnn_semseg_forward.11} parent=5 // pred_fallthru
      _
    %p1359 = scmp.le.s32.totalorder 2, %s16
    // Predicated region
    $region65: #{dgcnn_semseg_forward.11} parent=5 // pred_check
      %p1360 = pneg %p1359
    $region66: #{dgcnn_semseg_forward.11} parent=5 // pred_check_branch
      %1362 = sbr.rel (%p1360) target = $region68
    $region67: #{dgcnn_semseg_forward.11} parent=5 // pred_region
      %s1363 = ssub.s32 %s16, 2
      // Predicated region
      $region69: #{dgcnn_semseg_forward.11} parent=67 // pred_check
        %p1364 = pneg %p295
      $region70: #{dgcnn_semseg_forward.11} parent=67 // pred_check_branch
        %1366 = sbr.rel (%p1364) target = $region72
      $region71: #{dgcnn_semseg_forward.11} parent=67 // pred_region
        %s1367 = smul.u32 2, %s28
        %p1368 = scmp.lt.s32.totalorder %s27, 1
        %s1369 = scalar_select %p1368, %s27, 1
        %p1370 = scmp.lt.s32.totalorder %s1367, 1
        %s1371 = scalar_select %p1370, %s1367, 1
        %s1372 = smul.addr %s1369, 2
        %s1373 = sadd.s32 %s1371, %s1372
        %s1374 = smul.addr %s1373, 8
        %s1375 = scalar_lea.vmem %s10, %s1374
      $region72: #{dgcnn_semseg_forward.11} parent=67 // pred_fallthru
        _
    $region68: #{dgcnn_semseg_forward.11} parent=5 // pred_fallthru
      _
  $region6: #{dgcnn_semseg_forward.11} parent=0 // loop_footer
    %s20 = sadd.s32 1, %s16
  $region7: #{dgcnn_semseg_forward.11} parent=0 // loop_footer_branch
    %15 = sbr.rel target = $region3
  $region8: #{dgcnn_semseg_forward.11} parent=0 // loop_exit
    _

</llo_original>
